<compile_context>
chip_gen: v7x
topology: tpu7x:2x2x1
jax: 0.10.0
libtpu: 0.0.40
codegen_flags: <defaults>
</compile_context>

<pallas_src>
import jax
import jax.numpy as jnp
import numpy as np
from jax.experimental import pallas as pl
from jax.experimental.pallas import tpu as pltpu

D = 432  # hardcoded in the PyTorch module (weights are 432x432)


def linearmat_kernel(x_ref, w_ref, b_ref, o_ref):
    # x_ref: (tm, C*D)   w_ref: (C*D, D)   b_ref: (tm, D)   o_ref: (tm, D)
    # One MXU contraction over K = C*D; seed with bias and write output once.
    o_ref[...] = (
        b_ref[...]
        + jnp.dot(x_ref[...], w_ref[...], preferred_element_type=jnp.float32)
    ).astype(o_ref.dtype)


def linearmat_forward(x, weights, bias, *, tm=None, compute_dtype=jnp.float32):
    """x: (B, C, D, D); weights: (C, D, D); bias: (D, D). Returns (B, 1, D, D) f32.

    compute_dtype=jnp.bfloat16 halves x's DMA bytes and runs the MXU at native
    bf16 rate, but the wrapper-side cast is itself an HBM pass over x — only
    worth it when the producer already emits bf16 (accumulation stays f32).
    """
    B, C, H, W = x.shape
    assert H == D and W == D, "LinearMat requires 432x432 spatial dims"
    assert weights.shape == (C, D, D) and bias.shape == (D, D)

    if tm is None:
        # 216 = 432/2, multiple of 8 (f32 sublane); 144 = 432/3, multiple of 16 (bf16).
        tm = 216 if compute_dtype == jnp.float32 else 144
    assert D % tm == 0

    K = C * D
    # Fold the channel reduction into the contraction dimension:
    #   x_fold[b, h, c*D + w] = x[b, c, h, w]     (one XLA transpose of x)
    #   w_cat [c*D + w, k]    = weights[c, w, k]  (free reshape)
    x_fold = jnp.transpose(x, (0, 2, 1, 3)).reshape(B, D, K).astype(compute_dtype)
    w_cat = weights.reshape(K, D).astype(compute_dtype)
    bias = bias.astype(jnp.float32)

    return pl.pallas_call(
        linearmat_kernel,
        out_shape=jax.ShapeDtypeStruct((B, 1, D, D), jnp.float32),
        grid_spec=pltpu.PrefetchScalarGridSpec(
            num_scalar_prefetch=0,
            grid=(B, D // tm),
            in_specs=[
                # x_fold[b, m*tm:(m+1)*tm, :] -> (tm, K), batch dim squeezed away.
                pl.BlockSpec((pl.Squeezed(), tm, K), lambda b, m: (b, m, 0)),
                # All weights as one resident (K, D) slab; constant index + single
                # buffer (no dead second copy of the ~3 MB weight block).
                pl.BlockSpec((K, D), lambda b, m: (0, 0),
                             pipeline_mode=pl.Buffered(1)),
                # Bias row tile (tm, D).
                pl.BlockSpec((tm, D), lambda b, m: (m, 0)),
            ],
            # out[b, 0, m*tm:(m+1)*tm, :] -> (tm, D), leading size-1 dims squeezed.
            # (Last dim 432 < 512: final 48-lane column tile uses masked vst;
            #  output bytes are small relative to x, so we don't pad to 512.)
            out_specs=pl.BlockSpec(
                (pl.Squeezed(), pl.Squeezed(), tm, D), lambda b, m: (b, 0, m, 0)
            ),
        ),
        compiler_params=pltpu.CompilerParams(
            dimension_semantics=("parallel", "parallel"),  # megacore splits B / M tiles
            vmem_limit_bytes=32 << 20,
        ),
    )(x_fold, w_cat, bias)


if __name__ == "__main__":
    key = jax.random.PRNGKey(0)
    B, C = 2, 4  # small batch / channels; spatial dim fixed at 432 by the module
    kx, kw, kb = jax.random.split(key, 3)

    x = jax.random.normal(kx, (B, C, D, D), dtype=jnp.float32)
    # Deterministic parameter init (equivalent of torch.randn in __init__).
    weights = jax.random.normal(kw, (C, D, D), dtype=jnp.float32)
    bias = jax.random.normal(kb, (D, D), dtype=jnp.float32)

    out = linearmat_forward(x, weights, bias)  # f32 path: matches PyTorch numerics
    out = jax.block_until_ready(out)
    assert out.shape == (B, 1, D, D)

    # Reference check (plain JAX, full-precision contraction) — same math as the
    # PyTorch forward: sum_c x[b,c] @ W[c] + bias.
    ref = jnp.einsum("bchw,cwk->bhk", x, weights, precision="highest") + bias[None]
    ref = ref[:, None, :, :]
    np.testing.assert_allclose(np.asarray(out), np.asarray(ref), rtol=1e-3, atol=1e-2)

    print("KERNEL_OK")
</pallas_src>

<mosaic_0001>
module attributes {stable_mosaic.version = 11 : i64} {
  func.func @linearmat_kernel(%arg0: i32, %arg1: i32, %arg2: memref<1x216x1728xf32, #tpu.memory_space<vmem>>, %arg3: memref<1728x432xf32, #tpu.memory_space<vmem>>, %arg4: memref<216x432xf32, #tpu.memory_space<vmem>>, %arg5: memref<1x1x216x432xf32, #tpu.memory_space<vmem>>) attributes {dimension_semantics = [#tpu.dimension_semantics<parallel>, #tpu.dimension_semantics<parallel>], iteration_bounds = array<i64: 2, 2>, scalar_prefetch = 0 : i64, scratch_operands = 0 : i64, tpu.core_type = #tpu.core_type<tc>, window_params = [{transform_indices = @transform_0, window_bounds = array<i64: 1, 216, 1728>}, {pipeline_mode = #tpu.pipeline_mode<synchronous>, transform_indices = @transform_1, window_bounds = array<i64: 1728, 432>}, {transform_indices = @transform_2, window_bounds = array<i64: 216, 432>}, {transform_indices = @transform_3, window_bounds = array<i64: 1, 1, 216, 432>}]} {
    %c0 = arith.constant 0 : index
    %c0_0 = arith.constant 0 : index
    %0 = vector.load %arg4[%c0, %c0_0] : memref<216x432xf32, #tpu.memory_space<vmem>>, vector<216x432xf32>
    %c0_1 = arith.constant 0 : index
    %c0_2 = arith.constant 0 : index
    %c0_3 = arith.constant 0 : index
    %1 = vector.load %arg2[%c0_1, %c0_2, %c0_3] : memref<1x216x1728xf32, #tpu.memory_space<vmem>>, vector<1x216x1728xf32>
    %2 = vector.shape_cast %1 : vector<1x216x1728xf32> to vector<216x1728xf32>
    %c0_4 = arith.constant 0 : index
    %c0_5 = arith.constant 0 : index
    %3 = vector.load %arg3[%c0_4, %c0_5] : memref<1728x432xf32, #tpu.memory_space<vmem>>, vector<1728x432xf32>
    %cst = arith.constant dense<0.000000e+00> : vector<216x432xf32>
    %4 = tpu.matmul %2, %3, %cst {dimension_numbers = #tpu.dot_dimension_numbers<[1], [0], [0], [1], [0, 0, 1, 1], [], []>} : vector<216x1728xf32>, vector<1728x432xf32>, vector<216x432xf32> -> vector<216x432xf32>
    %5 = arith.addf %0, %4 : vector<216x432xf32>
    %c0_6 = arith.constant 0 : index
    %c0_7 = arith.constant 0 : index
    %c0_8 = arith.constant 0 : index
    %c0_9 = arith.constant 0 : index
    %6 = vector.load %arg5[%c0_6, %c0_7, %c0_8, %c0_9] : memref<1x1x216x432xf32, #tpu.memory_space<vmem>>, vector<1x1x216x432xf32>
    %7 = vector.shape_cast %6 : vector<1x1x216x432xf32> to vector<216x432xf32>
    %8 = vector.shape_cast %5 : vector<216x432xf32> to vector<1x1x216x432xf32>
    tpu.vector_store %arg5[%c0_6, %c0_7, %c0_8, %c0_9], %8 {strides = array<i32>} : memref<1x1x216x432xf32, #tpu.memory_space<vmem>>, vector<1x1x216x432xf32>,
    return
  }
  func.func @transform_0(%arg0: i32, %arg1: i32) -> (i32, i32, i32) {
    %c0_i32 = arith.constant 0 : i32
    %c0_i32_0 = arith.constant 0 : i32
    return %arg0, %arg1, %c0_i32 : i32, i32, i32
  }
  func.func @transform_1(%arg0: i32, %arg1: i32) -> (i32, i32) {
    %c0_i32 = arith.constant 0 : i32
    %c0_i32_0 = arith.constant 0 : i32
    %c0_i32_1 = arith.constant 0 : i32
    return %c0_i32, %c0_i32_0 : i32, i32
  }
  func.func @transform_2(%arg0: i32, %arg1: i32) -> (i32, i32) {
    %c0_i32 = arith.constant 0 : i32
    %c0_i32_0 = arith.constant 0 : i32
    return %arg1, %c0_i32 : i32, i32
  }
  func.func @transform_3(%arg0: i32, %arg1: i32) -> (i32, i32, i32, i32) {
    %c0_i32 = arith.constant 0 : i32
    %c0_i32_0 = arith.constant 0 : i32
    %c0_i32_1 = arith.constant 0 : i32
    return %arg0, %c0_i32, %arg1, %c0_i32_0 : i32, i32, i32, i32
  }
}

</mosaic_0001>

<llo_original>
// kernel: tpu_custom_call.1
$region0: #{tpu_custom_call.1}
  #allocation0 [shape = 'u32[]', space=smem, size = 0x4, offset = 0x4, fixed_abs, tag = 'smem constant byte address 0x4 - core index']
  #allocation1 [shape = 'u32[144,128]{1,0:T(1,128)}', space=vmem, size = 0x12000, scoped, tag = 'internal scratch']
  %s0 = inlined_call_operand.vmem [shape: f32[2,432,1728], index: 0, kind: input, shape index: {}]
  %s1 = inlined_call_operand.vmem [shape: f32[1728,432], index: 1, kind: input, shape index: {}]
  %s2 = inlined_call_operand.hbm [shape: f32[432,432], index: 2, kind: input, shape index: {}]
  %s3 = inlined_call_operand.hbm [shape: f32[2,1,432,432], index: 3, kind: output, shape index: {}]
  %s4 = sld [smem:[#allocation0]]
  $region49: #{tpu_custom_call.1} parent=0
    _
  %s6 = ssub.s32 1, %s4
  %s7 = scalar_select 0, %s6, %s4
  $region1: #{tpu_custom_call.1} parent=0
    #allocation2 [shape = 'u8[884736]{0}', space=vmem, size = 0xd8000, scoped, tag = 'input window, operand 2']
    #allocation3 [shape = 's32[2]{0}', space=sflag, size = 0x8, scoped, tag = 'scoped memory for tpu_custom_call.1']
    #allocation4 [shape = 's32[2]{0}', space=sflag, size = 0x8, scoped, tag = 'scoped memory for tpu_custom_call.1']
    #allocation5 [shape = 'u8[884736]{0}', space=vmem, size = 0xd8000, scoped, tag = 'output window, operand 0']
    %8 = vsyncpa [#allocation3], 0
    %s9 = scalar_lea.sflag [#allocation3], 1
    %10 = vsyncpa %s9, 0
    %11 = vsyncpa [#allocation4], 0
    %s12 = scalar_lea.sflag [#allocation4], 1
    %13 = vsyncpa %s12, 0
    loop: start=0, step=1, limit=6
    $region2: #{tpu_custom_call.1} parent=1 // loop_pre_header
      _
    $region3: #{tpu_custom_call.1} parent=1 // loop_header
      %s15 = sphi 0, %s19
      %p16 = scmp.ge.s32.totalorder %s15, 6
      %s22 = sphi 0, %s34
      %s23 = sphi 0, %s30
      %s24 = sphi 0, %s22
      %s25 = sphi 0, %s23
      %s26 = sphi 0, %s24
      %s27 = sphi 0, %s25
      %s39 = sphi 0, %s41
      %s42 = sphi 0, %s39
      %s43 = sphi 0, %s42
      %s59 = sphi 0, %s43
      %s63 = sphi 0, %s63
      %s65 = sphi 0, %s63
      %s66 = sphi 0, %s65
      %s80 = sphi 0, %s66
      %s86 = sphi 0, %s88
      %s89 = sphi 0, %s86
      %s90 = sphi 0, %s89
      %s106 = sphi 0, %s90
      %s114 = sphi 0, %s116
      %s117 = sphi 0, %s114
      %s118 = sphi 0, %s117
      %s134 = sphi 0, %s118
    $region4: #{tpu_custom_call.1} parent=1 // loop_header_branch
      %18 = sbr.rel (%p16) target = $region8
    $region5: #{tpu_custom_call.1} parent=1 // loop_body
      %s20 = ssub.s32 %s15, 1
      %s21 = ssub.s32 %s15, 2
      %s28 = sadd.s32 1, %s23
      %p29 = scmp.ge.s32.totalorder %s28, 2
      %s30 = scalar_select %p29, 0, %s28
      %s31 = sadd.s32 1, %s22
      %s32 = scalar_select %p29, %s31, %s22
      %p33 = scmp.ge.s32.totalorder %s32, 2
      %s34 = scalar_select %p33, 0, %s32
      %s35 = ssub.s32 %s22, %s34
      %s36 = ssub.s32 %s23, %s30
      %s37 = sor.u32 %s35, %s36
      %p38 = scmp.eq.s32.totalorder %s37, 0
      %s40 = sadd.s32 %s39, 1
      %s41 = scalar_select %p38, %s39, %s40
      %p44 = pneg %p38
      %p45 = scmp.eq.s32.totalorder %s15, 3
      %p46 = por %p44, %p45
      %p47 = scmp.ne.s32.totalorder %s39, %s42
      %p48 = scmp.eq.s32.totalorder %s15, 0
      %p49 = por %p47, %p48
      %p50 = scmp.ne.s32.totalorder %s39, %s42
      %p51 = scmp.eq.s32.totalorder %s20, 3
      %p52 = por %p50, %p51
      %p53 = scmp.ne.s32.totalorder %s42, %s43
      %p54 = scmp.eq.s32.totalorder %s20, 0
      %p55 = por %p53, %p54
      %p56 = scmp.ne.s32.totalorder %s42, %s43
      %p57 = scmp.eq.s32.totalorder %s21, 3
      %p58 = por %p56, %p57
      %p60 = scmp.ne.s32.totalorder %s43, %s59
      %p61 = scmp.eq.s32.totalorder %s21, 0
      %p62 = por %p60, %p61
      %s64 = sadd.s32 %s63, 1
      %p67 = scmp.eq.s32.totalorder %s15, 3
      %p68 = scmp.ne.s32.totalorder %s63, %s65
      %p69 = scmp.eq.s32.totalorder %s15, 0
      %p70 = por %p68, %p69
      %p71 = scmp.ne.s32.totalorder %s63, %s65
      %p72 = scmp.eq.s32.totalorder %s20, 3
      %p73 = por %p71, %p72
      %p74 = scmp.ne.s32.totalorder %s65, %s66
      %p75 = scmp.eq.s32.totalorder %s20, 0
      %p76 = por %p74, %p75
      %p77 = scmp.ne.s32.totalorder %s65, %s66
      %p78 = scmp.eq.s32.totalorder %s21, 3
      %p79 = por %p77, %p78
      %p81 = scmp.ne.s32.totalorder %s66, %s80
      %p82 = scmp.eq.s32.totalorder %s21, 0
      %p83 = por %p81, %p82
      %s84 = ssub.s32 %s23, %s30
      %p85 = scmp.eq.s32.totalorder %s84, 0
      %s87 = sadd.s32 %s86, 1
      %s88 = scalar_select %p85, %s86, %s87
      %p91 = pneg %p85
      %p92 = scmp.eq.s32.totalorder %s15, 3
      %p93 = por %p91, %p92
      %p94 = scmp.ne.s32.totalorder %s86, %s89
      %p95 = scmp.eq.s32.totalorder %s15, 0
      %p96 = por %p94, %p95
      %p97 = scmp.ne.s32.totalorder %s86, %s89
      %p98 = scmp.eq.s32.totalorder %s20, 3
      %p99 = por %p97, %p98
      %p100 = scmp.ne.s32.totalorder %s89, %s90
      %p101 = scmp.eq.s32.totalorder %s20, 0
      %p102 = por %p100, %p101
      %p103 = scmp.ne.s32.totalorder %s89, %s90
      %p104 = scmp.eq.s32.totalorder %s21, 3
      %p105 = por %p103, %p104
      %p107 = scmp.ne.s32.totalorder %s90, %s106
      %p108 = scmp.eq.s32.totalorder %s21, 0
      %p109 = por %p107, %p108
      %s110 = ssub.s32 %s22, %s34
      %s111 = ssub.s32 %s23, %s30
      %s112 = sor.u32 %s110, %s111
      %p113 = scmp.eq.s32.totalorder %s112, 0
      %s115 = sadd.s32 %s114, 1
      %s116 = scalar_select %p113, %s114, %s115
      %p119 = pneg %p113
      %p120 = scmp.eq.s32.totalorder %s15, 3
      %p121 = por %p119, %p120
      %p122 = scmp.ne.s32.totalorder %s114, %s117
      %p123 = scmp.eq.s32.totalorder %s15, 0
      %p124 = por %p122, %p123
      %p125 = scmp.ne.s32.totalorder %s114, %s117
      %p126 = scmp.eq.s32.totalorder %s20, 3
      %p127 = por %p125, %p126
      %p128 = scmp.ne.s32.totalorder %s117, %s118
      %p129 = scmp.eq.s32.totalorder %s20, 0
      %p130 = por %p128, %p129
      %p131 = scmp.ne.s32.totalorder %s117, %s118
      %p132 = scmp.eq.s32.totalorder %s21, 3
      %p133 = por %p131, %p132
      %p135 = scmp.ne.s32.totalorder %s118, %s134
      %p136 = scmp.eq.s32.totalorder %s21, 0
      %p137 = por %p135, %p136
      %p138 = scmp.le.s32.totalorder 1, %s15
      %p139 = scmp.lt.s32.totalorder %s15, 5
      %p140 = pnand %p138, %p139
      %p141 = pneg %p140
      // Predicated region
      $region9: #{tpu_custom_call.1} parent=5 // pred_check
        _
      $region10: #{tpu_custom_call.1} parent=5 // pred_check_branch
        %143 = sbr.rel (%p140) target = $region12
      $region11: #{tpu_custom_call.1} parent=5 // pred_region
        %s144 = ssub.s32 %s15, 1
        // Predicated region
        $region13: #{tpu_custom_call.1} parent=11 // pred_check
          %p145 = pneg %p76
        $region14: #{tpu_custom_call.1} parent=11 // pred_check_branch
          %147 = sbr.rel (%p145) target = $region16
        $region15: #{tpu_custom_call.1} parent=11 // pred_region
          _
        $region16: #{tpu_custom_call.1} parent=11 // pred_fallthru
          _
      $region12: #{tpu_custom_call.1} parent=5 // pred_fallthru
        _
      %p148 = scmp.lt.s32.totalorder %s15, 4
      // Predicated region
      $region17: #{tpu_custom_call.1} parent=5 // pred_check
        %p149 = pneg %p148
      $region18: #{tpu_custom_call.1} parent=5 // pred_check_branch
        %151 = sbr.rel (%p149) target = $region20
      $region19: #{tpu_custom_call.1} parent=5 // pred_region
        // Predicated region
        $region21: #{tpu_custom_call.1} parent=19 // pred_check
          %p152 = pneg %p49
        $region22: #{tpu_custom_call.1} parent=19 // pred_check_branch
          %154 = sbr.rel (%p152) target = $region24
        $region23: #{tpu_custom_call.1} parent=19 // pred_region
          %s155 = smul.u32 27, %s23
          %p156 = scmp.lt.s32.totalorder %s22, 1
          %s157 = scalar_select %p156, %s22, 1
          %p158 = scmp.lt.s32.totalorder %s155, 53
          %s159 = scalar_select %p158, %s155, 53
          %s160 = smul.addr %s159, 14
          %s161 = smul.addr %s157, 756
          %s162 = sadd.s32 %s160, %s161
          %s163 = smul.addr %s162, 8
          %s164 = scalar_lea.vmem %s0, %s163
          %s165 = smul.u32 27, %s23
        $region24: #{tpu_custom_call.1} parent=19 // pred_fallthru
          _
        // Predicated region
        $region25: #{tpu_custom_call.1} parent=19 // pred_check
          %p166 = pneg %p96
        $region26: #{tpu_custom_call.1} parent=19 // pred_check_branch
          %168 = sbr.rel (%p166) target = $region28
        $region27: #{tpu_custom_call.1} parent=19 // pred_region
          %s169 = sand.u32 %s86, 1
          %s170 = scalar_lea.sflag [#allocation3], %s169
          %s171 = sand.u32 %s86, 1
          %s172 = smul.addr %s171, 864
          %s173 = scalar_lea.vmem [#allocation2], %s172
          %s174 = smul.u32 27, %s23
          %s176 = ssub.s32 13824, 13824
          %177 = vsyncadd %s170, %s176
          %s178 = smul.addr %s174, 4
          %s179 = smul.addr %s178, 128
          %s180 = scalar_lea.hbm %s2, %s179
          %s181 = sshll.u32 %s173, 4
          %s182 = int_to_ptr.vmem [resolvable:$true] %s181
          %187 = dma.hbm_to_vmem [thread:$0]  %s180, 13824, %s182, %s170, 512, 512, 32
        $region28: #{tpu_custom_call.1} parent=19 // pred_fallthru
          _
      $region20: #{tpu_custom_call.1} parent=5 // pred_fallthru
        _
      %p188 = scmp.le.s32.totalorder 1, %s15
      %p189 = scmp.lt.s32.totalorder %s15, 5
      %p190 = pnand %p188, %p189
      %p191 = pneg %p190
      // Predicated region
      $region29: #{tpu_custom_call.1} parent=5 // pred_check
        _
      $region30: #{tpu_custom_call.1} parent=5 // pred_check_branch
        %193 = sbr.rel (%p190) target = $region32
      $region31: #{tpu_custom_call.1} parent=5 // pred_region
        %s194 = ssub.s32 %s15, 1
        %s195 = sand.u32 %s89, 1
        %s196 = scalar_lea.sflag [#allocation3], %s195
        %s197 = sand.u32 %s89, 1
        %s198 = smul.addr %s197, 864
        %s199 = scalar_lea.vmem [#allocation2], %s198
        // Predicated region
        $region33: #{tpu_custom_call.1} parent=31 // pred_check
          %p200 = pneg %p102
        $region34: #{tpu_custom_call.1} parent=31 // pred_check_branch
          %202 = sbr.rel (%p200) target = $region36
        $region35: #{tpu_custom_call.1} parent=31 // pred_region
          %203 = dma.done %s196, 13824
        $region36: #{tpu_custom_call.1} parent=31 // pred_fallthru
          _
        %s204 = smul.u32 27, %s25
        %p205 = scmp.lt.s32.totalorder %s24, 1
        %s206 = scalar_select %p205, %s24, 1
        %p207 = scmp.lt.s32.totalorder %s204, 53
        %s208 = scalar_select %p207, %s204, 53
        %s209 = smul.addr %s208, 14
        %s210 = smul.addr %s206, 756
        %s211 = sadd.s32 %s209, %s210
        %s212 = smul.addr %s211, 8
        %s213 = scalar_lea.vmem %s0, %s212
        %p214 = pneg %p55
        %p215 = pneg %p52
        %p216 = pneg %p76
        %p217 = pneg %p73
        %s218 = sand.u32 %s89, 1
        %s219 = scalar_lea.sflag [#allocation3], %s218
        %s220 = sand.u32 %s89, 1
        %s221 = smul.addr %s220, 864
        %s222 = scalar_lea.vmem [#allocation2], %s221
        %p223 = pneg %p102
        %p224 = pneg %p99
        %p225 = pneg %p130
        %p226 = pneg %p127
        %s227 = sand.u32 %s117, 1
        %s228 = scalar_lea.sflag [#allocation4], %s227
        %s229 = sand.u32 %s117, 1
        %s230 = smul.addr %s229, 864
        %s231 = scalar_lea.vmem [#allocation5], %s230
        %s232 = smul.u32 27, %s25
        %p233 = scmp.lt.s32.totalorder %s24, 1
        %s234 = scalar_select %p233, %s24, 1
        %p235 = scmp.lt.s32.totalorder %s232, 53
        %s236 = scalar_select %p235, %s232, 53
        %s237 = smul.addr %s236, 14
        %s238 = smul.addr %s234, 756
        %s239 = sadd.s32 %s237, %s238
        %s240 = smul.addr %s239, 8
        %s241 = scalar_lea.vmem %s0, %s240
        %s242 = smul.u32 27, %s25
        %s243 = smul.u32 27, %s25
        %s244 = smul.u32 27, %s25
        %v245 = vld [vmem:[%s199] sm:$0xff]
        %v246 = vld [vmem:[%s199 + $0x8] sm:$0xff]
        %v247 = vld [vmem:[%s199 + $0x10] sm:$0xff]
        %v248 = vld [vmem:[%s199 + $0x18] sm:$0xff]
        %v249 = vld [vmem:[%s199 + $0x20] sm:$0xff]
        %v250 = vld [vmem:[%s199 + $0x28] sm:$0xff]
        %v251 = vld [vmem:[%s199 + $0x30] sm:$0xff]
        %v252 = vld [vmem:[%s199 + $0x38] sm:$0xff]
        %v253 = vld [vmem:[%s199 + $0x40] sm:$0xff]
        %v254 = vld [vmem:[%s199 + $0x48] sm:$0xff]
        %v255 = vld [vmem:[%s199 + $0x50] sm:$0xff]
        %v256 = vld [vmem:[%s199 + $0x58] sm:$0xff]
        %v257 = vld [vmem:[%s199 + $0x60] sm:$0xff]
        %v258 = vld [vmem:[%s199 + $0x68] sm:$0xff]
        %v259 = vld [vmem:[%s199 + $0x70] sm:$0xff]
        %v260 = vld [vmem:[%s199 + $0x78] sm:$0xff]
        %v261 = vld [vmem:[%s199 + $0x80] sm:$0xff]
        %v262 = vld [vmem:[%s199 + $0x88] sm:$0xff]
        %v263 = vld [vmem:[%s199 + $0x90] sm:$0xff]
        %v264 = vld [vmem:[%s199 + $0x98] sm:$0xff]
        %v265 = vld [vmem:[%s199 + $0xa0] sm:$0xff]
        %v266 = vld [vmem:[%s199 + $0xa8] sm:$0xff]
        %v267 = vld [vmem:[%s199 + $0xb0] sm:$0xff]
        %v268 = vld [vmem:[%s199 + $0xb8] sm:$0xff]
        %v269 = vld [vmem:[%s199 + $0xc0] sm:$0xff]
        %v270 = vld [vmem:[%s199 + $0xc8] sm:$0xff]
        %v271 = vld [vmem:[%s199 + $0xd0] sm:$0xff]
        %v272 = vld [vmem:[%s199 + $0xd8] sm:$0xff]
        %v273 = vld [vmem:[%s199 + $0xe0] sm:$0xff]
        %v274 = vld [vmem:[%s199 + $0xe8] sm:$0xff]
        %v275 = vld [vmem:[%s199 + $0xf0] sm:$0xff]
        %v276 = vld [vmem:[%s199 + $0xf8] sm:$0xff]
        %v277 = vld [vmem:[%s199 + $0x100] sm:$0xff]
        %v278 = vld [vmem:[%s199 + $0x108] sm:$0xff]
        %v279 = vld [vmem:[%s199 + $0x110] sm:$0xff]
        %v280 = vld [vmem:[%s199 + $0x118] sm:$0xff]
        %v281 = vld [vmem:[%s199 + $0x120] sm:$0xff]
        %v282 = vld [vmem:[%s199 + $0x128] sm:$0xff]
        %v283 = vld [vmem:[%s199 + $0x130] sm:$0xff]
        %v284 = vld [vmem:[%s199 + $0x138] sm:$0xff]
        %v285 = vld [vmem:[%s199 + $0x140] sm:$0xff]
        %v286 = vld [vmem:[%s199 + $0x148] sm:$0xff]
        %v287 = vld [vmem:[%s199 + $0x150] sm:$0xff]
        %v288 = vld [vmem:[%s199 + $0x158] sm:$0xff]
        %v289 = vld [vmem:[%s199 + $0x160] sm:$0xff]
        %v290 = vld [vmem:[%s199 + $0x168] sm:$0xff]
        %v291 = vld [vmem:[%s199 + $0x170] sm:$0xff]
        %v292 = vld [vmem:[%s199 + $0x178] sm:$0xff]
        %v293 = vld [vmem:[%s199 + $0x180] sm:$0xff]
        %v294 = vld [vmem:[%s199 + $0x188] sm:$0xff]
        %v295 = vld [vmem:[%s199 + $0x190] sm:$0xff]
        %v296 = vld [vmem:[%s199 + $0x198] sm:$0xff]
        %v297 = vld [vmem:[%s199 + $0x1a0] sm:$0xff]
        %v298 = vld [vmem:[%s199 + $0x1a8] sm:$0xff]
        %v299 = vld [vmem:[%s199 + $0x1b0] sm:$0xff]
        %v300 = vld [vmem:[%s199 + $0x1b8] sm:$0xff]
        %v301 = vld [vmem:[%s199 + $0x1c0] sm:$0xff]
        %v302 = vld [vmem:[%s199 + $0x1c8] sm:$0xff]
        %v303 = vld [vmem:[%s199 + $0x1d0] sm:$0xff]
        %v304 = vld [vmem:[%s199 + $0x1d8] sm:$0xff]
        %v305 = vld [vmem:[%s199 + $0x1e0] sm:$0xff]
        %v306 = vld [vmem:[%s199 + $0x1e8] sm:$0xff]
        %v307 = vld [vmem:[%s199 + $0x1f0] sm:$0xff]
        %v308 = vld [vmem:[%s199 + $0x1f8] sm:$0xff]
        %v309 = vld [vmem:[%s199 + $0x200] sm:$0xff]
        %v310 = vld [vmem:[%s199 + $0x208] sm:$0xff]
        %v311 = vld [vmem:[%s199 + $0x210] sm:$0xff]
        %v312 = vld [vmem:[%s199 + $0x218] sm:$0xff]
        %v313 = vld [vmem:[%s199 + $0x220] sm:$0xff]
        %v314 = vld [vmem:[%s199 + $0x228] sm:$0xff]
        %v315 = vld [vmem:[%s199 + $0x230] sm:$0xff]
        %v316 = vld [vmem:[%s199 + $0x238] sm:$0xff]
        %v317 = vld [vmem:[%s199 + $0x240] sm:$0xff]
        %v318 = vld [vmem:[%s199 + $0x248] sm:$0xff]
        %v319 = vld [vmem:[%s199 + $0x250] sm:$0xff]
        %v320 = vld [vmem:[%s199 + $0x258] sm:$0xff]
        %v321 = vld [vmem:[%s199 + $0x260] sm:$0xff]
        %v322 = vld [vmem:[%s199 + $0x268] sm:$0xff]
        %v323 = vld [vmem:[%s199 + $0x270] sm:$0xff]
        %v324 = vld [vmem:[%s199 + $0x278] sm:$0xff]
        %v325 = vld [vmem:[%s199 + $0x280] sm:$0xff]
        %v326 = vld [vmem:[%s199 + $0x288] sm:$0xff]
        %v327 = vld [vmem:[%s199 + $0x290] sm:$0xff]
        %v328 = vld [vmem:[%s199 + $0x298] sm:$0xff]
        %v329 = vld [vmem:[%s199 + $0x2a0] sm:$0xff]
        %v330 = vld [vmem:[%s199 + $0x2a8] sm:$0xff]
        %v331 = vld [vmem:[%s199 + $0x2b0] sm:$0xff]
        %v332 = vld [vmem:[%s199 + $0x2b8] sm:$0xff]
        %v333 = vld [vmem:[%s199 + $0x2c0] sm:$0xff]
        %v334 = vld [vmem:[%s199 + $0x2c8] sm:$0xff]
        %v335 = vld [vmem:[%s199 + $0x2d0] sm:$0xff]
        %v336 = vld [vmem:[%s199 + $0x2d8] sm:$0xff]
        %v337 = vld [vmem:[%s199 + $0x2e0] sm:$0xff]
        %v338 = vld [vmem:[%s199 + $0x2e8] sm:$0xff]
        %v339 = vld [vmem:[%s199 + $0x2f0] sm:$0xff]
        %v340 = vld [vmem:[%s199 + $0x2f8] sm:$0xff]
        %v341 = vld [vmem:[%s199 + $0x300] sm:$0xff]
        %v342 = vld [vmem:[%s199 + $0x308] sm:$0xff]
        %v343 = vld [vmem:[%s199 + $0x310] sm:$0xff]
        %v344 = vld [vmem:[%s199 + $0x318] sm:$0xff]
        %v345 = vld [vmem:[%s199 + $0x320] sm:$0xff]
        %v346 = vld [vmem:[%s199 + $0x328] sm:$0xff]
        %v347 = vld [vmem:[%s199 + $0x330] sm:$0xff]
        %v348 = vld [vmem:[%s199 + $0x338] sm:$0xff]
        %v349 = vld [vmem:[%s199 + $0x340] sm:$0xff]
        %v350 = vld [vmem:[%s199 + $0x348] sm:$0xff]
        %v351 = vld [vmem:[%s199 + $0x350] sm:$0xff]
        %v352 = vld [vmem:[%s199 + $0x358] sm:$0xff]
        %v353 = vld [vmem:[%s241] sm:$0xff]
        %v354 = vld [vmem:[%s241 + $0x8] sm:$0xff]
        %v355 = vld [vmem:[%s241 + $0x10] sm:$0xff]
        %v356 = vld [vmem:[%s241 + $0x18] sm:$0xff]
        %v357 = vld [vmem:[%s241 + $0x20] sm:$0xff]
        %v358 = vld [vmem:[%s241 + $0x28] sm:$0xff]
        %v359 = vld [vmem:[%s241 + $0x30] sm:$0xff]
        %v360 = vld [vmem:[%s241 + $0x38] sm:$0xff]
        %v361 = vld [vmem:[%s241 + $0x40] sm:$0xff]
        %v362 = vld [vmem:[%s241 + $0x48] sm:$0xff]
        %v363 = vld [vmem:[%s241 + $0x50] sm:$0xff]
        %v364 = vld [vmem:[%s241 + $0x58] sm:$0xff]
        %v365 = vld [vmem:[%s241 + $0x60] sm:$0xff]
        %v366 = vld [vmem:[%s241 + $0x68] sm:$0xff]
        %v367 = vld [vmem:[%s241 + $0x70] sm:$0xff]
        %v368 = vld [vmem:[%s241 + $0x78] sm:$0xff]
        %v369 = vld [vmem:[%s241 + $0x80] sm:$0xff]
        %v370 = vld [vmem:[%s241 + $0x88] sm:$0xff]
        %v371 = vld [vmem:[%s241 + $0x90] sm:$0xff]
        %v372 = vld [vmem:[%s241 + $0x98] sm:$0xff]
        %v373 = vld [vmem:[%s241 + $0xa0] sm:$0xff]
        %v374 = vld [vmem:[%s241 + $0xa8] sm:$0xff]
        %v375 = vld [vmem:[%s241 + $0xb0] sm:$0xff]
        %v376 = vld [vmem:[%s241 + $0xb8] sm:$0xff]
        %v377 = vld [vmem:[%s241 + $0xc0] sm:$0xff]
        %v378 = vld [vmem:[%s241 + $0xc8] sm:$0xff]
        %v379 = vld [vmem:[%s241 + $0xd0] sm:$0xff]
        %v380 = vld [vmem:[%s241 + $0xd8] sm:$0xff]
        %v381 = vld [vmem:[%s241 + $0xe0] sm:$0xff]
        %v382 = vld [vmem:[%s241 + $0xe8] sm:$0xff]
        %v383 = vld [vmem:[%s241 + $0xf0] sm:$0xff]
        %v384 = vld [vmem:[%s241 + $0xf8] sm:$0xff]
        %v385 = vld [vmem:[%s241 + $0x100] sm:$0xff]
        %v386 = vld [vmem:[%s241 + $0x108] sm:$0xff]
        %v387 = vld [vmem:[%s241 + $0x110] sm:$0xff]
        %v388 = vld [vmem:[%s241 + $0x118] sm:$0xff]
        %v389 = vld [vmem:[%s241 + $0x120] sm:$0xff]
        %v390 = vld [vmem:[%s241 + $0x128] sm:$0xff]
        %v391 = vld [vmem:[%s241 + $0x130] sm:$0xff]
        %v392 = vld [vmem:[%s241 + $0x138] sm:$0xff]
        %v393 = vld [vmem:[%s241 + $0x140] sm:$0xff]
        %v394 = vld [vmem:[%s241 + $0x148] sm:$0xff]
        %v395 = vld [vmem:[%s241 + $0x150] sm:$0xff]
        %v396 = vld [vmem:[%s241 + $0x158] sm:$0xff]
        %v397 = vld [vmem:[%s241 + $0x160] sm:$0xff]
        %v398 = vld [vmem:[%s241 + $0x168] sm:$0xff]
        %v399 = vld [vmem:[%s241 + $0x170] sm:$0xff]
        %v400 = vld [vmem:[%s241 + $0x178] sm:$0xff]
        %v401 = vld [vmem:[%s241 + $0x180] sm:$0xff]
        %v402 = vld [vmem:[%s241 + $0x188] sm:$0xff]
        %v403 = vld [vmem:[%s241 + $0x190] sm:$0xff]
        %v404 = vld [vmem:[%s241 + $0x198] sm:$0xff]
        %v405 = vld [vmem:[%s241 + $0x1a0] sm:$0xff]
        %v406 = vld [vmem:[%s241 + $0x1a8] sm:$0xff]
        %v407 = vld [vmem:[%s241 + $0x1b0] sm:$0xff]
        %v408 = vld [vmem:[%s241 + $0x1b8] sm:$0xff]
        %v409 = vld [vmem:[%s241 + $0x1c0] sm:$0xff]
        %v410 = vld [vmem:[%s241 + $0x1c8] sm:$0xff]
        %v411 = vld [vmem:[%s241 + $0x1d0] sm:$0xff]
        %v412 = vld [vmem:[%s241 + $0x1d8] sm:$0xff]
        %v413 = vld [vmem:[%s241 + $0x1e0] sm:$0xff]
        %v414 = vld [vmem:[%s241 + $0x1e8] sm:$0xff]
        %v415 = vld [vmem:[%s241 + $0x1f0] sm:$0xff]
        %v416 = vld [vmem:[%s241 + $0x1f8] sm:$0xff]
        %v417 = vld [vmem:[%s241 + $0x200] sm:$0xff]
        %v418 = vld [vmem:[%s241 + $0x208] sm:$0xff]
        %v419 = vld [vmem:[%s241 + $0x210] sm:$0xff]
        %v420 = vld [vmem:[%s241 + $0x218] sm:$0xff]
        %v421 = vld [vmem:[%s241 + $0x220] sm:$0xff]
        %v422 = vld [vmem:[%s241 + $0x228] sm:$0xff]
        %v423 = vld [vmem:[%s241 + $0x230] sm:$0xff]
        %v424 = vld [vmem:[%s241 + $0x238] sm:$0xff]
        %v425 = vld [vmem:[%s241 + $0x240] sm:$0xff]
        %v426 = vld [vmem:[%s241 + $0x248] sm:$0xff]
        %v427 = vld [vmem:[%s241 + $0x250] sm:$0xff]
        %v428 = vld [vmem:[%s241 + $0x258] sm:$0xff]
        %v429 = vld [vmem:[%s241 + $0x260] sm:$0xff]
        %v430 = vld [vmem:[%s241 + $0x268] sm:$0xff]
        %v431 = vld [vmem:[%s241 + $0x270] sm:$0xff]
        %v432 = vld [vmem:[%s241 + $0x278] sm:$0xff]
        %v433 = vld [vmem:[%s241 + $0x280] sm:$0xff]
        %v434 = vld [vmem:[%s241 + $0x288] sm:$0xff]
        %v435 = vld [vmem:[%s241 + $0x290] sm:$0xff]
        %v436 = vld [vmem:[%s241 + $0x298] sm:$0xff]
        %v437 = vld [vmem:[%s241 + $0x2a0] sm:$0xff]
        %v438 = vld [vmem:[%s241 + $0x2a8] sm:$0xff]
        %v439 = vld [vmem:[%s241 + $0x2b0] sm:$0xff]
        %v440 = vld [vmem:[%s241 + $0x2b8] sm:$0xff]
        %v441 = vld [vmem:[%s241 + $0x2c0] sm:$0xff]
        %v442 = vld [vmem:[%s241 + $0x2c8] sm:$0xff]
        %v443 = vld [vmem:[%s241 + $0x2d0] sm:$0xff]
        %v444 = vld [vmem:[%s241 + $0x2d8] sm:$0xff]
        %v445 = vld [vmem:[%s241 + $0x2e0] sm:$0xff]
        %v446 = vld [vmem:[%s241 + $0x2e8] sm:$0xff]
        %v447 = vld [vmem:[%s241 + $0x2f0] sm:$0xff]
        %v448 = vld [vmem:[%s241 + $0x2f8] sm:$0xff]
        %v449 = vld [vmem:[%s241 + $0x300] sm:$0xff]
        %v450 = vld [vmem:[%s241 + $0x308] sm:$0xff]
        %v451 = vld [vmem:[%s241 + $0x310] sm:$0xff]
        %v452 = vld [vmem:[%s241 + $0x318] sm:$0xff]
        %v453 = vld [vmem:[%s241 + $0x320] sm:$0xff]
        %v454 = vld [vmem:[%s241 + $0x328] sm:$0xff]
        %v455 = vld [vmem:[%s241 + $0x330] sm:$0xff]
        %v456 = vld [vmem:[%s241 + $0x338] sm:$0xff]
        %v457 = vld [vmem:[%s241 + $0x340] sm:$0xff]
        %v458 = vld [vmem:[%s241 + $0x348] sm:$0xff]
        %v459 = vld [vmem:[%s241 + $0x350] sm:$0xff]
        %v460 = vld [vmem:[%s241 + $0x358] sm:$0xff]
        %v461 = vld [vmem:[%s241 + $0x360] sm:$0xff]
        %v462 = vld [vmem:[%s241 + $0x368] sm:$0xff]
        %v463 = vld [vmem:[%s241 + $0x370] sm:$0xff]
        %v464 = vld [vmem:[%s241 + $0x378] sm:$0xff]
        %v465 = vld [vmem:[%s241 + $0x380] sm:$0xff]
        %v466 = vld [vmem:[%s241 + $0x388] sm:$0xff]
        %v467 = vld [vmem:[%s241 + $0x390] sm:$0xff]
        %v468 = vld [vmem:[%s241 + $0x398] sm:$0xff]
        %v469 = vld [vmem:[%s241 + $0x3a0] sm:$0xff]
        %v470 = vld [vmem:[%s241 + $0x3a8] sm:$0xff]
        %v471 = vld [vmem:[%s241 + $0x3b0] sm:$0xff]
        %v472 = vld [vmem:[%s241 + $0x3b8] sm:$0xff]
        %v473 = vld [vmem:[%s241 + $0x3c0] sm:$0xff]
        %v474 = vld [vmem:[%s241 + $0x3c8] sm:$0xff]
        %v475 = vld [vmem:[%s241 + $0x3d0] sm:$0xff]
        %v476 = vld [vmem:[%s241 + $0x3d8] sm:$0xff]
        %v477 = vld [vmem:[%s241 + $0x3e0] sm:$0xff]
        %v478 = vld [vmem:[%s241 + $0x3e8] sm:$0xff]
        %v479 = vld [vmem:[%s241 + $0x3f0] sm:$0xff]
        %v480 = vld [vmem:[%s241 + $0x3f8] sm:$0xff]
        %v481 = vld [vmem:[%s241 + $0x400] sm:$0xff]
        %v482 = vld [vmem:[%s241 + $0x408] sm:$0xff]
        %v483 = vld [vmem:[%s241 + $0x410] sm:$0xff]
        %v484 = vld [vmem:[%s241 + $0x418] sm:$0xff]
        %v485 = vld [vmem:[%s241 + $0x420] sm:$0xff]
        %v486 = vld [vmem:[%s241 + $0x428] sm:$0xff]
        %v487 = vld [vmem:[%s241 + $0x430] sm:$0xff]
        %v488 = vld [vmem:[%s241 + $0x438] sm:$0xff]
        %v489 = vld [vmem:[%s241 + $0x440] sm:$0xff]
        %v490 = vld [vmem:[%s241 + $0x448] sm:$0xff]
        %v491 = vld [vmem:[%s241 + $0x450] sm:$0xff]
        %v492 = vld [vmem:[%s241 + $0x458] sm:$0xff]
        %v493 = vld [vmem:[%s241 + $0x460] sm:$0xff]
        %v494 = vld [vmem:[%s241 + $0x468] sm:$0xff]
        %v495 = vld [vmem:[%s241 + $0x470] sm:$0xff]
        %v496 = vld [vmem:[%s241 + $0x478] sm:$0xff]
        %v497 = vld [vmem:[%s241 + $0x480] sm:$0xff]
        %v498 = vld [vmem:[%s241 + $0x488] sm:$0xff]
        %v499 = vld [vmem:[%s241 + $0x490] sm:$0xff]
        %v500 = vld [vmem:[%s241 + $0x498] sm:$0xff]
        %v501 = vld [vmem:[%s241 + $0x4a0] sm:$0xff]
        %v502 = vld [vmem:[%s241 + $0x4a8] sm:$0xff]
        %v503 = vld [vmem:[%s241 + $0x4b0] sm:$0xff]
        %v504 = vld [vmem:[%s241 + $0x4b8] sm:$0xff]
        %v505 = vld [vmem:[%s241 + $0x4c0] sm:$0xff]
        %v506 = vld [vmem:[%s241 + $0x4c8] sm:$0xff]
        %v507 = vld [vmem:[%s241 + $0x4d0] sm:$0xff]
        %v508 = vld [vmem:[%s241 + $0x4d8] sm:$0xff]
        %v509 = vld [vmem:[%s241 + $0x4e0] sm:$0xff]
        %v510 = vld [vmem:[%s241 + $0x4e8] sm:$0xff]
        %v511 = vld [vmem:[%s241 + $0x4f0] sm:$0xff]
        %v512 = vld [vmem:[%s241 + $0x4f8] sm:$0xff]
        %v513 = vld [vmem:[%s241 + $0x500] sm:$0xff]
        %v514 = vld [vmem:[%s241 + $0x508] sm:$0xff]
        %v515 = vld [vmem:[%s241 + $0x510] sm:$0xff]
        %v516 = vld [vmem:[%s241 + $0x518] sm:$0xff]
        %v517 = vld [vmem:[%s241 + $0x520] sm:$0xff]
        %v518 = vld [vmem:[%s241 + $0x528] sm:$0xff]
        %v519 = vld [vmem:[%s241 + $0x530] sm:$0xff]
        %v520 = vld [vmem:[%s241 + $0x538] sm:$0xff]
        %v521 = vld [vmem:[%s241 + $0x540] sm:$0xff]
        %v522 = vld [vmem:[%s241 + $0x548] sm:$0xff]
        %v523 = vld [vmem:[%s241 + $0x550] sm:$0xff]
        %v524 = vld [vmem:[%s241 + $0x558] sm:$0xff]
        %v525 = vld [vmem:[%s241 + $0x560] sm:$0xff]
        %v526 = vld [vmem:[%s241 + $0x568] sm:$0xff]
        %v527 = vld [vmem:[%s241 + $0x570] sm:$0xff]
        %v528 = vld [vmem:[%s241 + $0x578] sm:$0xff]
        %v529 = vld [vmem:[%s241 + $0x580] sm:$0xff]
        %v530 = vld [vmem:[%s241 + $0x588] sm:$0xff]
        %v531 = vld [vmem:[%s241 + $0x590] sm:$0xff]
        %v532 = vld [vmem:[%s241 + $0x598] sm:$0xff]
        %v533 = vld [vmem:[%s241 + $0x5a0] sm:$0xff]
        %v534 = vld [vmem:[%s241 + $0x5a8] sm:$0xff]
        %v535 = vld [vmem:[%s241 + $0x5b0] sm:$0xff]
        %v536 = vld [vmem:[%s241 + $0x5b8] sm:$0xff]
        %v537 = vld [vmem:[%s241 + $0x5c0] sm:$0xff]
        %v538 = vld [vmem:[%s241 + $0x5c8] sm:$0xff]
        %v539 = vld [vmem:[%s241 + $0x5d0] sm:$0xff]
        %v540 = vld [vmem:[%s241 + $0x5d8] sm:$0xff]
        %v541 = vld [vmem:[%s241 + $0x5e0] sm:$0xff]
        %v542 = vld [vmem:[%s241 + $0x5e8] sm:$0xff]
        %v543 = vld [vmem:[%s241 + $0x5f0] sm:$0xff]
        %v544 = vld [vmem:[%s241 + $0x5f8] sm:$0xff]
        %v545 = vld [vmem:[%s241 + $0x600] sm:$0xff]
        %v546 = vld [vmem:[%s241 + $0x608] sm:$0xff]
        %v547 = vld [vmem:[%s241 + $0x610] sm:$0xff]
        %v548 = vld [vmem:[%s241 + $0x618] sm:$0xff]
        %v549 = vld [vmem:[%s241 + $0x620] sm:$0xff]
        %v550 = vld [vmem:[%s241 + $0x628] sm:$0xff]
        %v551 = vld [vmem:[%s241 + $0x630] sm:$0xff]
        %v552 = vld [vmem:[%s241 + $0x638] sm:$0xff]
        %v553 = vld [vmem:[%s241 + $0x640] sm:$0xff]
        %v554 = vld [vmem:[%s241 + $0x648] sm:$0xff]
        %v555 = vld [vmem:[%s241 + $0x650] sm:$0xff]
        %v556 = vld [vmem:[%s241 + $0x658] sm:$0xff]
        %v557 = vld [vmem:[%s241 + $0x660] sm:$0xff]
        %v558 = vld [vmem:[%s241 + $0x668] sm:$0xff]
        %v559 = vld [vmem:[%s241 + $0x670] sm:$0xff]
        %v560 = vld [vmem:[%s241 + $0x678] sm:$0xff]
        %v561 = vld [vmem:[%s241 + $0x680] sm:$0xff]
        %v562 = vld [vmem:[%s241 + $0x688] sm:$0xff]
        %v563 = vld [vmem:[%s241 + $0x690] sm:$0xff]
        %v564 = vld [vmem:[%s241 + $0x698] sm:$0xff]
        %v565 = vld [vmem:[%s241 + $0x6a0] sm:$0xff]
        %v566 = vld [vmem:[%s241 + $0x6a8] sm:$0xff]
        %v567 = vld [vmem:[%s241 + $0x6b0] sm:$0xff]
        %v568 = vld [vmem:[%s241 + $0x6b8] sm:$0xff]
        %v569 = vld [vmem:[%s241 + $0x6c0] sm:$0xff]
        %v570 = vld [vmem:[%s241 + $0x6c8] sm:$0xff]
        %v571 = vld [vmem:[%s241 + $0x6d0] sm:$0xff]
        %v572 = vld [vmem:[%s241 + $0x6d8] sm:$0xff]
        %v573 = vld [vmem:[%s241 + $0x6e0] sm:$0xff]
        %v574 = vld [vmem:[%s241 + $0x6e8] sm:$0xff]
        %v575 = vld [vmem:[%s241 + $0x6f0] sm:$0xff]
        %v576 = vld [vmem:[%s241 + $0x6f8] sm:$0xff]
        %v577 = vld [vmem:[%s241 + $0x700] sm:$0xff]
        %v578 = vld [vmem:[%s241 + $0x708] sm:$0xff]
        %v579 = vld [vmem:[%s241 + $0x710] sm:$0xff]
        %v580 = vld [vmem:[%s241 + $0x718] sm:$0xff]
        %v581 = vld [vmem:[%s241 + $0x720] sm:$0xff]
        %v582 = vld [vmem:[%s241 + $0x728] sm:$0xff]
        %v583 = vld [vmem:[%s241 + $0x730] sm:$0xff]
        %v584 = vld [vmem:[%s241 + $0x738] sm:$0xff]
        %v585 = vld [vmem:[%s241 + $0x740] sm:$0xff]
        %v586 = vld [vmem:[%s241 + $0x748] sm:$0xff]
        %v587 = vld [vmem:[%s241 + $0x750] sm:$0xff]
        %v588 = vld [vmem:[%s241 + $0x758] sm:$0xff]
        %v589 = vld [vmem:[%s241 + $0x760] sm:$0xff]
        %v590 = vld [vmem:[%s241 + $0x768] sm:$0xff]
        %v591 = vld [vmem:[%s241 + $0x770] sm:$0xff]
        %v592 = vld [vmem:[%s241 + $0x778] sm:$0xff]
        %v593 = vld [vmem:[%s241 + $0x780] sm:$0xff]
        %v594 = vld [vmem:[%s241 + $0x788] sm:$0xff]
        %v595 = vld [vmem:[%s241 + $0x790] sm:$0xff]
        %v596 = vld [vmem:[%s241 + $0x798] sm:$0xff]
        %v597 = vld [vmem:[%s241 + $0x7a0] sm:$0xff]
        %v598 = vld [vmem:[%s241 + $0x7a8] sm:$0xff]
        %v599 = vld [vmem:[%s241 + $0x7b0] sm:$0xff]
        %v600 = vld [vmem:[%s241 + $0x7b8] sm:$0xff]
        %v601 = vld [vmem:[%s241 + $0x7c0] sm:$0xff]
        %v602 = vld [vmem:[%s241 + $0x7c8] sm:$0xff]
        %v603 = vld [vmem:[%s241 + $0x7d0] sm:$0xff]
        %v604 = vld [vmem:[%s241 + $0x7d8] sm:$0xff]
        %v605 = vld [vmem:[%s241 + $0x7e0] sm:$0xff]
        %v606 = vld [vmem:[%s241 + $0x7e8] sm:$0xff]
        %v607 = vld [vmem:[%s241 + $0x7f0] sm:$0xff]
        %v608 = vld [vmem:[%s241 + $0x7f8] sm:$0xff]
        %v609 = vld [vmem:[%s241 + $0x800] sm:$0xff]
        %v610 = vld [vmem:[%s241 + $0x808] sm:$0xff]
        %v611 = vld [vmem:[%s241 + $0x810] sm:$0xff]
        %v612 = vld [vmem:[%s241 + $0x818] sm:$0xff]
        %v613 = vld [vmem:[%s241 + $0x820] sm:$0xff]
        %v614 = vld [vmem:[%s241 + $0x828] sm:$0xff]
        %v615 = vld [vmem:[%s241 + $0x830] sm:$0xff]
        %v616 = vld [vmem:[%s241 + $0x838] sm:$0xff]
        %v617 = vld [vmem:[%s241 + $0x840] sm:$0xff]
        %v618 = vld [vmem:[%s241 + $0x848] sm:$0xff]
        %v619 = vld [vmem:[%s241 + $0x850] sm:$0xff]
        %v620 = vld [vmem:[%s241 + $0x858] sm:$0xff]
        %v621 = vld [vmem:[%s241 + $0x860] sm:$0xff]
        %v622 = vld [vmem:[%s241 + $0x868] sm:$0xff]
        %v623 = vld [vmem:[%s241 + $0x870] sm:$0xff]
        %v624 = vld [vmem:[%s241 + $0x878] sm:$0xff]
        %v625 = vld [vmem:[%s241 + $0x880] sm:$0xff]
        %v626 = vld [vmem:[%s241 + $0x888] sm:$0xff]
        %v627 = vld [vmem:[%s241 + $0x890] sm:$0xff]
        %v628 = vld [vmem:[%s241 + $0x898] sm:$0xff]
        %v629 = vld [vmem:[%s241 + $0x8a0] sm:$0xff]
        %v630 = vld [vmem:[%s241 + $0x8a8] sm:$0xff]
        %v631 = vld [vmem:[%s241 + $0x8b0] sm:$0xff]
        %v632 = vld [vmem:[%s241 + $0x8b8] sm:$0xff]
        %v633 = vld [vmem:[%s241 + $0x8c0] sm:$0xff]
        %v634 = vld [vmem:[%s241 + $0x8c8] sm:$0xff]
        %v635 = vld [vmem:[%s241 + $0x8d0] sm:$0xff]
        %v636 = vld [vmem:[%s241 + $0x8d8] sm:$0xff]
        %v637 = vld [vmem:[%s241 + $0x8e0] sm:$0xff]
        %v638 = vld [vmem:[%s241 + $0x8e8] sm:$0xff]
        %v639 = vld [vmem:[%s241 + $0x8f0] sm:$0xff]
        %v640 = vld [vmem:[%s241 + $0x8f8] sm:$0xff]
        %v641 = vld [vmem:[%s241 + $0x900] sm:$0xff]
        %v642 = vld [vmem:[%s241 + $0x908] sm:$0xff]
        %v643 = vld [vmem:[%s241 + $0x910] sm:$0xff]
        %v644 = vld [vmem:[%s241 + $0x918] sm:$0xff]
        %v645 = vld [vmem:[%s241 + $0x920] sm:$0xff]
        %v646 = vld [vmem:[%s241 + $0x928] sm:$0xff]
        %v647 = vld [vmem:[%s241 + $0x930] sm:$0xff]
        %v648 = vld [vmem:[%s241 + $0x938] sm:$0xff]
        %v649 = vld [vmem:[%s241 + $0x940] sm:$0xff]
        %v650 = vld [vmem:[%s241 + $0x948] sm:$0xff]
        %v651 = vld [vmem:[%s241 + $0x950] sm:$0xff]
        %v652 = vld [vmem:[%s241 + $0x958] sm:$0xff]
        %v653 = vld [vmem:[%s241 + $0x960] sm:$0xff]
        %v654 = vld [vmem:[%s241 + $0x968] sm:$0xff]
        %v655 = vld [vmem:[%s241 + $0x970] sm:$0xff]
        %v656 = vld [vmem:[%s241 + $0x978] sm:$0xff]
        %v657 = vld [vmem:[%s241 + $0x980] sm:$0xff]
        %v658 = vld [vmem:[%s241 + $0x988] sm:$0xff]
        %v659 = vld [vmem:[%s241 + $0x990] sm:$0xff]
        %v660 = vld [vmem:[%s241 + $0x998] sm:$0xff]
        %v661 = vld [vmem:[%s241 + $0x9a0] sm:$0xff]
        %v662 = vld [vmem:[%s241 + $0x9a8] sm:$0xff]
        %v663 = vld [vmem:[%s241 + $0x9b0] sm:$0xff]
        %v664 = vld [vmem:[%s241 + $0x9b8] sm:$0xff]
        %v665 = vld [vmem:[%s241 + $0x9c0] sm:$0xff]
        %v666 = vld [vmem:[%s241 + $0x9c8] sm:$0xff]
        %v667 = vld [vmem:[%s241 + $0x9d0] sm:$0xff]
        %v668 = vld [vmem:[%s241 + $0x9d8] sm:$0xff]
        %v669 = vld [vmem:[%s241 + $0x9e0] sm:$0xff]
        %v670 = vld [vmem:[%s241 + $0x9e8] sm:$0xff]
        %v671 = vld [vmem:[%s241 + $0x9f0] sm:$0xff]
        %v672 = vld [vmem:[%s241 + $0x9f8] sm:$0xff]
        %v673 = vld [vmem:[%s241 + $0xa00] sm:$0xff]
        %v674 = vld [vmem:[%s241 + $0xa08] sm:$0xff]
        %v675 = vld [vmem:[%s241 + $0xa10] sm:$0xff]
        %v676 = vld [vmem:[%s241 + $0xa18] sm:$0xff]
        %v677 = vld [vmem:[%s241 + $0xa20] sm:$0xff]
        %v678 = vld [vmem:[%s241 + $0xa28] sm:$0xff]
        %v679 = vld [vmem:[%s241 + $0xa30] sm:$0xff]
        %v680 = vld [vmem:[%s241 + $0xa38] sm:$0xff]
        %v681 = vld [vmem:[%s241 + $0xa40] sm:$0xff]
        %v682 = vld [vmem:[%s241 + $0xa48] sm:$0xff]
        %v683 = vld [vmem:[%s241 + $0xa50] sm:$0xff]
        %v684 = vld [vmem:[%s241 + $0xa58] sm:$0xff]
        %v685 = vld [vmem:[%s241 + $0xa60] sm:$0xff]
        %v686 = vld [vmem:[%s241 + $0xa68] sm:$0xff]
        %v687 = vld [vmem:[%s241 + $0xa70] sm:$0xff]
        %v688 = vld [vmem:[%s241 + $0xa78] sm:$0xff]
        %v689 = vld [vmem:[%s241 + $0xa80] sm:$0xff]
        %v690 = vld [vmem:[%s241 + $0xa88] sm:$0xff]
        %v691 = vld [vmem:[%s241 + $0xa90] sm:$0xff]
        %v692 = vld [vmem:[%s241 + $0xa98] sm:$0xff]
        %v693 = vld [vmem:[%s241 + $0xaa0] sm:$0xff]
        %v694 = vld [vmem:[%s241 + $0xaa8] sm:$0xff]
        %v695 = vld [vmem:[%s241 + $0xab0] sm:$0xff]
        %v696 = vld [vmem:[%s241 + $0xab8] sm:$0xff]
        %v697 = vld [vmem:[%s241 + $0xac0] sm:$0xff]
        %v698 = vld [vmem:[%s241 + $0xac8] sm:$0xff]
        %v699 = vld [vmem:[%s241 + $0xad0] sm:$0xff]
        %v700 = vld [vmem:[%s241 + $0xad8] sm:$0xff]
        %v701 = vld [vmem:[%s241 + $0xae0] sm:$0xff]
        %v702 = vld [vmem:[%s241 + $0xae8] sm:$0xff]
        %v703 = vld [vmem:[%s241 + $0xaf0] sm:$0xff]
        %v704 = vld [vmem:[%s241 + $0xaf8] sm:$0xff]
        %v705 = vld [vmem:[%s241 + $0xb00] sm:$0xff]
        %v706 = vld [vmem:[%s241 + $0xb08] sm:$0xff]
        %v707 = vld [vmem:[%s241 + $0xb10] sm:$0xff]
        %v708 = vld [vmem:[%s241 + $0xb18] sm:$0xff]
        %v709 = vld [vmem:[%s241 + $0xb20] sm:$0xff]
        %v710 = vld [vmem:[%s241 + $0xb28] sm:$0xff]
        %v711 = vld [vmem:[%s241 + $0xb30] sm:$0xff]
        %v712 = vld [vmem:[%s241 + $0xb38] sm:$0xff]
        %v713 = vld [vmem:[%s241 + $0xb40] sm:$0xff]
        %v714 = vld [vmem:[%s241 + $0xb48] sm:$0xff]
        %v715 = vld [vmem:[%s241 + $0xb50] sm:$0xff]
        %v716 = vld [vmem:[%s241 + $0xb58] sm:$0xff]
        %v717 = vld [vmem:[%s241 + $0xb60] sm:$0xff]
        %v718 = vld [vmem:[%s241 + $0xb68] sm:$0xff]
        %v719 = vld [vmem:[%s241 + $0xb70] sm:$0xff]
        %v720 = vld [vmem:[%s241 + $0xb78] sm:$0xff]
        %v721 = vld [vmem:[%s241 + $0xb80] sm:$0xff]
        %v722 = vld [vmem:[%s241 + $0xb88] sm:$0xff]
        %v723 = vld [vmem:[%s241 + $0xb90] sm:$0xff]
        %v724 = vld [vmem:[%s241 + $0xb98] sm:$0xff]
        %v725 = vld [vmem:[%s241 + $0xba0] sm:$0xff]
        %v726 = vld [vmem:[%s241 + $0xba8] sm:$0xff]
        %v727 = vld [vmem:[%s241 + $0xbb0] sm:$0xff]
        %v728 = vld [vmem:[%s241 + $0xbb8] sm:$0xff]
        %v729 = vld [vmem:[%s241 + $0xbc0] sm:$0xff]
        %v730 = vld [vmem:[%s241 + $0xbc8] sm:$0xff]
        %v731 = vld [vmem:[%s1] sm:$0xff]
        %v732 = vld [vmem:[%s1 + $0x8] sm:$0xff]
        %v733 = vld [vmem:[%s1 + $0x10] sm:$0xff]
        %v734 = vld [vmem:[%s1 + $0x18] sm:$0xff]
        %v735 = vld [vmem:[%s1 + $0x20] sm:$0xff]
        %v736 = vld [vmem:[%s1 + $0x28] sm:$0xff]
        %v737 = vld [vmem:[%s1 + $0x30] sm:$0xff]
        %v738 = vld [vmem:[%s1 + $0x38] sm:$0xff]
        %v739 = vld [vmem:[%s1 + $0x40] sm:$0xff]
        %v740 = vld [vmem:[%s1 + $0x48] sm:$0xff]
        %v741 = vld [vmem:[%s1 + $0x50] sm:$0xff]
        %v742 = vld [vmem:[%s1 + $0x58] sm:$0xff]
        %v743 = vld [vmem:[%s1 + $0x60] sm:$0xff]
        %v744 = vld [vmem:[%s1 + $0x68] sm:$0xff]
        %v745 = vld [vmem:[%s1 + $0x70] sm:$0xff]
        %v746 = vld [vmem:[%s1 + $0x78] sm:$0xff]
        %v747 = vld [vmem:[%s1 + $0x80] sm:$0xff]
        %v748 = vld [vmem:[%s1 + $0x88] sm:$0xff]
        %v749 = vld [vmem:[%s1 + $0x90] sm:$0xff]
        %v750 = vld [vmem:[%s1 + $0x98] sm:$0xff]
        %v751 = vld [vmem:[%s1 + $0xa0] sm:$0xff]
        %v752 = vld [vmem:[%s1 + $0xa8] sm:$0xff]
        %v753 = vld [vmem:[%s1 + $0xb0] sm:$0xff]
        %v754 = vld [vmem:[%s1 + $0xb8] sm:$0xff]
        %v755 = vld [vmem:[%s1 + $0xc0] sm:$0xff]
        %v756 = vld [vmem:[%s1 + $0xc8] sm:$0xff]
        %v757 = vld [vmem:[%s1 + $0xd0] sm:$0xff]
        %v758 = vld [vmem:[%s1 + $0xd8] sm:$0xff]
        %v759 = vld [vmem:[%s1 + $0xe0] sm:$0xff]
        %v760 = vld [vmem:[%s1 + $0xe8] sm:$0xff]
        %v761 = vld [vmem:[%s1 + $0xf0] sm:$0xff]
        %v762 = vld [vmem:[%s1 + $0xf8] sm:$0xff]
        %v763 = vld [vmem:[%s1 + $0x100] sm:$0xff]
        %v764 = vld [vmem:[%s1 + $0x108] sm:$0xff]
        %v765 = vld [vmem:[%s1 + $0x110] sm:$0xff]
        %v766 = vld [vmem:[%s1 + $0x118] sm:$0xff]
        %v767 = vld [vmem:[%s1 + $0x120] sm:$0xff]
        %v768 = vld [vmem:[%s1 + $0x128] sm:$0xff]
        %v769 = vld [vmem:[%s1 + $0x130] sm:$0xff]
        %v770 = vld [vmem:[%s1 + $0x138] sm:$0xff]
        %v771 = vld [vmem:[%s1 + $0x140] sm:$0xff]
        %v772 = vld [vmem:[%s1 + $0x148] sm:$0xff]
        %v773 = vld [vmem:[%s1 + $0x150] sm:$0xff]
        %v774 = vld [vmem:[%s1 + $0x158] sm:$0xff]
        %v775 = vld [vmem:[%s1 + $0x160] sm:$0xff]
        %v776 = vld [vmem:[%s1 + $0x168] sm:$0xff]
        %v777 = vld [vmem:[%s1 + $0x170] sm:$0xff]
        %v778 = vld [vmem:[%s1 + $0x178] sm:$0xff]
        %v779 = vld [vmem:[%s1 + $0x180] sm:$0xff]
        %v780 = vld [vmem:[%s1 + $0x188] sm:$0xff]
        %v781 = vld [vmem:[%s1 + $0x190] sm:$0xff]
        %v782 = vld [vmem:[%s1 + $0x198] sm:$0xff]
        %v783 = vld [vmem:[%s1 + $0x1a0] sm:$0xff]
        %v784 = vld [vmem:[%s1 + $0x1a8] sm:$0xff]
        %v785 = vld [vmem:[%s1 + $0x1b0] sm:$0xff]
        %v786 = vld [vmem:[%s1 + $0x1b8] sm:$0xff]
        %v787 = vld [vmem:[%s1 + $0x1c0] sm:$0xff]
        %v788 = vld [vmem:[%s1 + $0x1c8] sm:$0xff]
        %v789 = vld [vmem:[%s1 + $0x1d0] sm:$0xff]
        %v790 = vld [vmem:[%s1 + $0x1d8] sm:$0xff]
        %v791 = vld [vmem:[%s1 + $0x1e0] sm:$0xff]
        %v792 = vld [vmem:[%s1 + $0x1e8] sm:$0xff]
        %v793 = vld [vmem:[%s1 + $0x1f0] sm:$0xff]
        %v794 = vld [vmem:[%s1 + $0x1f8] sm:$0xff]
        %v795 = vld [vmem:[%s1 + $0x200] sm:$0xff]
        %v796 = vld [vmem:[%s1 + $0x208] sm:$0xff]
        %v797 = vld [vmem:[%s1 + $0x210] sm:$0xff]
        %v798 = vld [vmem:[%s1 + $0x218] sm:$0xff]
        %v799 = vld [vmem:[%s1 + $0x220] sm:$0xff]
        %v800 = vld [vmem:[%s1 + $0x228] sm:$0xff]
        %v801 = vld [vmem:[%s1 + $0x230] sm:$0xff]
        %v802 = vld [vmem:[%s1 + $0x238] sm:$0xff]
        %v803 = vld [vmem:[%s1 + $0x240] sm:$0xff]
        %v804 = vld [vmem:[%s1 + $0x248] sm:$0xff]
        %v805 = vld [vmem:[%s1 + $0x250] sm:$0xff]
        %v806 = vld [vmem:[%s1 + $0x258] sm:$0xff]
        %v807 = vld [vmem:[%s1 + $0x260] sm:$0xff]
        %v808 = vld [vmem:[%s1 + $0x268] sm:$0xff]
        %v809 = vld [vmem:[%s1 + $0x270] sm:$0xff]
        %v810 = vld [vmem:[%s1 + $0x278] sm:$0xff]
        %v811 = vld [vmem:[%s1 + $0x280] sm:$0xff]
        %v812 = vld [vmem:[%s1 + $0x288] sm:$0xff]
        %v813 = vld [vmem:[%s1 + $0x290] sm:$0xff]
        %v814 = vld [vmem:[%s1 + $0x298] sm:$0xff]
        %v815 = vld [vmem:[%s1 + $0x2a0] sm:$0xff]
        %v816 = vld [vmem:[%s1 + $0x2a8] sm:$0xff]
        %v817 = vld [vmem:[%s1 + $0x2b0] sm:$0xff]
        %v818 = vld [vmem:[%s1 + $0x2b8] sm:$0xff]
        %v819 = vld [vmem:[%s1 + $0x2c0] sm:$0xff]
        %v820 = vld [vmem:[%s1 + $0x2c8] sm:$0xff]
        %v821 = vld [vmem:[%s1 + $0x2d0] sm:$0xff]
        %v822 = vld [vmem:[%s1 + $0x2d8] sm:$0xff]
        %v823 = vld [vmem:[%s1 + $0x2e0] sm:$0xff]
        %v824 = vld [vmem:[%s1 + $0x2e8] sm:$0xff]
        %v825 = vld [vmem:[%s1 + $0x2f0] sm:$0xff]
        %v826 = vld [vmem:[%s1 + $0x2f8] sm:$0xff]
        %v827 = vld [vmem:[%s1 + $0x300] sm:$0xff]
        %v828 = vld [vmem:[%s1 + $0x308] sm:$0xff]
        %v829 = vld [vmem:[%s1 + $0x310] sm:$0xff]
        %v830 = vld [vmem:[%s1 + $0x318] sm:$0xff]
        %v831 = vld [vmem:[%s1 + $0x320] sm:$0xff]
        %v832 = vld [vmem:[%s1 + $0x328] sm:$0xff]
        %v833 = vld [vmem:[%s1 + $0x330] sm:$0xff]
        %v834 = vld [vmem:[%s1 + $0x338] sm:$0xff]
        %v835 = vld [vmem:[%s1 + $0x340] sm:$0xff]
        %v836 = vld [vmem:[%s1 + $0x348] sm:$0xff]
        %v837 = vld [vmem:[%s1 + $0x350] sm:$0xff]
        %v838 = vld [vmem:[%s1 + $0x358] sm:$0xff]
        %v839 = vld [vmem:[%s1 + $0x360] sm:$0xff]
        %v840 = vld [vmem:[%s1 + $0x368] sm:$0xff]
        %v841 = vld [vmem:[%s1 + $0x370] sm:$0xff]
        %v842 = vld [vmem:[%s1 + $0x378] sm:$0xff]
        %v843 = vld [vmem:[%s1 + $0x380] sm:$0xff]
        %v844 = vld [vmem:[%s1 + $0x388] sm:$0xff]
        %v845 = vld [vmem:[%s1 + $0x390] sm:$0xff]
        %v846 = vld [vmem:[%s1 + $0x398] sm:$0xff]
        %v847 = vld [vmem:[%s1 + $0x3a0] sm:$0xff]
        %v848 = vld [vmem:[%s1 + $0x3a8] sm:$0xff]
        %v849 = vld [vmem:[%s1 + $0x3b0] sm:$0xff]
        %v850 = vld [vmem:[%s1 + $0x3b8] sm:$0xff]
        %v851 = vld [vmem:[%s1 + $0x3c0] sm:$0xff]
        %v852 = vld [vmem:[%s1 + $0x3c8] sm:$0xff]
        %v853 = vld [vmem:[%s1 + $0x3d0] sm:$0xff]
        %v854 = vld [vmem:[%s1 + $0x3d8] sm:$0xff]
        %v855 = vld [vmem:[%s1 + $0x3e0] sm:$0xff]
        %v856 = vld [vmem:[%s1 + $0x3e8] sm:$0xff]
        %v857 = vld [vmem:[%s1 + $0x3f0] sm:$0xff]
        %v858 = vld [vmem:[%s1 + $0x3f8] sm:$0xff]
        %v859 = vld [vmem:[%s1 + $0x400] sm:$0xff]
        %v860 = vld [vmem:[%s1 + $0x408] sm:$0xff]
        %v861 = vld [vmem:[%s1 + $0x410] sm:$0xff]
        %v862 = vld [vmem:[%s1 + $0x418] sm:$0xff]
        %v863 = vld [vmem:[%s1 + $0x420] sm:$0xff]
        %v864 = vld [vmem:[%s1 + $0x428] sm:$0xff]
        %v865 = vld [vmem:[%s1 + $0x430] sm:$0xff]
        %v866 = vld [vmem:[%s1 + $0x438] sm:$0xff]
        %v867 = vld [vmem:[%s1 + $0x440] sm:$0xff]
        %v868 = vld [vmem:[%s1 + $0x448] sm:$0xff]
        %v869 = vld [vmem:[%s1 + $0x450] sm:$0xff]
        %v870 = vld [vmem:[%s1 + $0x458] sm:$0xff]
        %v871 = vld [vmem:[%s1 + $0x460] sm:$0xff]
        %v872 = vld [vmem:[%s1 + $0x468] sm:$0xff]
        %v873 = vld [vmem:[%s1 + $0x470] sm:$0xff]
        %v874 = vld [vmem:[%s1 + $0x478] sm:$0xff]
        %v875 = vld [vmem:[%s1 + $0x480] sm:$0xff]
        %v876 = vld [vmem:[%s1 + $0x488] sm:$0xff]
        %v877 = vld [vmem:[%s1 + $0x490] sm:$0xff]
        %v878 = vld [vmem:[%s1 + $0x498] sm:$0xff]
        %v879 = vld [vmem:[%s1 + $0x4a0] sm:$0xff]
        %v880 = vld [vmem:[%s1 + $0x4a8] sm:$0xff]
        %v881 = vld [vmem:[%s1 + $0x4b0] sm:$0xff]
        %v882 = vld [vmem:[%s1 + $0x4b8] sm:$0xff]
        %v883 = vld [vmem:[%s1 + $0x4c0] sm:$0xff]
        %v884 = vld [vmem:[%s1 + $0x4c8] sm:$0xff]
        %v885 = vld [vmem:[%s1 + $0x4d0] sm:$0xff]
        %v886 = vld [vmem:[%s1 + $0x4d8] sm:$0xff]
        %v887 = vld [vmem:[%s1 + $0x4e0] sm:$0xff]
        %v888 = vld [vmem:[%s1 + $0x4e8] sm:$0xff]
        %v889 = vld [vmem:[%s1 + $0x4f0] sm:$0xff]
        %v890 = vld [vmem:[%s1 + $0x4f8] sm:$0xff]
        %v891 = vld [vmem:[%s1 + $0x500] sm:$0xff]
        %v892 = vld [vmem:[%s1 + $0x508] sm:$0xff]
        %v893 = vld [vmem:[%s1 + $0x510] sm:$0xff]
        %v894 = vld [vmem:[%s1 + $0x518] sm:$0xff]
        %v895 = vld [vmem:[%s1 + $0x520] sm:$0xff]
        %v896 = vld [vmem:[%s1 + $0x528] sm:$0xff]
        %v897 = vld [vmem:[%s1 + $0x530] sm:$0xff]
        %v898 = vld [vmem:[%s1 + $0x538] sm:$0xff]
        %v899 = vld [vmem:[%s1 + $0x540] sm:$0xff]
        %v900 = vld [vmem:[%s1 + $0x548] sm:$0xff]
        %v901 = vld [vmem:[%s1 + $0x550] sm:$0xff]
        %v902 = vld [vmem:[%s1 + $0x558] sm:$0xff]
        %v903 = vld [vmem:[%s1 + $0x560] sm:$0xff]
        %v904 = vld [vmem:[%s1 + $0x568] sm:$0xff]
        %v905 = vld [vmem:[%s1 + $0x570] sm:$0xff]
        %v906 = vld [vmem:[%s1 + $0x578] sm:$0xff]
        %v907 = vld [vmem:[%s1 + $0x580] sm:$0xff]
        %v908 = vld [vmem:[%s1 + $0x588] sm:$0xff]
        %v909 = vld [vmem:[%s1 + $0x590] sm:$0xff]
        %v910 = vld [vmem:[%s1 + $0x598] sm:$0xff]
        %v911 = vld [vmem:[%s1 + $0x5a0] sm:$0xff]
        %v912 = vld [vmem:[%s1 + $0x5a8] sm:$0xff]
        %v913 = vld [vmem:[%s1 + $0x5b0] sm:$0xff]
        %v914 = vld [vmem:[%s1 + $0x5b8] sm:$0xff]
        %v915 = vld [vmem:[%s1 + $0x5c0] sm:$0xff]
        %v916 = vld [vmem:[%s1 + $0x5c8] sm:$0xff]
        %v917 = vld [vmem:[%s1 + $0x5d0] sm:$0xff]
        %v918 = vld [vmem:[%s1 + $0x5d8] sm:$0xff]
        %v919 = vld [vmem:[%s1 + $0x5e0] sm:$0xff]
        %v920 = vld [vmem:[%s1 + $0x5e8] sm:$0xff]
        %v921 = vld [vmem:[%s1 + $0x5f0] sm:$0xff]
        %v922 = vld [vmem:[%s1 + $0x5f8] sm:$0xff]
        %v923 = vld [vmem:[%s1 + $0x600] sm:$0xff]
        %v924 = vld [vmem:[%s1 + $0x608] sm:$0xff]
        %v925 = vld [vmem:[%s1 + $0x610] sm:$0xff]
        %v926 = vld [vmem:[%s1 + $0x618] sm:$0xff]
        %v927 = vld [vmem:[%s1 + $0x620] sm:$0xff]
        %v928 = vld [vmem:[%s1 + $0x628] sm:$0xff]
        %v929 = vld [vmem:[%s1 + $0x630] sm:$0xff]
        %v930 = vld [vmem:[%s1 + $0x638] sm:$0xff]
        %v931 = vld [vmem:[%s1 + $0x640] sm:$0xff]
        %v932 = vld [vmem:[%s1 + $0x648] sm:$0xff]
        %v933 = vld [vmem:[%s1 + $0x650] sm:$0xff]
        %v934 = vld [vmem:[%s1 + $0x658] sm:$0xff]
        %v935 = vld [vmem:[%s1 + $0x660] sm:$0xff]
        %v936 = vld [vmem:[%s1 + $0x668] sm:$0xff]
        %v937 = vld [vmem:[%s1 + $0x670] sm:$0xff]
        %v938 = vld [vmem:[%s1 + $0x678] sm:$0xff]
        %v939 = vld [vmem:[%s1 + $0x680] sm:$0xff]
        %v940 = vld [vmem:[%s1 + $0x688] sm:$0xff]
        %v941 = vld [vmem:[%s1 + $0x690] sm:$0xff]
        %v942 = vld [vmem:[%s1 + $0x698] sm:$0xff]
        %v943 = vld [vmem:[%s1 + $0x6a0] sm:$0xff]
        %v944 = vld [vmem:[%s1 + $0x6a8] sm:$0xff]
        %v945 = vld [vmem:[%s1 + $0x6b0] sm:$0xff]
        %v946 = vld [vmem:[%s1 + $0x6b8] sm:$0xff]
        %v947 = vld [vmem:[%s1 + $0x6c0] sm:$0xff]
        %v948 = vld [vmem:[%s1 + $0x6c8] sm:$0xff]
        %v949 = vld [vmem:[%s1 + $0x6d0] sm:$0xff]
        %v950 = vld [vmem:[%s1 + $0x6d8] sm:$0xff]
        %v951 = vld [vmem:[%s1 + $0x6e0] sm:$0xff]
        %v952 = vld [vmem:[%s1 + $0x6e8] sm:$0xff]
        %v953 = vld [vmem:[%s1 + $0x6f0] sm:$0xff]
        %v954 = vld [vmem:[%s1 + $0x6f8] sm:$0xff]
        %v955 = vld [vmem:[%s1 + $0x700] sm:$0xff]
        %v956 = vld [vmem:[%s1 + $0x708] sm:$0xff]
        %v957 = vld [vmem:[%s1 + $0x710] sm:$0xff]
        %v958 = vld [vmem:[%s1 + $0x718] sm:$0xff]
        %v959 = vld [vmem:[%s1 + $0x720] sm:$0xff]
        %v960 = vld [vmem:[%s1 + $0x728] sm:$0xff]
        %v961 = vld [vmem:[%s1 + $0x730] sm:$0xff]
        %v962 = vld [vmem:[%s1 + $0x738] sm:$0xff]
        %v963 = vld [vmem:[%s1 + $0x740] sm:$0xff]
        %v964 = vld [vmem:[%s1 + $0x748] sm:$0xff]
        %v965 = vld [vmem:[%s1 + $0x750] sm:$0xff]
        %v966 = vld [vmem:[%s1 + $0x758] sm:$0xff]
        %v967 = vld [vmem:[%s1 + $0x760] sm:$0xff]
        %v968 = vld [vmem:[%s1 + $0x768] sm:$0xff]
        %v969 = vld [vmem:[%s1 + $0x770] sm:$0xff]
        %v970 = vld [vmem:[%s1 + $0x778] sm:$0xff]
        %v971 = vld [vmem:[%s1 + $0x780] sm:$0xff]
        %v972 = vld [vmem:[%s1 + $0x788] sm:$0xff]
        %v973 = vld [vmem:[%s1 + $0x790] sm:$0xff]
        %v974 = vld [vmem:[%s1 + $0x798] sm:$0xff]
        %v975 = vld [vmem:[%s1 + $0x7a0] sm:$0xff]
        %v976 = vld [vmem:[%s1 + $0x7a8] sm:$0xff]
        %v977 = vld [vmem:[%s1 + $0x7b0] sm:$0xff]
        %v978 = vld [vmem:[%s1 + $0x7b8] sm:$0xff]
        %v979 = vld [vmem:[%s1 + $0x7c0] sm:$0xff]
        %v980 = vld [vmem:[%s1 + $0x7c8] sm:$0xff]
        %v981 = vld [vmem:[%s1 + $0x7d0] sm:$0xff]
        %v982 = vld [vmem:[%s1 + $0x7d8] sm:$0xff]
        %v983 = vld [vmem:[%s1 + $0x7e0] sm:$0xff]
        %v984 = vld [vmem:[%s1 + $0x7e8] sm:$0xff]
        %v985 = vld [vmem:[%s1 + $0x7f0] sm:$0xff]
        %v986 = vld [vmem:[%s1 + $0x7f8] sm:$0xff]
        %v987 = vld [vmem:[%s1 + $0x800] sm:$0xff]
        %v988 = vld [vmem:[%s1 + $0x808] sm:$0xff]
        %v989 = vld [vmem:[%s1 + $0x810] sm:$0xff]
        %v990 = vld [vmem:[%s1 + $0x818] sm:$0xff]
        %v991 = vld [vmem:[%s1 + $0x820] sm:$0xff]
        %v992 = vld [vmem:[%s1 + $0x828] sm:$0xff]
        %v993 = vld [vmem:[%s1 + $0x830] sm:$0xff]
        %v994 = vld [vmem:[%s1 + $0x838] sm:$0xff]
        %v995 = vld [vmem:[%s1 + $0x840] sm:$0xff]
        %v996 = vld [vmem:[%s1 + $0x848] sm:$0xff]
        %v997 = vld [vmem:[%s1 + $0x850] sm:$0xff]
        %v998 = vld [vmem:[%s1 + $0x858] sm:$0xff]
        %v999 = vld [vmem:[%s1 + $0x860] sm:$0xff]
        %v1000 = vld [vmem:[%s1 + $0x868] sm:$0xff]
        %v1001 = vld [vmem:[%s1 + $0x870] sm:$0xff]
        %v1002 = vld [vmem:[%s1 + $0x878] sm:$0xff]
        %v1003 = vld [vmem:[%s1 + $0x880] sm:$0xff]
        %v1004 = vld [vmem:[%s1 + $0x888] sm:$0xff]
        %v1005 = vld [vmem:[%s1 + $0x890] sm:$0xff]
        %v1006 = vld [vmem:[%s1 + $0x898] sm:$0xff]
        %v1007 = vld [vmem:[%s1 + $0x8a0] sm:$0xff]
        %v1008 = vld [vmem:[%s1 + $0x8a8] sm:$0xff]
        %v1009 = vld [vmem:[%s1 + $0x8b0] sm:$0xff]
        %v1010 = vld [vmem:[%s1 + $0x8b8] sm:$0xff]
        %v1011 = vld [vmem:[%s1 + $0x8c0] sm:$0xff]
        %v1012 = vld [vmem:[%s1 + $0x8c8] sm:$0xff]
        %v1013 = vld [vmem:[%s1 + $0x8d0] sm:$0xff]
        %v1014 = vld [vmem:[%s1 + $0x8d8] sm:$0xff]
        %v1015 = vld [vmem:[%s1 + $0x8e0] sm:$0xff]
        %v1016 = vld [vmem:[%s1 + $0x8e8] sm:$0xff]
        %v1017 = vld [vmem:[%s1 + $0x8f0] sm:$0xff]
        %v1018 = vld [vmem:[%s1 + $0x8f8] sm:$0xff]
        %v1019 = vld [vmem:[%s1 + $0x900] sm:$0xff]
        %v1020 = vld [vmem:[%s1 + $0x908] sm:$0xff]
        %v1021 = vld [vmem:[%s1 + $0x910] sm:$0xff]
        %v1022 = vld [vmem:[%s1 + $0x918] sm:$0xff]
        %v1023 = vld [vmem:[%s1 + $0x920] sm:$0xff]
        %v1024 = vld [vmem:[%s1 + $0x928] sm:$0xff]
        %v1025 = vld [vmem:[%s1 + $0x930] sm:$0xff]
        %v1026 = vld [vmem:[%s1 + $0x938] sm:$0xff]
        %v1027 = vld [vmem:[%s1 + $0x940] sm:$0xff]
        %v1028 = vld [vmem:[%s1 + $0x948] sm:$0xff]
        %v1029 = vld [vmem:[%s1 + $0x950] sm:$0xff]
        %v1030 = vld [vmem:[%s1 + $0x958] sm:$0xff]
        %v1031 = vld [vmem:[%s1 + $0x960] sm:$0xff]
        %v1032 = vld [vmem:[%s1 + $0x968] sm:$0xff]
        %v1033 = vld [vmem:[%s1 + $0x970] sm:$0xff]
        %v1034 = vld [vmem:[%s1 + $0x978] sm:$0xff]
        %v1035 = vld [vmem:[%s1 + $0x980] sm:$0xff]
        %v1036 = vld [vmem:[%s1 + $0x988] sm:$0xff]
        %v1037 = vld [vmem:[%s1 + $0x990] sm:$0xff]
        %v1038 = vld [vmem:[%s1 + $0x998] sm:$0xff]
        %v1039 = vld [vmem:[%s1 + $0x9a0] sm:$0xff]
        %v1040 = vld [vmem:[%s1 + $0x9a8] sm:$0xff]
        %v1041 = vld [vmem:[%s1 + $0x9b0] sm:$0xff]
        %v1042 = vld [vmem:[%s1 + $0x9b8] sm:$0xff]
        %v1043 = vld [vmem:[%s1 + $0x9c0] sm:$0xff]
        %v1044 = vld [vmem:[%s1 + $0x9c8] sm:$0xff]
        %v1045 = vld [vmem:[%s1 + $0x9d0] sm:$0xff]
        %v1046 = vld [vmem:[%s1 + $0x9d8] sm:$0xff]
        %v1047 = vld [vmem:[%s1 + $0x9e0] sm:$0xff]
        %v1048 = vld [vmem:[%s1 + $0x9e8] sm:$0xff]
        %v1049 = vld [vmem:[%s1 + $0x9f0] sm:$0xff]
        %v1050 = vld [vmem:[%s1 + $0x9f8] sm:$0xff]
        %v1051 = vld [vmem:[%s1 + $0xa00] sm:$0xff]
        %v1052 = vld [vmem:[%s1 + $0xa08] sm:$0xff]
        %v1053 = vld [vmem:[%s1 + $0xa10] sm:$0xff]
        %v1054 = vld [vmem:[%s1 + $0xa18] sm:$0xff]
        %v1055 = vld [vmem:[%s1 + $0xa20] sm:$0xff]
        %v1056 = vld [vmem:[%s1 + $0xa28] sm:$0xff]
        %v1057 = vld [vmem:[%s1 + $0xa30] sm:$0xff]
        %v1058 = vld [vmem:[%s1 + $0xa38] sm:$0xff]
        %v1059 = vld [vmem:[%s1 + $0xa40] sm:$0xff]
        %v1060 = vld [vmem:[%s1 + $0xa48] sm:$0xff]
        %v1061 = vld [vmem:[%s1 + $0xa50] sm:$0xff]
        %v1062 = vld [vmem:[%s1 + $0xa58] sm:$0xff]
        %v1063 = vld [vmem:[%s1 + $0xa60] sm:$0xff]
        %v1064 = vld [vmem:[%s1 + $0xa68] sm:$0xff]
        %v1065 = vld [vmem:[%s1 + $0xa70] sm:$0xff]
        %v1066 = vld [vmem:[%s1 + $0xa78] sm:$0xff]
        %v1067 = vld [vmem:[%s1 + $0xa80] sm:$0xff]
        %v1068 = vld [vmem:[%s1 + $0xa88] sm:$0xff]
        %v1069 = vld [vmem:[%s1 + $0xa90] sm:$0xff]
        %v1070 = vld [vmem:[%s1 + $0xa98] sm:$0xff]
        %v1071 = vld [vmem:[%s1 + $0xaa0] sm:$0xff]
        %v1072 = vld [vmem:[%s1 + $0xaa8] sm:$0xff]
        %v1073 = vld [vmem:[%s1 + $0xab0] sm:$0xff]
        %v1074 = vld [vmem:[%s1 + $0xab8] sm:$0xff]
        %v1075 = vld [vmem:[%s1 + $0xac0] sm:$0xff]
        %v1076 = vld [vmem:[%s1 + $0xac8] sm:$0xff]
        %v1077 = vld [vmem:[%s1 + $0xad0] sm:$0xff]
        %v1078 = vld [vmem:[%s1 + $0xad8] sm:$0xff]
        %v1079 = vld [vmem:[%s1 + $0xae0] sm:$0xff]
        %v1080 = vld [vmem:[%s1 + $0xae8] sm:$0xff]
        %v1081 = vld [vmem:[%s1 + $0xaf0] sm:$0xff]
        %v1082 = vld [vmem:[%s1 + $0xaf8] sm:$0xff]
        %v1083 = vld [vmem:[%s1 + $0xb00] sm:$0xff]
        %v1084 = vld [vmem:[%s1 + $0xb08] sm:$0xff]
        %v1085 = vld [vmem:[%s1 + $0xb10] sm:$0xff]
        %v1086 = vld [vmem:[%s1 + $0xb18] sm:$0xff]
        %v1087 = vld [vmem:[%s1 + $0xb20] sm:$0xff]
        %v1088 = vld [vmem:[%s1 + $0xb28] sm:$0xff]
        %v1089 = vld [vmem:[%s1 + $0xb30] sm:$0xff]
        %v1090 = vld [vmem:[%s1 + $0xb38] sm:$0xff]
        %v1091 = vld [vmem:[%s1 + $0xb40] sm:$0xff]
        %v1092 = vld [vmem:[%s1 + $0xb48] sm:$0xff]
        %v1093 = vld [vmem:[%s1 + $0xb50] sm:$0xff]
        %v1094 = vld [vmem:[%s1 + $0xb58] sm:$0xff]
        %v1095 = vld [vmem:[%s1 + $0xb60] sm:$0xff]
        %v1096 = vld [vmem:[%s1 + $0xb68] sm:$0xff]
        %v1097 = vld [vmem:[%s1 + $0xb70] sm:$0xff]
        %v1098 = vld [vmem:[%s1 + $0xb78] sm:$0xff]
        %v1099 = vld [vmem:[%s1 + $0xb80] sm:$0xff]
        %v1100 = vld [vmem:[%s1 + $0xb88] sm:$0xff]
        %v1101 = vld [vmem:[%s1 + $0xb90] sm:$0xff]
        %v1102 = vld [vmem:[%s1 + $0xb98] sm:$0xff]
        %v1103 = vld [vmem:[%s1 + $0xba0] sm:$0xff]
        %v1104 = vld [vmem:[%s1 + $0xba8] sm:$0xff]
        %v1105 = vld [vmem:[%s1 + $0xbb0] sm:$0xff]
        %v1106 = vld [vmem:[%s1 + $0xbb8] sm:$0xff]
        %v1107 = vld [vmem:[%s1 + $0xbc0] sm:$0xff]
        %v1108 = vld [vmem:[%s1 + $0xbc8] sm:$0xff]
        %v1109 = vld [vmem:[%s1 + $0xbd0] sm:$0xff]
        %v1110 = vld [vmem:[%s1 + $0xbd8] sm:$0xff]
        %v1111 = vld [vmem:[%s1 + $0xbe0] sm:$0xff]
        %v1112 = vld [vmem:[%s1 + $0xbe8] sm:$0xff]
        %v1113 = vld [vmem:[%s1 + $0xbf0] sm:$0xff]
        %v1114 = vld [vmem:[%s1 + $0xbf8] sm:$0xff]
        %v1115 = vld [vmem:[%s1 + $0xc00] sm:$0xff]
        %v1116 = vld [vmem:[%s1 + $0xc08] sm:$0xff]
        %v1117 = vld [vmem:[%s1 + $0xc10] sm:$0xff]
        %v1118 = vld [vmem:[%s1 + $0xc18] sm:$0xff]
        %v1119 = vld [vmem:[%s1 + $0xc20] sm:$0xff]
        %v1120 = vld [vmem:[%s1 + $0xc28] sm:$0xff]
        %v1121 = vld [vmem:[%s1 + $0xc30] sm:$0xff]
        %v1122 = vld [vmem:[%s1 + $0xc38] sm:$0xff]
        %v1123 = vld [vmem:[%s1 + $0xc40] sm:$0xff]
        %v1124 = vld [vmem:[%s1 + $0xc48] sm:$0xff]
        %v1125 = vld [vmem:[%s1 + $0xc50] sm:$0xff]
        %v1126 = vld [vmem:[%s1 + $0xc58] sm:$0xff]
        %v1127 = vld [vmem:[%s1 + $0xc60] sm:$0xff]
        %v1128 = vld [vmem:[%s1 + $0xc68] sm:$0xff]
        %v1129 = vld [vmem:[%s1 + $0xc70] sm:$0xff]
        %v1130 = vld [vmem:[%s1 + $0xc78] sm:$0xff]
        %v1131 = vld [vmem:[%s1 + $0xc80] sm:$0xff]
        %v1132 = vld [vmem:[%s1 + $0xc88] sm:$0xff]
        %v1133 = vld [vmem:[%s1 + $0xc90] sm:$0xff]
        %v1134 = vld [vmem:[%s1 + $0xc98] sm:$0xff]
        %v1135 = vld [vmem:[%s1 + $0xca0] sm:$0xff]
        %v1136 = vld [vmem:[%s1 + $0xca8] sm:$0xff]
        %v1137 = vld [vmem:[%s1 + $0xcb0] sm:$0xff]
        %v1138 = vld [vmem:[%s1 + $0xcb8] sm:$0xff]
        %v1139 = vld [vmem:[%s1 + $0xcc0] sm:$0xff]
        %v1140 = vld [vmem:[%s1 + $0xcc8] sm:$0xff]
        %v1141 = vld [vmem:[%s1 + $0xcd0] sm:$0xff]
        %v1142 = vld [vmem:[%s1 + $0xcd8] sm:$0xff]
        %v1143 = vld [vmem:[%s1 + $0xce0] sm:$0xff]
        %v1144 = vld [vmem:[%s1 + $0xce8] sm:$0xff]
        %v1145 = vld [vmem:[%s1 + $0xcf0] sm:$0xff]
        %v1146 = vld [vmem:[%s1 + $0xcf8] sm:$0xff]
        %v1147 = vld [vmem:[%s1 + $0xd00] sm:$0xff]
        %v1148 = vld [vmem:[%s1 + $0xd08] sm:$0xff]
        %v1149 = vld [vmem:[%s1 + $0xd10] sm:$0xff]
        %v1150 = vld [vmem:[%s1 + $0xd18] sm:$0xff]
        %v1151 = vld [vmem:[%s1 + $0xd20] sm:$0xff]
        %v1152 = vld [vmem:[%s1 + $0xd28] sm:$0xff]
        %v1153 = vld [vmem:[%s1 + $0xd30] sm:$0xff]
        %v1154 = vld [vmem:[%s1 + $0xd38] sm:$0xff]
        %v1155 = vld [vmem:[%s1 + $0xd40] sm:$0xff]
        %v1156 = vld [vmem:[%s1 + $0xd48] sm:$0xff]
        %v1157 = vld [vmem:[%s1 + $0xd50] sm:$0xff]
        %v1158 = vld [vmem:[%s1 + $0xd58] sm:$0xff]
        %v1159 = vld [vmem:[%s1 + $0xd60] sm:$0xff]
        %v1160 = vld [vmem:[%s1 + $0xd68] sm:$0xff]
        %v1161 = vld [vmem:[%s1 + $0xd70] sm:$0xff]
        %v1162 = vld [vmem:[%s1 + $0xd78] sm:$0xff]
        %v1163 = vld [vmem:[%s1 + $0xd80] sm:$0xff]
        %v1164 = vld [vmem:[%s1 + $0xd88] sm:$0xff]
        %v1165 = vld [vmem:[%s1 + $0xd90] sm:$0xff]
        %v1166 = vld [vmem:[%s1 + $0xd98] sm:$0xff]
        %v1167 = vld [vmem:[%s1 + $0xda0] sm:$0xff]
        %v1168 = vld [vmem:[%s1 + $0xda8] sm:$0xff]
        %v1169 = vld [vmem:[%s1 + $0xdb0] sm:$0xff]
        %v1170 = vld [vmem:[%s1 + $0xdb8] sm:$0xff]
        %v1171 = vld [vmem:[%s1 + $0xdc0] sm:$0xff]
        %v1172 = vld [vmem:[%s1 + $0xdc8] sm:$0xff]
        %v1173 = vld [vmem:[%s1 + $0xdd0] sm:$0xff]
        %v1174 = vld [vmem:[%s1 + $0xdd8] sm:$0xff]
        %v1175 = vld [vmem:[%s1 + $0xde0] sm:$0xff]
        %v1176 = vld [vmem:[%s1 + $0xde8] sm:$0xff]
        %v1177 = vld [vmem:[%s1 + $0xdf0] sm:$0xff]
        %v1178 = vld [vmem:[%s1 + $0xdf8] sm:$0xff]
        %v1179 = vld [vmem:[%s1 + $0xe00] sm:$0xff]
        %v1180 = vld [vmem:[%s1 + $0xe08] sm:$0xff]
        %v1181 = vld [vmem:[%s1 + $0xe10] sm:$0xff]
        %v1182 = vld [vmem:[%s1 + $0xe18] sm:$0xff]
        %v1183 = vld [vmem:[%s1 + $0xe20] sm:$0xff]
        %v1184 = vld [vmem:[%s1 + $0xe28] sm:$0xff]
        %v1185 = vld [vmem:[%s1 + $0xe30] sm:$0xff]
        %v1186 = vld [vmem:[%s1 + $0xe38] sm:$0xff]
        %v1187 = vld [vmem:[%s1 + $0xe40] sm:$0xff]
        %v1188 = vld [vmem:[%s1 + $0xe48] sm:$0xff]
        %v1189 = vld [vmem:[%s1 + $0xe50] sm:$0xff]
        %v1190 = vld [vmem:[%s1 + $0xe58] sm:$0xff]
        %v1191 = vld [vmem:[%s1 + $0xe60] sm:$0xff]
        %v1192 = vld [vmem:[%s1 + $0xe68] sm:$0xff]
        %v1193 = vld [vmem:[%s1 + $0xe70] sm:$0xff]
        %v1194 = vld [vmem:[%s1 + $0xe78] sm:$0xff]
        %v1195 = vld [vmem:[%s1 + $0xe80] sm:$0xff]
        %v1196 = vld [vmem:[%s1 + $0xe88] sm:$0xff]
        %v1197 = vld [vmem:[%s1 + $0xe90] sm:$0xff]
        %v1198 = vld [vmem:[%s1 + $0xe98] sm:$0xff]
        %v1199 = vld [vmem:[%s1 + $0xea0] sm:$0xff]
        %v1200 = vld [vmem:[%s1 + $0xea8] sm:$0xff]
        %v1201 = vld [vmem:[%s1 + $0xeb0] sm:$0xff]
        %v1202 = vld [vmem:[%s1 + $0xeb8] sm:$0xff]
        %v1203 = vld [vmem:[%s1 + $0xec0] sm:$0xff]
        %v1204 = vld [vmem:[%s1 + $0xec8] sm:$0xff]
        %v1205 = vld [vmem:[%s1 + $0xed0] sm:$0xff]
        %v1206 = vld [vmem:[%s1 + $0xed8] sm:$0xff]
        %v1207 = vld [vmem:[%s1 + $0xee0] sm:$0xff]
        %v1208 = vld [vmem:[%s1 + $0xee8] sm:$0xff]
        %v1209 = vld [vmem:[%s1 + $0xef0] sm:$0xff]
        %v1210 = vld [vmem:[%s1 + $0xef8] sm:$0xff]
        %v1211 = vld [vmem:[%s1 + $0xf00] sm:$0xff]
        %v1212 = vld [vmem:[%s1 + $0xf08] sm:$0xff]
        %v1213 = vld [vmem:[%s1 + $0xf10] sm:$0xff]
        %v1214 = vld [vmem:[%s1 + $0xf18] sm:$0xff]
        %v1215 = vld [vmem:[%s1 + $0xf20] sm:$0xff]
        %v1216 = vld [vmem:[%s1 + $0xf28] sm:$0xff]
        %v1217 = vld [vmem:[%s1 + $0xf30] sm:$0xff]
        %v1218 = vld [vmem:[%s1 + $0xf38] sm:$0xff]
        %v1219 = vld [vmem:[%s1 + $0xf40] sm:$0xff]
        %v1220 = vld [vmem:[%s1 + $0xf48] sm:$0xff]
        %v1221 = vld [vmem:[%s1 + $0xf50] sm:$0xff]
        %v1222 = vld [vmem:[%s1 + $0xf58] sm:$0xff]
        %v1223 = vld [vmem:[%s1 + $0xf60] sm:$0xff]
        %v1224 = vld [vmem:[%s1 + $0xf68] sm:$0xff]
        %v1225 = vld [vmem:[%s1 + $0xf70] sm:$0xff]
        %v1226 = vld [vmem:[%s1 + $0xf78] sm:$0xff]
        %v1227 = vld [vmem:[%s1 + $0xf80] sm:$0xff]
        %v1228 = vld [vmem:[%s1 + $0xf88] sm:$0xff]
        %v1229 = vld [vmem:[%s1 + $0xf90] sm:$0xff]
        %v1230 = vld [vmem:[%s1 + $0xf98] sm:$0xff]
        %v1231 = vld [vmem:[%s1 + $0xfa0] sm:$0xff]
        %v1232 = vld [vmem:[%s1 + $0xfa8] sm:$0xff]
        %v1233 = vld [vmem:[%s1 + $0xfb0] sm:$0xff]
        %v1234 = vld [vmem:[%s1 + $0xfb8] sm:$0xff]
        %v1235 = vld [vmem:[%s1 + $0xfc0] sm:$0xff]
        %v1236 = vld [vmem:[%s1 + $0xfc8] sm:$0xff]
        %v1237 = vld [vmem:[%s1 + $0xfd0] sm:$0xff]
        %v1238 = vld [vmem:[%s1 + $0xfd8] sm:$0xff]
        %v1239 = vld [vmem:[%s1 + $0xfe0] sm:$0xff]
        %v1240 = vld [vmem:[%s1 + $0xfe8] sm:$0xff]
        %v1241 = vld [vmem:[%s1 + $0xff0] sm:$0xff]
        %v1242 = vld [vmem:[%s1 + $0xff8] sm:$0xff]
        %v1243 = vld [vmem:[%s1 + $0x1000] sm:$0xff]
        %v1244 = vld [vmem:[%s1 + $0x1008] sm:$0xff]
        %v1245 = vld [vmem:[%s1 + $0x1010] sm:$0xff]
        %v1246 = vld [vmem:[%s1 + $0x1018] sm:$0xff]
        %v1247 = vld [vmem:[%s1 + $0x1020] sm:$0xff]
        %v1248 = vld [vmem:[%s1 + $0x1028] sm:$0xff]
        %v1249 = vld [vmem:[%s1 + $0x1030] sm:$0xff]
        %v1250 = vld [vmem:[%s1 + $0x1038] sm:$0xff]
        %v1251 = vld [vmem:[%s1 + $0x1040] sm:$0xff]
        %v1252 = vld [vmem:[%s1 + $0x1048] sm:$0xff]
        %v1253 = vld [vmem:[%s1 + $0x1050] sm:$0xff]
        %v1254 = vld [vmem:[%s1 + $0x1058] sm:$0xff]
        %v1255 = vld [vmem:[%s1 + $0x1060] sm:$0xff]
        %v1256 = vld [vmem:[%s1 + $0x1068] sm:$0xff]
        %v1257 = vld [vmem:[%s1 + $0x1070] sm:$0xff]
        %v1258 = vld [vmem:[%s1 + $0x1078] sm:$0xff]
        %v1259 = vld [vmem:[%s1 + $0x1080] sm:$0xff]
        %v1260 = vld [vmem:[%s1 + $0x1088] sm:$0xff]
        %v1261 = vld [vmem:[%s1 + $0x1090] sm:$0xff]
        %v1262 = vld [vmem:[%s1 + $0x1098] sm:$0xff]
        %v1263 = vld [vmem:[%s1 + $0x10a0] sm:$0xff]
        %v1264 = vld [vmem:[%s1 + $0x10a8] sm:$0xff]
        %v1265 = vld [vmem:[%s1 + $0x10b0] sm:$0xff]
        %v1266 = vld [vmem:[%s1 + $0x10b8] sm:$0xff]
        %v1267 = vld [vmem:[%s1 + $0x10c0] sm:$0xff]
        %v1268 = vld [vmem:[%s1 + $0x10c8] sm:$0xff]
        %v1269 = vld [vmem:[%s1 + $0x10d0] sm:$0xff]
        %v1270 = vld [vmem:[%s1 + $0x10d8] sm:$0xff]
        %v1271 = vld [vmem:[%s1 + $0x10e0] sm:$0xff]
        %v1272 = vld [vmem:[%s1 + $0x10e8] sm:$0xff]
        %v1273 = vld [vmem:[%s1 + $0x10f0] sm:$0xff]
        %v1274 = vld [vmem:[%s1 + $0x10f8] sm:$0xff]
        %v1275 = vld [vmem:[%s1 + $0x1100] sm:$0xff]
        %v1276 = vld [vmem:[%s1 + $0x1108] sm:$0xff]
        %v1277 = vld [vmem:[%s1 + $0x1110] sm:$0xff]
        %v1278 = vld [vmem:[%s1 + $0x1118] sm:$0xff]
        %v1279 = vld [vmem:[%s1 + $0x1120] sm:$0xff]
        %v1280 = vld [vmem:[%s1 + $0x1128] sm:$0xff]
        %v1281 = vld [vmem:[%s1 + $0x1130] sm:$0xff]
        %v1282 = vld [vmem:[%s1 + $0x1138] sm:$0xff]
        %v1283 = vld [vmem:[%s1 + $0x1140] sm:$0xff]
        %v1284 = vld [vmem:[%s1 + $0x1148] sm:$0xff]
        %v1285 = vld [vmem:[%s1 + $0x1150] sm:$0xff]
        %v1286 = vld [vmem:[%s1 + $0x1158] sm:$0xff]
        %v1287 = vld [vmem:[%s1 + $0x1160] sm:$0xff]
        %v1288 = vld [vmem:[%s1 + $0x1168] sm:$0xff]
        %v1289 = vld [vmem:[%s1 + $0x1170] sm:$0xff]
        %v1290 = vld [vmem:[%s1 + $0x1178] sm:$0xff]
        %v1291 = vld [vmem:[%s1 + $0x1180] sm:$0xff]
        %v1292 = vld [vmem:[%s1 + $0x1188] sm:$0xff]
        %v1293 = vld [vmem:[%s1 + $0x1190] sm:$0xff]
        %v1294 = vld [vmem:[%s1 + $0x1198] sm:$0xff]
        %v1295 = vld [vmem:[%s1 + $0x11a0] sm:$0xff]
        %v1296 = vld [vmem:[%s1 + $0x11a8] sm:$0xff]
        %v1297 = vld [vmem:[%s1 + $0x11b0] sm:$0xff]
        %v1298 = vld [vmem:[%s1 + $0x11b8] sm:$0xff]
        %v1299 = vld [vmem:[%s1 + $0x11c0] sm:$0xff]
        %v1300 = vld [vmem:[%s1 + $0x11c8] sm:$0xff]
        %v1301 = vld [vmem:[%s1 + $0x11d0] sm:$0xff]
        %v1302 = vld [vmem:[%s1 + $0x11d8] sm:$0xff]
        %v1303 = vld [vmem:[%s1 + $0x11e0] sm:$0xff]
        %v1304 = vld [vmem:[%s1 + $0x11e8] sm:$0xff]
        %v1305 = vld [vmem:[%s1 + $0x11f0] sm:$0xff]
        %v1306 = vld [vmem:[%s1 + $0x11f8] sm:$0xff]
        %v1307 = vld [vmem:[%s1 + $0x1200] sm:$0xff]
        %v1308 = vld [vmem:[%s1 + $0x1208] sm:$0xff]
        %v1309 = vld [vmem:[%s1 + $0x1210] sm:$0xff]
        %v1310 = vld [vmem:[%s1 + $0x1218] sm:$0xff]
        %v1311 = vld [vmem:[%s1 + $0x1220] sm:$0xff]
        %v1312 = vld [vmem:[%s1 + $0x1228] sm:$0xff]
        %v1313 = vld [vmem:[%s1 + $0x1230] sm:$0xff]
        %v1314 = vld [vmem:[%s1 + $0x1238] sm:$0xff]
        %v1315 = vld [vmem:[%s1 + $0x1240] sm:$0xff]
        %v1316 = vld [vmem:[%s1 + $0x1248] sm:$0xff]
        %v1317 = vld [vmem:[%s1 + $0x1250] sm:$0xff]
        %v1318 = vld [vmem:[%s1 + $0x1258] sm:$0xff]
        %v1319 = vld [vmem:[%s1 + $0x1260] sm:$0xff]
        %v1320 = vld [vmem:[%s1 + $0x1268] sm:$0xff]
        %v1321 = vld [vmem:[%s1 + $0x1270] sm:$0xff]
        %v1322 = vld [vmem:[%s1 + $0x1278] sm:$0xff]
        %v1323 = vld [vmem:[%s1 + $0x1280] sm:$0xff]
        %v1324 = vld [vmem:[%s1 + $0x1288] sm:$0xff]
        %v1325 = vld [vmem:[%s1 + $0x1290] sm:$0xff]
        %v1326 = vld [vmem:[%s1 + $0x1298] sm:$0xff]
        %v1327 = vld [vmem:[%s1 + $0x12a0] sm:$0xff]
        %v1328 = vld [vmem:[%s1 + $0x12a8] sm:$0xff]
        %v1329 = vld [vmem:[%s1 + $0x12b0] sm:$0xff]
        %v1330 = vld [vmem:[%s1 + $0x12b8] sm:$0xff]
        %v1331 = vld [vmem:[%s1 + $0x12c0] sm:$0xff]
        %v1332 = vld [vmem:[%s1 + $0x12c8] sm:$0xff]
        %v1333 = vld [vmem:[%s1 + $0x12d0] sm:$0xff]
        %v1334 = vld [vmem:[%s1 + $0x12d8] sm:$0xff]
        %v1335 = vld [vmem:[%s1 + $0x12e0] sm:$0xff]
        %v1336 = vld [vmem:[%s1 + $0x12e8] sm:$0xff]
        %v1337 = vld [vmem:[%s1 + $0x12f0] sm:$0xff]
        %v1338 = vld [vmem:[%s1 + $0x12f8] sm:$0xff]
        %v1339 = vld [vmem:[%s1 + $0x1300] sm:$0xff]
        %v1340 = vld [vmem:[%s1 + $0x1308] sm:$0xff]
        %v1341 = vld [vmem:[%s1 + $0x1310] sm:$0xff]
        %v1342 = vld [vmem:[%s1 + $0x1318] sm:$0xff]
        %v1343 = vld [vmem:[%s1 + $0x1320] sm:$0xff]
        %v1344 = vld [vmem:[%s1 + $0x1328] sm:$0xff]
        %v1345 = vld [vmem:[%s1 + $0x1330] sm:$0xff]
        %v1346 = vld [vmem:[%s1 + $0x1338] sm:$0xff]
        %v1347 = vld [vmem:[%s1 + $0x1340] sm:$0xff]
        %v1348 = vld [vmem:[%s1 + $0x1348] sm:$0xff]
        %v1349 = vld [vmem:[%s1 + $0x1350] sm:$0xff]
        %v1350 = vld [vmem:[%s1 + $0x1358] sm:$0xff]
        %v1351 = vld [vmem:[%s1 + $0x1360] sm:$0xff]
        %v1352 = vld [vmem:[%s1 + $0x1368] sm:$0xff]
        %v1353 = vld [vmem:[%s1 + $0x1370] sm:$0xff]
        %v1354 = vld [vmem:[%s1 + $0x1378] sm:$0xff]
        %v1355 = vld [vmem:[%s1 + $0x1380] sm:$0xff]
        %v1356 = vld [vmem:[%s1 + $0x1388] sm:$0xff]
        %v1357 = vld [vmem:[%s1 + $0x1390] sm:$0xff]
        %v1358 = vld [vmem:[%s1 + $0x1398] sm:$0xff]
        %v1359 = vld [vmem:[%s1 + $0x13a0] sm:$0xff]
        %v1360 = vld [vmem:[%s1 + $0x13a8] sm:$0xff]
        %v1361 = vld [vmem:[%s1 + $0x13b0] sm:$0xff]
        %v1362 = vld [vmem:[%s1 + $0x13b8] sm:$0xff]
        %v1363 = vld [vmem:[%s1 + $0x13c0] sm:$0xff]
        %v1364 = vld [vmem:[%s1 + $0x13c8] sm:$0xff]
        %v1365 = vld [vmem:[%s1 + $0x13d0] sm:$0xff]
        %v1366 = vld [vmem:[%s1 + $0x13d8] sm:$0xff]
        %v1367 = vld [vmem:[%s1 + $0x13e0] sm:$0xff]
        %v1368 = vld [vmem:[%s1 + $0x13e8] sm:$0xff]
        %v1369 = vld [vmem:[%s1 + $0x13f0] sm:$0xff]
        %v1370 = vld [vmem:[%s1 + $0x13f8] sm:$0xff]
        %v1371 = vld [vmem:[%s1 + $0x1400] sm:$0xff]
        %v1372 = vld [vmem:[%s1 + $0x1408] sm:$0xff]
        %v1373 = vld [vmem:[%s1 + $0x1410] sm:$0xff]
        %v1374 = vld [vmem:[%s1 + $0x1418] sm:$0xff]
        %v1375 = vld [vmem:[%s1 + $0x1420] sm:$0xff]
        %v1376 = vld [vmem:[%s1 + $0x1428] sm:$0xff]
        %v1377 = vld [vmem:[%s1 + $0x1430] sm:$0xff]
        %v1378 = vld [vmem:[%s1 + $0x1438] sm:$0xff]
        %v1379 = vld [vmem:[%s1 + $0x1440] sm:$0xff]
        %v1380 = vld [vmem:[%s1 + $0x1448] sm:$0xff]
        %v1381 = vld [vmem:[%s1 + $0x1450] sm:$0xff]
        %v1382 = vld [vmem:[%s1 + $0x1458] sm:$0xff]
        %v1383 = vld [vmem:[%s1 + $0x1460] sm:$0xff]
        %v1384 = vld [vmem:[%s1 + $0x1468] sm:$0xff]
        %v1385 = vld [vmem:[%s1 + $0x1470] sm:$0xff]
        %v1386 = vld [vmem:[%s1 + $0x1478] sm:$0xff]
        %v1387 = vld [vmem:[%s1 + $0x1480] sm:$0xff]
        %v1388 = vld [vmem:[%s1 + $0x1488] sm:$0xff]
        %v1389 = vld [vmem:[%s1 + $0x1490] sm:$0xff]
        %v1390 = vld [vmem:[%s1 + $0x1498] sm:$0xff]
        %v1391 = vld [vmem:[%s1 + $0x14a0] sm:$0xff]
        %v1392 = vld [vmem:[%s1 + $0x14a8] sm:$0xff]
        %v1393 = vld [vmem:[%s1 + $0x14b0] sm:$0xff]
        %v1394 = vld [vmem:[%s1 + $0x14b8] sm:$0xff]
        %v1395 = vld [vmem:[%s1 + $0x14c0] sm:$0xff]
        %v1396 = vld [vmem:[%s1 + $0x14c8] sm:$0xff]
        %v1397 = vld [vmem:[%s1 + $0x14d0] sm:$0xff]
        %v1398 = vld [vmem:[%s1 + $0x14d8] sm:$0xff]
        %v1399 = vld [vmem:[%s1 + $0x14e0] sm:$0xff]
        %v1400 = vld [vmem:[%s1 + $0x14e8] sm:$0xff]
        %v1401 = vld [vmem:[%s1 + $0x14f0] sm:$0xff]
        %v1402 = vld [vmem:[%s1 + $0x14f8] sm:$0xff]
        %v1403 = vld [vmem:[%s1 + $0x1500] sm:$0xff]
        %v1404 = vld [vmem:[%s1 + $0x1508] sm:$0xff]
        %v1405 = vld [vmem:[%s1 + $0x1510] sm:$0xff]
        %v1406 = vld [vmem:[%s1 + $0x1518] sm:$0xff]
        %v1407 = vld [vmem:[%s1 + $0x1520] sm:$0xff]
        %v1408 = vld [vmem:[%s1 + $0x1528] sm:$0xff]
        %v1409 = vld [vmem:[%s1 + $0x1530] sm:$0xff]
        %v1410 = vld [vmem:[%s1 + $0x1538] sm:$0xff]
        %v1411 = vld [vmem:[%s1 + $0x1540] sm:$0xff]
        %v1412 = vld [vmem:[%s1 + $0x1548] sm:$0xff]
        %v1413 = vld [vmem:[%s1 + $0x1550] sm:$0xff]
        %v1414 = vld [vmem:[%s1 + $0x1558] sm:$0xff]
        %v1415 = vld [vmem:[%s1 + $0x1560] sm:$0xff]
        %v1416 = vld [vmem:[%s1 + $0x1568] sm:$0xff]
        %v1417 = vld [vmem:[%s1 + $0x1570] sm:$0xff]
        %v1418 = vld [vmem:[%s1 + $0x1578] sm:$0xff]
        %v1419 = vld [vmem:[%s1 + $0x1580] sm:$0xff]
        %v1420 = vld [vmem:[%s1 + $0x1588] sm:$0xff]
        %v1421 = vld [vmem:[%s1 + $0x1590] sm:$0xff]
        %v1422 = vld [vmem:[%s1 + $0x1598] sm:$0xff]
        %v1423 = vld [vmem:[%s1 + $0x15a0] sm:$0xff]
        %v1424 = vld [vmem:[%s1 + $0x15a8] sm:$0xff]
        %v1425 = vld [vmem:[%s1 + $0x15b0] sm:$0xff]
        %v1426 = vld [vmem:[%s1 + $0x15b8] sm:$0xff]
        %v1427 = vld [vmem:[%s1 + $0x15c0] sm:$0xff]
        %v1428 = vld [vmem:[%s1 + $0x15c8] sm:$0xff]
        %v1429 = vld [vmem:[%s1 + $0x15d0] sm:$0xff]
        %v1430 = vld [vmem:[%s1 + $0x15d8] sm:$0xff]
        %v1431 = vld [vmem:[%s1 + $0x15e0] sm:$0xff]
        %v1432 = vld [vmem:[%s1 + $0x15e8] sm:$0xff]
        %v1433 = vld [vmem:[%s1 + $0x15f0] sm:$0xff]
        %v1434 = vld [vmem:[%s1 + $0x15f8] sm:$0xff]
        %v1435 = vld [vmem:[%s1 + $0x1600] sm:$0xff]
        %v1436 = vld [vmem:[%s1 + $0x1608] sm:$0xff]
        %v1437 = vld [vmem:[%s1 + $0x1610] sm:$0xff]
        %v1438 = vld [vmem:[%s1 + $0x1618] sm:$0xff]
        %v1439 = vld [vmem:[%s1 + $0x1620] sm:$0xff]
        %v1440 = vld [vmem:[%s1 + $0x1628] sm:$0xff]
        %v1441 = vld [vmem:[%s1 + $0x1630] sm:$0xff]
        %v1442 = vld [vmem:[%s1 + $0x1638] sm:$0xff]
        %v1443 = vld [vmem:[%s1 + $0x1640] sm:$0xff]
        %v1444 = vld [vmem:[%s1 + $0x1648] sm:$0xff]
        %v1445 = vld [vmem:[%s1 + $0x1650] sm:$0xff]
        %v1446 = vld [vmem:[%s1 + $0x1658] sm:$0xff]
        %v1447 = vld [vmem:[%s1 + $0x1660] sm:$0xff]
        %v1448 = vld [vmem:[%s1 + $0x1668] sm:$0xff]
        %v1449 = vld [vmem:[%s1 + $0x1670] sm:$0xff]
        %v1450 = vld [vmem:[%s1 + $0x1678] sm:$0xff]
        %v1451 = vld [vmem:[%s1 + $0x1680] sm:$0xff]
        %v1452 = vld [vmem:[%s1 + $0x1688] sm:$0xff]
        %v1453 = vld [vmem:[%s1 + $0x1690] sm:$0xff]
        %v1454 = vld [vmem:[%s1 + $0x1698] sm:$0xff]
        %v1455 = vld [vmem:[%s1 + $0x16a0] sm:$0xff]
        %v1456 = vld [vmem:[%s1 + $0x16a8] sm:$0xff]
        %v1457 = vld [vmem:[%s1 + $0x16b0] sm:$0xff]
        %v1458 = vld [vmem:[%s1 + $0x16b8] sm:$0xff]
        %v1459 = vld [vmem:[%s1 + $0x16c0] sm:$0xff]
        %v1460 = vld [vmem:[%s1 + $0x16c8] sm:$0xff]
        %v1461 = vld [vmem:[%s1 + $0x16d0] sm:$0xff]
        %v1462 = vld [vmem:[%s1 + $0x16d8] sm:$0xff]
        %v1463 = vld [vmem:[%s1 + $0x16e0] sm:$0xff]
        %v1464 = vld [vmem:[%s1 + $0x16e8] sm:$0xff]
        %v1465 = vld [vmem:[%s1 + $0x16f0] sm:$0xff]
        %v1466 = vld [vmem:[%s1 + $0x16f8] sm:$0xff]
        %v1467 = vld [vmem:[%s1 + $0x1700] sm:$0xff]
        %v1468 = vld [vmem:[%s1 + $0x1708] sm:$0xff]
        %v1469 = vld [vmem:[%s1 + $0x1710] sm:$0xff]
        %v1470 = vld [vmem:[%s1 + $0x1718] sm:$0xff]
        %v1471 = vld [vmem:[%s1 + $0x1720] sm:$0xff]
        %v1472 = vld [vmem:[%s1 + $0x1728] sm:$0xff]
        %v1473 = vld [vmem:[%s1 + $0x1730] sm:$0xff]
        %v1474 = vld [vmem:[%s1 + $0x1738] sm:$0xff]
        %v1475 = vld [vmem:[%s1 + $0x1740] sm:$0xff]
        %v1476 = vld [vmem:[%s1 + $0x1748] sm:$0xff]
        %v1477 = vld [vmem:[%s1 + $0x1750] sm:$0xff]
        %v1478 = vld [vmem:[%s1 + $0x1758] sm:$0xff]
        %v1479 = vld [vmem:[%s1 + $0x1760] sm:$0xff]
        %v1480 = vld [vmem:[%s1 + $0x1768] sm:$0xff]
        %v1481 = vld [vmem:[%s1 + $0x1770] sm:$0xff]
        %v1482 = vld [vmem:[%s1 + $0x1778] sm:$0xff]
        %v1483 = vld [vmem:[%s1 + $0x1780] sm:$0xff]
        %v1484 = vld [vmem:[%s1 + $0x1788] sm:$0xff]
        %v1485 = vld [vmem:[%s1 + $0x1790] sm:$0xff]
        %v1486 = vld [vmem:[%s1 + $0x1798] sm:$0xff]
        %v1487 = vld [vmem:[%s1 + $0x17a0] sm:$0xff]
        %v1488 = vld [vmem:[%s1 + $0x17a8] sm:$0xff]
        %v1489 = vld [vmem:[%s1 + $0x17b0] sm:$0xff]
        %v1490 = vld [vmem:[%s1 + $0x17b8] sm:$0xff]
        %v1491 = vld [vmem:[%s1 + $0x17c0] sm:$0xff]
        %v1492 = vld [vmem:[%s1 + $0x17c8] sm:$0xff]
        %v1493 = vld [vmem:[%s1 + $0x17d0] sm:$0xff]
        %v1494 = vld [vmem:[%s1 + $0x17d8] sm:$0xff]
        %v1495 = vld [vmem:[%s1 + $0x17e0] sm:$0xff]
        %v1496 = vld [vmem:[%s1 + $0x17e8] sm:$0xff]
        %v1497 = vld [vmem:[%s1 + $0x17f0] sm:$0xff]
        %v1498 = vld [vmem:[%s1 + $0x17f8] sm:$0xff]
        %v1499 = vld [vmem:[%s1 + $0x1800] sm:$0xff]
        %v1500 = vld [vmem:[%s1 + $0x1808] sm:$0xff]
        %v1501 = vld [vmem:[%s1 + $0x1810] sm:$0xff]
        %v1502 = vld [vmem:[%s1 + $0x1818] sm:$0xff]
        %v1503 = vld [vmem:[%s1 + $0x1820] sm:$0xff]
        %v1504 = vld [vmem:[%s1 + $0x1828] sm:$0xff]
        %v1505 = vld [vmem:[%s1 + $0x1830] sm:$0xff]
        %v1506 = vld [vmem:[%s1 + $0x1838] sm:$0xff]
        %v1507 = vld [vmem:[%s1 + $0x1840] sm:$0xff]
        %v1508 = vld [vmem:[%s1 + $0x1848] sm:$0xff]
        %v1509 = vld [vmem:[%s1 + $0x1850] sm:$0xff]
        %v1510 = vld [vmem:[%s1 + $0x1858] sm:$0xff]
        %v1511 = vld [vmem:[%s1 + $0x1860] sm:$0xff]
        %v1512 = vld [vmem:[%s1 + $0x1868] sm:$0xff]
        %v1513 = vld [vmem:[%s1 + $0x1870] sm:$0xff]
        %v1514 = vld [vmem:[%s1 + $0x1878] sm:$0xff]
        %v1515 = vld [vmem:[%s1 + $0x1880] sm:$0xff]
        %v1516 = vld [vmem:[%s1 + $0x1888] sm:$0xff]
        %v1517 = vld [vmem:[%s1 + $0x1890] sm:$0xff]
        %v1518 = vld [vmem:[%s1 + $0x1898] sm:$0xff]
        %v1519 = vld [vmem:[%s1 + $0x18a0] sm:$0xff]
        %v1520 = vld [vmem:[%s1 + $0x18a8] sm:$0xff]
        %v1521 = vld [vmem:[%s1 + $0x18b0] sm:$0xff]
        %v1522 = vld [vmem:[%s1 + $0x18b8] sm:$0xff]
        %v1523 = vld [vmem:[%s1 + $0x18c0] sm:$0xff]
        %v1524 = vld [vmem:[%s1 + $0x18c8] sm:$0xff]
        %v1525 = vld [vmem:[%s1 + $0x18d0] sm:$0xff]
        %v1526 = vld [vmem:[%s1 + $0x18d8] sm:$0xff]
        %v1527 = vld [vmem:[%s1 + $0x18e0] sm:$0xff]
        %v1528 = vld [vmem:[%s1 + $0x18e8] sm:$0xff]
        %v1529 = vld [vmem:[%s1 + $0x18f0] sm:$0xff]
        %v1530 = vld [vmem:[%s1 + $0x18f8] sm:$0xff]
        %v1531 = vld [vmem:[%s1 + $0x1900] sm:$0xff]
        %v1532 = vld [vmem:[%s1 + $0x1908] sm:$0xff]
        %v1533 = vld [vmem:[%s1 + $0x1910] sm:$0xff]
        %v1534 = vld [vmem:[%s1 + $0x1918] sm:$0xff]
        %v1535 = vld [vmem:[%s1 + $0x1920] sm:$0xff]
        %v1536 = vld [vmem:[%s1 + $0x1928] sm:$0xff]
        %v1537 = vld [vmem:[%s1 + $0x1930] sm:$0xff]
        %v1538 = vld [vmem:[%s1 + $0x1938] sm:$0xff]
        %v1539 = vld [vmem:[%s1 + $0x1940] sm:$0xff]
        %v1540 = vld [vmem:[%s1 + $0x1948] sm:$0xff]
        %v1541 = vld [vmem:[%s1 + $0x1950] sm:$0xff]
        %v1542 = vld [vmem:[%s1 + $0x1958] sm:$0xff]
        %v1543 = vld [vmem:[%s1 + $0x1960] sm:$0xff]
        %v1544 = vld [vmem:[%s1 + $0x1968] sm:$0xff]
        %v1545 = vld [vmem:[%s1 + $0x1970] sm:$0xff]
        %v1546 = vld [vmem:[%s1 + $0x1978] sm:$0xff]
        %v1547 = vld [vmem:[%s1 + $0x1980] sm:$0xff]
        %v1548 = vld [vmem:[%s1 + $0x1988] sm:$0xff]
        %v1549 = vld [vmem:[%s1 + $0x1990] sm:$0xff]
        %v1550 = vld [vmem:[%s1 + $0x1998] sm:$0xff]
        %v1551 = vld [vmem:[%s1 + $0x19a0] sm:$0xff]
        %v1552 = vld [vmem:[%s1 + $0x19a8] sm:$0xff]
        %v1553 = vld [vmem:[%s1 + $0x19b0] sm:$0xff]
        %v1554 = vld [vmem:[%s1 + $0x19b8] sm:$0xff]
        %v1555 = vld [vmem:[%s1 + $0x19c0] sm:$0xff]
        %v1556 = vld [vmem:[%s1 + $0x19c8] sm:$0xff]
        %v1557 = vld [vmem:[%s1 + $0x19d0] sm:$0xff]
        %v1558 = vld [vmem:[%s1 + $0x19d8] sm:$0xff]
        %v1559 = vld [vmem:[%s1 + $0x19e0] sm:$0xff]
        %v1560 = vld [vmem:[%s1 + $0x19e8] sm:$0xff]
        %v1561 = vld [vmem:[%s1 + $0x19f0] sm:$0xff]
        %v1562 = vld [vmem:[%s1 + $0x19f8] sm:$0xff]
        %v1563 = vld [vmem:[%s1 + $0x1a00] sm:$0xff]
        %v1564 = vld [vmem:[%s1 + $0x1a08] sm:$0xff]
        %v1565 = vld [vmem:[%s1 + $0x1a10] sm:$0xff]
        %v1566 = vld [vmem:[%s1 + $0x1a18] sm:$0xff]
        %v1567 = vld [vmem:[%s1 + $0x1a20] sm:$0xff]
        %v1568 = vld [vmem:[%s1 + $0x1a28] sm:$0xff]
        %v1569 = vld [vmem:[%s1 + $0x1a30] sm:$0xff]
        %v1570 = vld [vmem:[%s1 + $0x1a38] sm:$0xff]
        %v1571 = vld [vmem:[%s1 + $0x1a40] sm:$0xff]
        %v1572 = vld [vmem:[%s1 + $0x1a48] sm:$0xff]
        %v1573 = vld [vmem:[%s1 + $0x1a50] sm:$0xff]
        %v1574 = vld [vmem:[%s1 + $0x1a58] sm:$0xff]
        %v1575 = vld [vmem:[%s1 + $0x1a60] sm:$0xff]
        %v1576 = vld [vmem:[%s1 + $0x1a68] sm:$0xff]
        %v1577 = vld [vmem:[%s1 + $0x1a70] sm:$0xff]
        %v1578 = vld [vmem:[%s1 + $0x1a78] sm:$0xff]
        %v1579 = vld [vmem:[%s1 + $0x1a80] sm:$0xff]
        %v1580 = vld [vmem:[%s1 + $0x1a88] sm:$0xff]
        %v1581 = vld [vmem:[%s1 + $0x1a90] sm:$0xff]
        %v1582 = vld [vmem:[%s1 + $0x1a98] sm:$0xff]
        %v1583 = vld [vmem:[%s1 + $0x1aa0] sm:$0xff]
        %v1584 = vld [vmem:[%s1 + $0x1aa8] sm:$0xff]
        %v1585 = vld [vmem:[%s1 + $0x1ab0] sm:$0xff]
        %v1586 = vld [vmem:[%s1 + $0x1ab8] sm:$0xff]
        %v1587 = vld [vmem:[%s1 + $0x1ac0] sm:$0xff]
        %v1588 = vld [vmem:[%s1 + $0x1ac8] sm:$0xff]
        %v1589 = vld [vmem:[%s1 + $0x1ad0] sm:$0xff]
        %v1590 = vld [vmem:[%s1 + $0x1ad8] sm:$0xff]
        %v1591 = vld [vmem:[%s1 + $0x1ae0] sm:$0xff]
        %v1592 = vld [vmem:[%s1 + $0x1ae8] sm:$0xff]
        %v1593 = vld [vmem:[%s1 + $0x1af0] sm:$0xff]
        %v1594 = vld [vmem:[%s1 + $0x1af8] sm:$0xff]
        %vm1595 = vcmask 523264
        %v1597 = vsel %vm1595, %v366, 0
        %v1600 = vsel %vm1595, %v380, 0
        %v1603 = vsel %vm1595, %v394, 0
        %v1606 = vsel %vm1595, %v408, 0
        %v1609 = vsel %vm1595, %v422, 0
        %v1612 = vsel %vm1595, %v436, 0
        %v1615 = vsel %vm1595, %v450, 0
        %v1618 = vsel %vm1595, %v464, 0
        %v1621 = vsel %vm1595, %v478, 0
        %v1624 = vsel %vm1595, %v492, 0
        %v1627 = vsel %vm1595, %v506, 0
        %v1630 = vsel %vm1595, %v520, 0
        %v1633 = vsel %vm1595, %v534, 0
        %v1636 = vsel %vm1595, %v548, 0
        %v1639 = vsel %vm1595, %v562, 0
        %v1642 = vsel %vm1595, %v576, 0
        %v1645 = vsel %vm1595, %v590, 0
        %v1648 = vsel %vm1595, %v604, 0
        %v1651 = vsel %vm1595, %v618, 0
        %v1654 = vsel %vm1595, %v632, 0
        %v1657 = vsel %vm1595, %v646, 0
        %v1660 = vsel %vm1595, %v660, 0
        %v1663 = vsel %vm1595, %v674, 0
        %v1666 = vsel %vm1595, %v688, 0
        %v1669 = vsel %vm1595, %v702, 0
        %v1672 = vsel %vm1595, %v716, 0
        %v1675 = vsel %vm1595, %v730, 0
        %1677 = vmatprep.subr.mxu0 %v732
        %1678 = vmatpush1.msra.mxu0 %v731
        %1679 = vmatprep.subr.mxu0 %v736
        %1680 = vmatpush1.msra.mxu0 %v735
        %1681 = vmatprep.subr.mxu0 %v740
        %1682 = vmatpush1.msra.mxu0 %v739
        %1683 = vmatprep.subr.mxu0 %v744
        %1684 = vmatpush1.msra.mxu0 %v743
        %1685 = vmatprep.subr.mxu0 %v748
        %1686 = vmatpush1.msra.mxu0 %v747
        %1687 = vmatprep.subr.mxu0 %v752
        %1688 = vmatpush1.msra.mxu0 %v751
        %1689 = vmatprep.subr.mxu0 %v756
        %1690 = vmatpush1.msra.mxu0 %v755
        %1691 = vmatprep.subr.mxu0 %v760
        %1692 = vmatpush1.msra.mxu0 %v759
        %1693 = vmatprep.subr.mxu0 %v764
        %1694 = vmatpush1.msra.mxu0 %v763
        %1695 = vmatprep.subr.mxu0 %v768
        %1696 = vmatpush1.msra.mxu0 %v767
        %1697 = vmatprep.subr.mxu0 %v772
        %1698 = vmatpush1.msra.mxu0 %v771
        %1699 = vmatprep.subr.mxu0 %v776
        %1700 = vmatpush1.msra.mxu0 %v775
        %1701 = vmatprep.subr.mxu0 %v780
        %1702 = vmatpush1.msra.mxu0 %v779
        %1703 = vmatprep.subr.mxu0 %v784
        %1704 = vmatpush1.msra.mxu0 %v783
        %1705 = vmatprep.subr.mxu0 %v788
        %1706 = vmatpush1.msra.mxu0 %v787
        %1707 = vmatprep.subr.mxu0 %v792
        %1708 = vmatpush1.msra.mxu0 %v791
        %1709 = vmatprep.subr.mxu0 %v796
        %1710 = vmatpush1.msra.mxu0 %v795
        %1711 = vmatprep.subr.mxu0 %v800
        %1712 = vmatpush1.msra.mxu0 %v799
        %1713 = vmatprep.subr.mxu0 %v804
        %1714 = vmatpush1.msra.mxu0 %v803
        %1715 = vmatprep.subr.mxu0 %v808
        %1716 = vmatpush1.msra.mxu0 %v807
        %1717 = vmatprep.subr.mxu0 %v812
        %1718 = vmatpush1.msra.mxu0 %v811
        %1719 = vmatprep.subr.mxu0 %v816
        %1720 = vmatpush1.msra.mxu0 %v815
        %1721 = vmatprep.subr.mxu0 %v820
        %1722 = vmatpush1.msra.mxu0 %v819
        %1723 = vmatprep.subr.mxu0 %v824
        %1724 = vmatpush1.msra.mxu0 %v823
        %1725 = vmatprep.subr.mxu0 %v828
        %1726 = vmatpush1.msra.mxu0 %v827
        %1727 = vmatprep.subr.mxu0 %v832
        %1728 = vmatpush1.msra.mxu0 %v831
        %1729 = vmatprep.subr.mxu0 %v836
        %1730 = vmatpush1.msra.mxu0 %v835
        %1731 = vmatprep.subr.mxu0 %v840
        %1732 = vmatpush1.msra.mxu0 %v839
        %1733 = vmatprep.subr.mxu0 %v844
        %1734 = vmatpush1.msra.mxu0 %v843
        %1735 = vmatprep.subr.mxu0 %v848
        %1736 = vmatpush1.msra.mxu0 %v847
        %1737 = vmatprep.subr.mxu0 %v852
        %1738 = vmatpush1.msra.mxu0 %v851
        %1739 = vmatprep.subr.mxu0 %v856
        %1740 = vmatpush1.msra.mxu0 %v855
        %1741 = vmatprep.mubr.f32.mxu0 %v354
        %1742 = vmatmul.mubr.f32.gmra.mrb[0].mxu0 %v353
        %v1743 = vpop.f32.mrb[0].mxu0
        %v1744 = vadd.f32 0.0, %v1743
        %v1745 = vpop.f32.mrb[0].mxu0
        %v1746 = vadd.f32 0.0, %v1745
        %1747 = vmatprep.mubr.f32.mxu0 %v368
        %1748 = vmatmul.mubr.f32.gmra.mrb[0].mxu0 %v367
        %v1749 = vpop.f32.mrb[0].mxu0
        %v1750 = vadd.f32 0.0, %v1749
        %v1751 = vpop.f32.mrb[0].mxu0
        %v1752 = vadd.f32 0.0, %v1751
        %1753 = vmatprep.mubr.f32.mxu0 %v382
        %1754 = vmatmul.mubr.f32.gmra.mrb[0].mxu0 %v381
        %v1755 = vpop.f32.mrb[0].mxu0
        %v1756 = vadd.f32 0.0, %v1755
        %v1757 = vpop.f32.mrb[0].mxu0
        %v1758 = vadd.f32 0.0, %v1757
        %1759 = vmatprep.mubr.f32.mxu0 %v396
        %1760 = vmatmul.mubr.f32.gmra.mrb[0].mxu0 %v395
        %v1761 = vpop.f32.mrb[0].mxu0
        %v1762 = vadd.f32 0.0, %v1761
        %v1763 = vpop.f32.mrb[0].mxu0
        %v1764 = vadd.f32 0.0, %v1763
        %1765 = vmatprep.mubr.f32.mxu0 %v410
        %1766 = vmatmul.mubr.f32.gmra.mrb[0].mxu0 %v409
        %v1767 = vpop.f32.mrb[0].mxu0
        %v1768 = vadd.f32 0.0, %v1767
        %v1769 = vpop.f32.mrb[0].mxu0
        %v1770 = vadd.f32 0.0, %v1769
        %1771 = vmatprep.mubr.f32.mxu0 %v424
        %1772 = vmatmul.mubr.f32.gmra.mrb[0].mxu0 %v423
        %v1773 = vpop.f32.mrb[0].mxu0
        %v1774 = vadd.f32 0.0, %v1773
        %v1775 = vpop.f32.mrb[0].mxu0
        %v1776 = vadd.f32 0.0, %v1775
        %1777 = vmatprep.mubr.f32.mxu0 %v438
        %1778 = vmatmul.mubr.f32.gmra.mrb[0].mxu0 %v437
        %v1779 = vpop.f32.mrb[0].mxu0
        %v1780 = vadd.f32 0.0, %v1779
        %v1781 = vpop.f32.mrb[0].mxu0
        %v1782 = vadd.f32 0.0, %v1781
        %1783 = vmatprep.mubr.f32.mxu0 %v452
        %1784 = vmatmul.mubr.f32.gmra.mrb[0].mxu0 %v451
        %v1785 = vpop.f32.mrb[0].mxu0
        %v1786 = vadd.f32 0.0, %v1785
        %v1787 = vpop.f32.mrb[0].mxu0
        %v1788 = vadd.f32 0.0, %v1787
        %1789 = vmatprep.mubr.f32.mxu0 %v466
        %1790 = vmatmul.mubr.f32.gmra.mrb[0].mxu0 %v465
        %v1791 = vpop.f32.mrb[0].mxu0
        %v1792 = vadd.f32 0.0, %v1791
        %v1793 = vpop.f32.mrb[0].mxu0
        %v1794 = vadd.f32 0.0, %v1793
        %1795 = vmatprep.mubr.f32.mxu0 %v480
        %1796 = vmatmul.mubr.f32.gmra.mrb[0].mxu0 %v479
        %v1797 = vpop.f32.mrb[0].mxu0
        %v1798 = vadd.f32 0.0, %v1797
        %v1799 = vpop.f32.mrb[0].mxu0
        %v1800 = vadd.f32 0.0, %v1799
        %1801 = vmatprep.mubr.f32.mxu0 %v494
        %1802 = vmatmul.mubr.f32.gmra.mrb[0].mxu0 %v493
        %v1803 = vpop.f32.mrb[0].mxu0
        %v1804 = vadd.f32 0.0, %v1803
        %v1805 = vpop.f32.mrb[0].mxu0
        %v1806 = vadd.f32 0.0, %v1805
        %1807 = vmatprep.mubr.f32.mxu0 %v508
        %1808 = vmatmul.mubr.f32.gmra.mrb[0].mxu0 %v507
        %v1809 = vpop.f32.mrb[0].mxu0
        %v1810 = vadd.f32 0.0, %v1809
        %v1811 = vpop.f32.mrb[0].mxu0
        %v1812 = vadd.f32 0.0, %v1811
        %1813 = vmatprep.mubr.f32.mxu0 %v522
        %1814 = vmatmul.mubr.f32.gmra.mrb[0].mxu0 %v521
        %v1815 = vpop.f32.mrb[0].mxu0
        %v1816 = vadd.f32 0.0, %v1815
        %v1817 = vpop.f32.mrb[0].mxu0
        %v1818 = vadd.f32 0.0, %v1817
        %1819 = vmatprep.mubr.f32.mxu0 %v536
        %1820 = vmatmul.mubr.f32.gmra.mrb[0].mxu0 %v535
        %v1821 = vpop.f32.mrb[0].mxu0
        %v1822 = vadd.f32 0.0, %v1821
        %v1823 = vpop.f32.mrb[0].mxu0
        %v1824 = vadd.f32 0.0, %v1823
        %1825 = vmatprep.mubr.f32.mxu0 %v550
        %1826 = vmatmul.mubr.f32.gmra.mrb[0].mxu0 %v549
        %v1827 = vpop.f32.mrb[0].mxu0
        %v1828 = vadd.f32 0.0, %v1827
        %v1829 = vpop.f32.mrb[0].mxu0
        %v1830 = vadd.f32 0.0, %v1829
        %1831 = vmatprep.mubr.f32.mxu0 %v564
        %1832 = vmatmul.mubr.f32.gmra.mrb[0].mxu0 %v563
        %v1833 = vpop.f32.mrb[0].mxu0
        %v1834 = vadd.f32 0.0, %v1833
        %v1835 = vpop.f32.mrb[0].mxu0
        %v1836 = vadd.f32 0.0, %v1835
        %1837 = vmatprep.mubr.f32.mxu0 %v578
        %1838 = vmatmul.mubr.f32.gmra.mrb[0].mxu0 %v577
        %v1839 = vpop.f32.mrb[0].mxu0
        %v1840 = vadd.f32 0.0, %v1839
        %v1841 = vpop.f32.mrb[0].mxu0
        %v1842 = vadd.f32 0.0, %v1841
        %1843 = vmatprep.mubr.f32.mxu0 %v592
        %1844 = vmatmul.mubr.f32.gmra.mrb[0].mxu0 %v591
        %v1845 = vpop.f32.mrb[0].mxu0
        %v1846 = vadd.f32 0.0, %v1845
        %v1847 = vpop.f32.mrb[0].mxu0
        %v1848 = vadd.f32 0.0, %v1847
        %1849 = vmatprep.mubr.f32.mxu0 %v606
        %1850 = vmatmul.mubr.f32.gmra.mrb[0].mxu0 %v605
        %v1851 = vpop.f32.mrb[0].mxu0
        %v1852 = vadd.f32 0.0, %v1851
        %v1853 = vpop.f32.mrb[0].mxu0
        %v1854 = vadd.f32 0.0, %v1853
        %1855 = vmatprep.mubr.f32.mxu0 %v620
        %1856 = vmatmul.mubr.f32.gmra.mrb[0].mxu0 %v619
        %v1857 = vpop.f32.mrb[0].mxu0
        %v1858 = vadd.f32 0.0, %v1857
        %v1859 = vpop.f32.mrb[0].mxu0
        %v1860 = vadd.f32 0.0, %v1859
        %1861 = vmatprep.mubr.f32.mxu0 %v634
        %1862 = vmatmul.mubr.f32.gmra.mrb[0].mxu0 %v633
        %v1863 = vpop.f32.mrb[0].mxu0
        %v1864 = vadd.f32 0.0, %v1863
        %v1865 = vpop.f32.mrb[0].mxu0
        %v1866 = vadd.f32 0.0, %v1865
        %1867 = vmatprep.mubr.f32.mxu0 %v648
        %1868 = vmatmul.mubr.f32.gmra.mrb[0].mxu0 %v647
        %v1869 = vpop.f32.mrb[0].mxu0
        %v1870 = vadd.f32 0.0, %v1869
        %v1871 = vpop.f32.mrb[0].mxu0
        %v1872 = vadd.f32 0.0, %v1871
        %1873 = vmatprep.mubr.f32.mxu0 %v662
        %1874 = vmatmul.mubr.f32.gmra.mrb[0].mxu0 %v661
        %v1875 = vpop.f32.mrb[0].mxu0
        %v1876 = vadd.f32 0.0, %v1875
        %v1877 = vpop.f32.mrb[0].mxu0
        %v1878 = vadd.f32 0.0, %v1877
        %1879 = vmatprep.mubr.f32.mxu0 %v676
        %1880 = vmatmul.mubr.f32.gmra.mrb[0].mxu0 %v675
        %v1881 = vpop.f32.mrb[0].mxu0
        %v1882 = vadd.f32 0.0, %v1881
        %v1883 = vpop.f32.mrb[0].mxu0
        %v1884 = vadd.f32 0.0, %v1883
        %1885 = vmatprep.mubr.f32.mxu0 %v690
        %1886 = vmatmul.mubr.f32.gmra.mrb[0].mxu0 %v689
        %v1887 = vpop.f32.mrb[0].mxu0
        %v1888 = vadd.f32 0.0, %v1887
        %v1889 = vpop.f32.mrb[0].mxu0
        %v1890 = vadd.f32 0.0, %v1889
        %1891 = vmatprep.mubr.f32.mxu0 %v704
        %1892 = vmatmul.mubr.f32.gmra.mrb[0].mxu0 %v703
        %v1893 = vpop.f32.mrb[0].mxu0
        %v1894 = vadd.f32 0.0, %v1893
        %v1895 = vpop.f32.mrb[0].mxu0
        %v1896 = vadd.f32 0.0, %v1895
        %1897 = vmatprep.mubr.f32.mxu0 %v718
        %1898 = vmatmul.mubr.f32.gmra.mrb[0].mxu0 %v717
        %v1899 = vpop.f32.mrb[0].mxu0
        %v1900 = vadd.f32 0.0, %v1899
        %v1901 = vpop.f32.mrb[0].mxu0
        %v1902 = vadd.f32 0.0, %v1901
        %1903 = vdwg.mxu0
        %1904 = vmatprep.subr.mxu0 %v860
        %1905 = vmatpush1.msra.mxu0 %v859
        %1906 = vmatprep.subr.mxu0 %v864
        %1907 = vmatpush1.msra.mxu0 %v863
        %1908 = vmatprep.subr.mxu0 %v868
        %1909 = vmatpush1.msra.mxu0 %v867
        %1910 = vmatprep.subr.mxu0 %v872
        %1911 = vmatpush1.msra.mxu0 %v871
        %1912 = vmatprep.subr.mxu0 %v876
        %1913 = vmatpush1.msra.mxu0 %v875
        %1914 = vmatprep.subr.mxu0 %v880
        %1915 = vmatpush1.msra.mxu0 %v879
        %1916 = vmatprep.subr.mxu0 %v884
        %1917 = vmatpush1.msra.mxu0 %v883
        %1918 = vmatprep.subr.mxu0 %v888
        %1919 = vmatpush1.msra.mxu0 %v887
        %1920 = vmatprep.subr.mxu0 %v892
        %1921 = vmatpush1.msra.mxu0 %v891
        %1922 = vmatprep.subr.mxu0 %v896
        %1923 = vmatpush1.msra.mxu0 %v895
        %1924 = vmatprep.subr.mxu0 %v900
        %1925 = vmatpush1.msra.mxu0 %v899
        %1926 = vmatprep.subr.mxu0 %v904
        %1927 = vmatpush1.msra.mxu0 %v903
        %1928 = vmatprep.subr.mxu0 %v908
        %1929 = vmatpush1.msra.mxu0 %v907
        %1930 = vmatprep.subr.mxu0 %v912
        %1931 = vmatpush1.msra.mxu0 %v911
        %1932 = vmatprep.subr.mxu0 %v916
        %1933 = vmatpush1.msra.mxu0 %v915
        %1934 = vmatprep.subr.mxu0 %v920
        %1935 = vmatpush1.msra.mxu0 %v919
        %1936 = vmatprep.subr.mxu0 %v924
        %1937 = vmatpush1.msra.mxu0 %v923
        %1938 = vmatprep.subr.mxu0 %v928
        %1939 = vmatpush1.msra.mxu0 %v927
        %1940 = vmatprep.subr.mxu0 %v932
        %1941 = vmatpush1.msra.mxu0 %v931
        %1942 = vmatprep.subr.mxu0 %v936
        %1943 = vmatpush1.msra.mxu0 %v935
        %1944 = vmatprep.subr.mxu0 %v940
        %1945 = vmatpush1.msra.mxu0 %v939
        %1946 = vmatprep.subr.mxu0 %v944
        %1947 = vmatpush1.msra.mxu0 %v943
        %1948 = vmatprep.subr.mxu0 %v948
        %1949 = vmatpush1.msra.mxu0 %v947
        %1950 = vmatprep.subr.mxu0 %v952
        %1951 = vmatpush1.msra.mxu0 %v951
        %1952 = vmatprep.subr.mxu0 %v956
        %1953 = vmatpush1.msra.mxu0 %v955
        %1954 = vmatprep.subr.mxu0 %v960
        %1955 = vmatpush1.msra.mxu0 %v959
        %1956 = vmatprep.subr.mxu0 %v964
        %1957 = vmatpush1.msra.mxu0 %v963
        %1958 = vmatprep.subr.mxu0 %v968
        %1959 = vmatpush1.msra.mxu0 %v967
        %1960 = vmatprep.subr.mxu0 %v972
        %1961 = vmatpush1.msra.mxu0 %v971
        %1962 = vmatprep.subr.mxu0 %v976
        %1963 = vmatpush1.msra.mxu0 %v975
        %1964 = vmatprep.subr.mxu0 %v980
        %1965 = vmatpush1.msra.mxu0 %v979
        %1966 = vmatprep.subr.mxu0 %v984
        %1967 = vmatpush1.msra.mxu0 %v983
        %1968 = vmatprep.mubr.f32.mxu0 %v356
        %1969 = vmatmul.mubr.f32.gmra.mrb[0].mxu0 %v355
        %v1970 = vpop.f32.mrb[0].mxu0
        %v1971 = vadd.f32 %v1744, %v1970
        %v1972 = vpop.f32.mrb[0].mxu0
        %v1973 = vadd.f32 %v1746, %v1972
        %1974 = vmatprep.mubr.f32.mxu0 %v370
        %1975 = vmatmul.mubr.f32.gmra.mrb[0].mxu0 %v369
        %v1976 = vpop.f32.mrb[0].mxu0
        %v1977 = vadd.f32 %v1750, %v1976
        %v1978 = vpop.f32.mrb[0].mxu0
        %v1979 = vadd.f32 %v1752, %v1978
        %1980 = vmatprep.mubr.f32.mxu0 %v384
        %1981 = vmatmul.mubr.f32.gmra.mrb[0].mxu0 %v383
        %v1982 = vpop.f32.mrb[0].mxu0
        %v1983 = vadd.f32 %v1756, %v1982
        %v1984 = vpop.f32.mrb[0].mxu0
        %v1985 = vadd.f32 %v1758, %v1984
        %1986 = vmatprep.mubr.f32.mxu0 %v398
        %1987 = vmatmul.mubr.f32.gmra.mrb[0].mxu0 %v397
        %v1988 = vpop.f32.mrb[0].mxu0
        %v1989 = vadd.f32 %v1762, %v1988
        %v1990 = vpop.f32.mrb[0].mxu0
        %v1991 = vadd.f32 %v1764, %v1990
        %1992 = vmatprep.mubr.f32.mxu0 %v412
        %1993 = vmatmul.mubr.f32.gmra.mrb[0].mxu0 %v411
        %v1994 = vpop.f32.mrb[0].mxu0
        %v1995 = vadd.f32 %v1768, %v1994
        %v1996 = vpop.f32.mrb[0].mxu0
        %v1997 = vadd.f32 %v1770, %v1996
        %1998 = vmatprep.mubr.f32.mxu0 %v426
        %1999 = vmatmul.mubr.f32.gmra.mrb[0].mxu0 %v425
        %v2000 = vpop.f32.mrb[0].mxu0
        %v2001 = vadd.f32 %v1774, %v2000
        %v2002 = vpop.f32.mrb[0].mxu0
        %v2003 = vadd.f32 %v1776, %v2002
        %2004 = vmatprep.mubr.f32.mxu0 %v440
        %2005 = vmatmul.mubr.f32.gmra.mrb[0].mxu0 %v439
        %v2006 = vpop.f32.mrb[0].mxu0
        %v2007 = vadd.f32 %v1780, %v2006
        %v2008 = vpop.f32.mrb[0].mxu0
        %v2009 = vadd.f32 %v1782, %v2008
        %2010 = vmatprep.mubr.f32.mxu0 %v454
        %2011 = vmatmul.mubr.f32.gmra.mrb[0].mxu0 %v453
        %v2012 = vpop.f32.mrb[0].mxu0
        %v2013 = vadd.f32 %v1786, %v2012
        %v2014 = vpop.f32.mrb[0].mxu0
        %v2015 = vadd.f32 %v1788, %v2014
        %2016 = vmatprep.mubr.f32.mxu0 %v468
        %2017 = vmatmul.mubr.f32.gmra.mrb[0].mxu0 %v467
        %v2018 = vpop.f32.mrb[0].mxu0
        %v2019 = vadd.f32 %v1792, %v2018
        %v2020 = vpop.f32.mrb[0].mxu0
        %v2021 = vadd.f32 %v1794, %v2020
        %2022 = vmatprep.mubr.f32.mxu0 %v482
        %2023 = vmatmul.mubr.f32.gmra.mrb[0].mxu0 %v481
        %v2024 = vpop.f32.mrb[0].mxu0
        %v2025 = vadd.f32 %v1798, %v2024
        %v2026 = vpop.f32.mrb[0].mxu0
        %v2027 = vadd.f32 %v1800, %v2026
        %2028 = vmatprep.mubr.f32.mxu0 %v496
        %2029 = vmatmul.mubr.f32.gmra.mrb[0].mxu0 %v495
        %v2030 = vpop.f32.mrb[0].mxu0
        %v2031 = vadd.f32 %v1804, %v2030
        %v2032 = vpop.f32.mrb[0].mxu0
        %v2033 = vadd.f32 %v1806, %v2032
        %2034 = vmatprep.mubr.f32.mxu0 %v510
        %2035 = vmatmul.mubr.f32.gmra.mrb[0].mxu0 %v509
        %v2036 = vpop.f32.mrb[0].mxu0
        %v2037 = vadd.f32 %v1810, %v2036
        %v2038 = vpop.f32.mrb[0].mxu0
        %v2039 = vadd.f32 %v1812, %v2038
        %2040 = vmatprep.mubr.f32.mxu0 %v524
        %2041 = vmatmul.mubr.f32.gmra.mrb[0].mxu0 %v523
        %v2042 = vpop.f32.mrb[0].mxu0
        %v2043 = vadd.f32 %v1816, %v2042
        %v2044 = vpop.f32.mrb[0].mxu0
        %v2045 = vadd.f32 %v1818, %v2044
        %2046 = vmatprep.mubr.f32.mxu0 %v538
        %2047 = vmatmul.mubr.f32.gmra.mrb[0].mxu0 %v537
        %v2048 = vpop.f32.mrb[0].mxu0
        %v2049 = vadd.f32 %v1822, %v2048
        %v2050 = vpop.f32.mrb[0].mxu0
        %v2051 = vadd.f32 %v1824, %v2050
        %2052 = vmatprep.mubr.f32.mxu0 %v552
        %2053 = vmatmul.mubr.f32.gmra.mrb[0].mxu0 %v551
        %v2054 = vpop.f32.mrb[0].mxu0
        %v2055 = vadd.f32 %v1828, %v2054
        %v2056 = vpop.f32.mrb[0].mxu0
        %v2057 = vadd.f32 %v1830, %v2056
        %2058 = vmatprep.mubr.f32.mxu0 %v566
        %2059 = vmatmul.mubr.f32.gmra.mrb[0].mxu0 %v565
        %v2060 = vpop.f32.mrb[0].mxu0
        %v2061 = vadd.f32 %v1834, %v2060
        %v2062 = vpop.f32.mrb[0].mxu0
        %v2063 = vadd.f32 %v1836, %v2062
        %2064 = vmatprep.mubr.f32.mxu0 %v580
        %2065 = vmatmul.mubr.f32.gmra.mrb[0].mxu0 %v579
        %v2066 = vpop.f32.mrb[0].mxu0
        %v2067 = vadd.f32 %v1840, %v2066
        %v2068 = vpop.f32.mrb[0].mxu0
        %v2069 = vadd.f32 %v1842, %v2068
        %2070 = vmatprep.mubr.f32.mxu0 %v594
        %2071 = vmatmul.mubr.f32.gmra.mrb[0].mxu0 %v593
        %v2072 = vpop.f32.mrb[0].mxu0
        %v2073 = vadd.f32 %v1846, %v2072
        %v2074 = vpop.f32.mrb[0].mxu0
        %v2075 = vadd.f32 %v1848, %v2074
        %2076 = vmatprep.mubr.f32.mxu0 %v608
        %2077 = vmatmul.mubr.f32.gmra.mrb[0].mxu0 %v607
        %v2078 = vpop.f32.mrb[0].mxu0
        %v2079 = vadd.f32 %v1852, %v2078
        %v2080 = vpop.f32.mrb[0].mxu0
        %v2081 = vadd.f32 %v1854, %v2080
        %2082 = vmatprep.mubr.f32.mxu0 %v622
        %2083 = vmatmul.mubr.f32.gmra.mrb[0].mxu0 %v621
        %v2084 = vpop.f32.mrb[0].mxu0
        %v2085 = vadd.f32 %v1858, %v2084
        %v2086 = vpop.f32.mrb[0].mxu0
        %v2087 = vadd.f32 %v1860, %v2086
        %2088 = vmatprep.mubr.f32.mxu0 %v636
        %2089 = vmatmul.mubr.f32.gmra.mrb[0].mxu0 %v635
        %v2090 = vpop.f32.mrb[0].mxu0
        %v2091 = vadd.f32 %v1864, %v2090
        %v2092 = vpop.f32.mrb[0].mxu0
        %v2093 = vadd.f32 %v1866, %v2092
        %2094 = vmatprep.mubr.f32.mxu0 %v650
        %2095 = vmatmul.mubr.f32.gmra.mrb[0].mxu0 %v649
        %v2096 = vpop.f32.mrb[0].mxu0
        %v2097 = vadd.f32 %v1870, %v2096
        %v2098 = vpop.f32.mrb[0].mxu0
        %v2099 = vadd.f32 %v1872, %v2098
        %2100 = vmatprep.mubr.f32.mxu0 %v664
        %2101 = vmatmul.mubr.f32.gmra.mrb[0].mxu0 %v663
        %v2102 = vpop.f32.mrb[0].mxu0
        %v2103 = vadd.f32 %v1876, %v2102
        %v2104 = vpop.f32.mrb[0].mxu0
        %v2105 = vadd.f32 %v1878, %v2104
        %2106 = vmatprep.mubr.f32.mxu0 %v678
        %2107 = vmatmul.mubr.f32.gmra.mrb[0].mxu0 %v677
        %v2108 = vpop.f32.mrb[0].mxu0
        %v2109 = vadd.f32 %v1882, %v2108
        %v2110 = vpop.f32.mrb[0].mxu0
        %v2111 = vadd.f32 %v1884, %v2110
        %2112 = vmatprep.mubr.f32.mxu0 %v692
        %2113 = vmatmul.mubr.f32.gmra.mrb[0].mxu0 %v691
        %v2114 = vpop.f32.mrb[0].mxu0
        %v2115 = vadd.f32 %v1888, %v2114
        %v2116 = vpop.f32.mrb[0].mxu0
        %v2117 = vadd.f32 %v1890, %v2116
        %2118 = vmatprep.mubr.f32.mxu0 %v706
        %2119 = vmatmul.mubr.f32.gmra.mrb[0].mxu0 %v705
        %v2120 = vpop.f32.mrb[0].mxu0
        %v2121 = vadd.f32 %v1894, %v2120
        %v2122 = vpop.f32.mrb[0].mxu0
        %v2123 = vadd.f32 %v1896, %v2122
        %2124 = vmatprep.mubr.f32.mxu0 %v720
        %2125 = vmatmul.mubr.f32.gmra.mrb[0].mxu0 %v719
        %v2126 = vpop.f32.mrb[0].mxu0
        %v2127 = vadd.f32 %v1900, %v2126
        %v2128 = vpop.f32.mrb[0].mxu0
        %v2129 = vadd.f32 %v1902, %v2128
        %2130 = vdwg.mxu0
        %2131 = vmatprep.subr.mxu0 %v988
        %2132 = vmatpush1.msra.mxu0 %v987
        %2133 = vmatprep.subr.mxu0 %v992
        %2134 = vmatpush1.msra.mxu0 %v991
        %2135 = vmatprep.subr.mxu0 %v996
        %2136 = vmatpush1.msra.mxu0 %v995
        %2137 = vmatprep.subr.mxu0 %v1000
        %2138 = vmatpush1.msra.mxu0 %v999
        %2139 = vmatprep.subr.mxu0 %v1004
        %2140 = vmatpush1.msra.mxu0 %v1003
        %2141 = vmatprep.subr.mxu0 %v1008
        %2142 = vmatpush1.msra.mxu0 %v1007
        %2143 = vmatprep.subr.mxu0 %v1012
        %2144 = vmatpush1.msra.mxu0 %v1011
        %2145 = vmatprep.subr.mxu0 %v1016
        %2146 = vmatpush1.msra.mxu0 %v1015
        %2147 = vmatprep.subr.mxu0 %v1020
        %2148 = vmatpush1.msra.mxu0 %v1019
        %2149 = vmatprep.subr.mxu0 %v1024
        %2150 = vmatpush1.msra.mxu0 %v1023
        %2151 = vmatprep.subr.mxu0 %v1028
        %2152 = vmatpush1.msra.mxu0 %v1027
        %2153 = vmatprep.subr.mxu0 %v1032
        %2154 = vmatpush1.msra.mxu0 %v1031
        %2155 = vmatprep.subr.mxu0 %v1036
        %2156 = vmatpush1.msra.mxu0 %v1035
        %2157 = vmatprep.subr.mxu0 %v1040
        %2158 = vmatpush1.msra.mxu0 %v1039
        %2159 = vmatprep.subr.mxu0 %v1044
        %2160 = vmatpush1.msra.mxu0 %v1043
        %2161 = vmatprep.subr.mxu0 %v1048
        %2162 = vmatpush1.msra.mxu0 %v1047
        %2163 = vmatprep.subr.mxu0 %v1052
        %2164 = vmatpush1.msra.mxu0 %v1051
        %2165 = vmatprep.subr.mxu0 %v1056
        %2166 = vmatpush1.msra.mxu0 %v1055
        %2167 = vmatprep.subr.mxu0 %v1060
        %2168 = vmatpush1.msra.mxu0 %v1059
        %2169 = vmatprep.subr.mxu0 %v1064
        %2170 = vmatpush1.msra.mxu0 %v1063
        %2171 = vmatprep.subr.mxu0 %v1068
        %2172 = vmatpush1.msra.mxu0 %v1067
        %2173 = vmatprep.subr.mxu0 %v1072
        %2174 = vmatpush1.msra.mxu0 %v1071
        %2175 = vmatprep.subr.mxu0 %v1076
        %2176 = vmatpush1.msra.mxu0 %v1075
        %2177 = vmatprep.subr.mxu0 %v1080
        %2178 = vmatpush1.msra.mxu0 %v1079
        %2179 = vmatprep.subr.mxu0 %v1084
        %2180 = vmatpush1.msra.mxu0 %v1083
        %2181 = vmatprep.subr.mxu0 %v1088
        %2182 = vmatpush1.msra.mxu0 %v1087
        %2183 = vmatprep.subr.mxu0 %v1092
        %2184 = vmatpush1.msra.mxu0 %v1091
        %2185 = vmatprep.subr.mxu0 %v1096
        %2186 = vmatpush1.msra.mxu0 %v1095
        %2187 = vmatprep.subr.mxu0 %v1100
        %2188 = vmatpush1.msra.mxu0 %v1099
        %2189 = vmatprep.subr.mxu0 %v1104
        %2190 = vmatpush1.msra.mxu0 %v1103
        %2191 = vmatprep.subr.mxu0 %v1108
        %2192 = vmatpush1.msra.mxu0 %v1107
        %2193 = vmatprep.subr.mxu0 %v1112
        %2194 = vmatpush1.msra.mxu0 %v1111
        %2195 = vmatprep.mubr.f32.mxu0 %v358
        %2196 = vmatmul.mubr.f32.gmra.mrb[0].mxu0 %v357
        %v2197 = vpop.f32.mrb[0].mxu0
        %v2198 = vadd.f32 %v1971, %v2197
        %v2199 = vpop.f32.mrb[0].mxu0
        %v2200 = vadd.f32 %v1973, %v2199
        %2201 = vmatprep.mubr.f32.mxu0 %v372
        %2202 = vmatmul.mubr.f32.gmra.mrb[0].mxu0 %v371
        %v2203 = vpop.f32.mrb[0].mxu0
        %v2204 = vadd.f32 %v1977, %v2203
        %v2205 = vpop.f32.mrb[0].mxu0
        %v2206 = vadd.f32 %v1979, %v2205
        %2207 = vmatprep.mubr.f32.mxu0 %v386
        %2208 = vmatmul.mubr.f32.gmra.mrb[0].mxu0 %v385
        %v2209 = vpop.f32.mrb[0].mxu0
        %v2210 = vadd.f32 %v1983, %v2209
        %v2211 = vpop.f32.mrb[0].mxu0
        %v2212 = vadd.f32 %v1985, %v2211
        %2213 = vmatprep.mubr.f32.mxu0 %v400
        %2214 = vmatmul.mubr.f32.gmra.mrb[0].mxu0 %v399
        %v2215 = vpop.f32.mrb[0].mxu0
        %v2216 = vadd.f32 %v1989, %v2215
        %v2217 = vpop.f32.mrb[0].mxu0
        %v2218 = vadd.f32 %v1991, %v2217
        %2219 = vmatprep.mubr.f32.mxu0 %v414
        %2220 = vmatmul.mubr.f32.gmra.mrb[0].mxu0 %v413
        %v2221 = vpop.f32.mrb[0].mxu0
        %v2222 = vadd.f32 %v1995, %v2221
        %v2223 = vpop.f32.mrb[0].mxu0
        %v2224 = vadd.f32 %v1997, %v2223
        %2225 = vmatprep.mubr.f32.mxu0 %v428
        %2226 = vmatmul.mubr.f32.gmra.mrb[0].mxu0 %v427
        %v2227 = vpop.f32.mrb[0].mxu0
        %v2228 = vadd.f32 %v2001, %v2227
        %v2229 = vpop.f32.mrb[0].mxu0
        %v2230 = vadd.f32 %v2003, %v2229
        %2231 = vmatprep.mubr.f32.mxu0 %v442
        %2232 = vmatmul.mubr.f32.gmra.mrb[0].mxu0 %v441
        %v2233 = vpop.f32.mrb[0].mxu0
        %v2234 = vadd.f32 %v2007, %v2233
        %v2235 = vpop.f32.mrb[0].mxu0
        %v2236 = vadd.f32 %v2009, %v2235
        %2237 = vmatprep.mubr.f32.mxu0 %v456
        %2238 = vmatmul.mubr.f32.gmra.mrb[0].mxu0 %v455
        %v2239 = vpop.f32.mrb[0].mxu0
        %v2240 = vadd.f32 %v2013, %v2239
        %v2241 = vpop.f32.mrb[0].mxu0
        %v2242 = vadd.f32 %v2015, %v2241
        %2243 = vmatprep.mubr.f32.mxu0 %v470
        %2244 = vmatmul.mubr.f32.gmra.mrb[0].mxu0 %v469
        %v2245 = vpop.f32.mrb[0].mxu0
        %v2246 = vadd.f32 %v2019, %v2245
        %v2247 = vpop.f32.mrb[0].mxu0
        %v2248 = vadd.f32 %v2021, %v2247
        %2249 = vmatprep.mubr.f32.mxu0 %v484
        %2250 = vmatmul.mubr.f32.gmra.mrb[0].mxu0 %v483
        %v2251 = vpop.f32.mrb[0].mxu0
        %v2252 = vadd.f32 %v2025, %v2251
        %v2253 = vpop.f32.mrb[0].mxu0
        %v2254 = vadd.f32 %v2027, %v2253
        %2255 = vmatprep.mubr.f32.mxu0 %v498
        %2256 = vmatmul.mubr.f32.gmra.mrb[0].mxu0 %v497
        %v2257 = vpop.f32.mrb[0].mxu0
        %v2258 = vadd.f32 %v2031, %v2257
        %v2259 = vpop.f32.mrb[0].mxu0
        %v2260 = vadd.f32 %v2033, %v2259
        %2261 = vmatprep.mubr.f32.mxu0 %v512
        %2262 = vmatmul.mubr.f32.gmra.mrb[0].mxu0 %v511
        %v2263 = vpop.f32.mrb[0].mxu0
        %v2264 = vadd.f32 %v2037, %v2263
        %v2265 = vpop.f32.mrb[0].mxu0
        %v2266 = vadd.f32 %v2039, %v2265
        %2267 = vmatprep.mubr.f32.mxu0 %v526
        %2268 = vmatmul.mubr.f32.gmra.mrb[0].mxu0 %v525
        %v2269 = vpop.f32.mrb[0].mxu0
        %v2270 = vadd.f32 %v2043, %v2269
        %v2271 = vpop.f32.mrb[0].mxu0
        %v2272 = vadd.f32 %v2045, %v2271
        %2273 = vmatprep.mubr.f32.mxu0 %v540
        %2274 = vmatmul.mubr.f32.gmra.mrb[0].mxu0 %v539
        %v2275 = vpop.f32.mrb[0].mxu0
        %v2276 = vadd.f32 %v2049, %v2275
        %v2277 = vpop.f32.mrb[0].mxu0
        %v2278 = vadd.f32 %v2051, %v2277
        %2279 = vmatprep.mubr.f32.mxu0 %v554
        %2280 = vmatmul.mubr.f32.gmra.mrb[0].mxu0 %v553
        %v2281 = vpop.f32.mrb[0].mxu0
        %v2282 = vadd.f32 %v2055, %v2281
        %v2283 = vpop.f32.mrb[0].mxu0
        %v2284 = vadd.f32 %v2057, %v2283
        %2285 = vmatprep.mubr.f32.mxu0 %v568
        %2286 = vmatmul.mubr.f32.gmra.mrb[0].mxu0 %v567
        %v2287 = vpop.f32.mrb[0].mxu0
        %v2288 = vadd.f32 %v2061, %v2287
        %v2289 = vpop.f32.mrb[0].mxu0
        %v2290 = vadd.f32 %v2063, %v2289
        %2291 = vmatprep.mubr.f32.mxu0 %v582
        %2292 = vmatmul.mubr.f32.gmra.mrb[0].mxu0 %v581
        %v2293 = vpop.f32.mrb[0].mxu0
        %v2294 = vadd.f32 %v2067, %v2293
        %v2295 = vpop.f32.mrb[0].mxu0
        %v2296 = vadd.f32 %v2069, %v2295
        %2297 = vmatprep.mubr.f32.mxu0 %v596
        %2298 = vmatmul.mubr.f32.gmra.mrb[0].mxu0 %v595
        %v2299 = vpop.f32.mrb[0].mxu0
        %v2300 = vadd.f32 %v2073, %v2299
        %v2301 = vpop.f32.mrb[0].mxu0
        %v2302 = vadd.f32 %v2075, %v2301
        %2303 = vmatprep.mubr.f32.mxu0 %v610
        %2304 = vmatmul.mubr.f32.gmra.mrb[0].mxu0 %v609
        %v2305 = vpop.f32.mrb[0].mxu0
        %v2306 = vadd.f32 %v2079, %v2305
        %v2307 = vpop.f32.mrb[0].mxu0
        %v2308 = vadd.f32 %v2081, %v2307
        %2309 = vmatprep.mubr.f32.mxu0 %v624
        %2310 = vmatmul.mubr.f32.gmra.mrb[0].mxu0 %v623
        %v2311 = vpop.f32.mrb[0].mxu0
        %v2312 = vadd.f32 %v2085, %v2311
        %v2313 = vpop.f32.mrb[0].mxu0
        %v2314 = vadd.f32 %v2087, %v2313
        %2315 = vmatprep.mubr.f32.mxu0 %v638
        %2316 = vmatmul.mubr.f32.gmra.mrb[0].mxu0 %v637
        %v2317 = vpop.f32.mrb[0].mxu0
        %v2318 = vadd.f32 %v2091, %v2317
        %v2319 = vpop.f32.mrb[0].mxu0
        %v2320 = vadd.f32 %v2093, %v2319
        %2321 = vmatprep.mubr.f32.mxu0 %v652
        %2322 = vmatmul.mubr.f32.gmra.mrb[0].mxu0 %v651
        %v2323 = vpop.f32.mrb[0].mxu0
        %v2324 = vadd.f32 %v2097, %v2323
        %v2325 = vpop.f32.mrb[0].mxu0
        %v2326 = vadd.f32 %v2099, %v2325
        %2327 = vmatprep.mubr.f32.mxu0 %v666
        %2328 = vmatmul.mubr.f32.gmra.mrb[0].mxu0 %v665
        %v2329 = vpop.f32.mrb[0].mxu0
        %v2330 = vadd.f32 %v2103, %v2329
        %v2331 = vpop.f32.mrb[0].mxu0
        %v2332 = vadd.f32 %v2105, %v2331
        %2333 = vmatprep.mubr.f32.mxu0 %v680
        %2334 = vmatmul.mubr.f32.gmra.mrb[0].mxu0 %v679
        %v2335 = vpop.f32.mrb[0].mxu0
        %v2336 = vadd.f32 %v2109, %v2335
        %v2337 = vpop.f32.mrb[0].mxu0
        %v2338 = vadd.f32 %v2111, %v2337
        %2339 = vmatprep.mubr.f32.mxu0 %v694
        %2340 = vmatmul.mubr.f32.gmra.mrb[0].mxu0 %v693
        %v2341 = vpop.f32.mrb[0].mxu0
        %v2342 = vadd.f32 %v2115, %v2341
        %v2343 = vpop.f32.mrb[0].mxu0
        %v2344 = vadd.f32 %v2117, %v2343
        %2345 = vmatprep.mubr.f32.mxu0 %v708
        %2346 = vmatmul.mubr.f32.gmra.mrb[0].mxu0 %v707
        %v2347 = vpop.f32.mrb[0].mxu0
        %v2348 = vadd.f32 %v2121, %v2347
        %v2349 = vpop.f32.mrb[0].mxu0
        %v2350 = vadd.f32 %v2123, %v2349
        %2351 = vmatprep.mubr.f32.mxu0 %v722
        %2352 = vmatmul.mubr.f32.gmra.mrb[0].mxu0 %v721
        %v2353 = vpop.f32.mrb[0].mxu0
        %v2354 = vadd.f32 %v2127, %v2353
        %v2355 = vpop.f32.mrb[0].mxu0
        %v2356 = vadd.f32 %v2129, %v2355
        %2357 = vdwg.mxu0
        %2358 = vmatprep.subr.mxu0 %v1116
        %2359 = vmatpush1.msra.mxu0 %v1115
        %2360 = vmatprep.subr.mxu0 %v1120
        %2361 = vmatpush1.msra.mxu0 %v1119
        %2362 = vmatprep.subr.mxu0 %v1124
        %2363 = vmatpush1.msra.mxu0 %v1123
        %2364 = vmatprep.subr.mxu0 %v1128
        %2365 = vmatpush1.msra.mxu0 %v1127
        %2366 = vmatprep.subr.mxu0 %v1132
        %2367 = vmatpush1.msra.mxu0 %v1131
        %2368 = vmatprep.subr.mxu0 %v1136
        %2369 = vmatpush1.msra.mxu0 %v1135
        %2370 = vmatprep.subr.mxu0 %v1140
        %2371 = vmatpush1.msra.mxu0 %v1139
        %2372 = vmatprep.subr.mxu0 %v1144
        %2373 = vmatpush1.msra.mxu0 %v1143
        %2374 = vmatprep.subr.mxu0 %v1148
        %2375 = vmatpush1.msra.mxu0 %v1147
        %2376 = vmatprep.subr.mxu0 %v1152
        %2377 = vmatpush1.msra.mxu0 %v1151
        %2378 = vmatprep.subr.mxu0 %v1156
        %2379 = vmatpush1.msra.mxu0 %v1155
        %2380 = vmatprep.subr.mxu0 %v1160
        %2381 = vmatpush1.msra.mxu0 %v1159
        %2382 = vmatprep.subr.mxu0 %v1164
        %2383 = vmatpush1.msra.mxu0 %v1163
        %2384 = vmatprep.subr.mxu0 %v1168
        %2385 = vmatpush1.msra.mxu0 %v1167
        %2386 = vmatprep.subr.mxu0 %v1172
        %2387 = vmatpush1.msra.mxu0 %v1171
        %2388 = vmatprep.subr.mxu0 %v1176
        %2389 = vmatpush1.msra.mxu0 %v1175
        %2390 = vmatprep.subr.mxu0 %v1180
        %2391 = vmatpush1.msra.mxu0 %v1179
        %2392 = vmatprep.subr.mxu0 %v1184
        %2393 = vmatpush1.msra.mxu0 %v1183
        %2394 = vmatprep.subr.mxu0 %v1188
        %2395 = vmatpush1.msra.mxu0 %v1187
        %2396 = vmatprep.subr.mxu0 %v1192
        %2397 = vmatpush1.msra.mxu0 %v1191
        %2398 = vmatprep.subr.mxu0 %v1196
        %2399 = vmatpush1.msra.mxu0 %v1195
        %2400 = vmatprep.subr.mxu0 %v1200
        %2401 = vmatpush1.msra.mxu0 %v1199
        %2402 = vmatprep.subr.mxu0 %v1204
        %2403 = vmatpush1.msra.mxu0 %v1203
        %2404 = vmatprep.subr.mxu0 %v1208
        %2405 = vmatpush1.msra.mxu0 %v1207
        %2406 = vmatprep.subr.mxu0 %v1212
        %2407 = vmatpush1.msra.mxu0 %v1211
        %2408 = vmatprep.subr.mxu0 %v1216
        %2409 = vmatpush1.msra.mxu0 %v1215
        %2410 = vmatprep.subr.mxu0 %v1220
        %2411 = vmatpush1.msra.mxu0 %v1219
        %2412 = vmatprep.subr.mxu0 %v1224
        %2413 = vmatpush1.msra.mxu0 %v1223
        %2414 = vmatprep.subr.mxu0 %v1228
        %2415 = vmatpush1.msra.mxu0 %v1227
        %2416 = vmatprep.subr.mxu0 %v1232
        %2417 = vmatpush1.msra.mxu0 %v1231
        %2418 = vmatprep.subr.mxu0 %v1236
        %2419 = vmatpush1.msra.mxu0 %v1235
        %2420 = vmatprep.subr.mxu0 %v1240
        %2421 = vmatpush1.msra.mxu0 %v1239
        %2422 = vmatprep.mubr.f32.mxu0 %v360
        %2423 = vmatmul.mubr.f32.gmra.mrb[0].mxu0 %v359
        %v2424 = vpop.f32.mrb[0].mxu0
        %v2425 = vadd.f32 %v2198, %v2424
        %v2426 = vpop.f32.mrb[0].mxu0
        %v2427 = vadd.f32 %v2200, %v2426
        %2428 = vmatprep.mubr.f32.mxu0 %v374
        %2429 = vmatmul.mubr.f32.gmra.mrb[0].mxu0 %v373
        %v2430 = vpop.f32.mrb[0].mxu0
        %v2431 = vadd.f32 %v2204, %v2430
        %v2432 = vpop.f32.mrb[0].mxu0
        %v2433 = vadd.f32 %v2206, %v2432
        %2434 = vmatprep.mubr.f32.mxu0 %v388
        %2435 = vmatmul.mubr.f32.gmra.mrb[0].mxu0 %v387
        %v2436 = vpop.f32.mrb[0].mxu0
        %v2437 = vadd.f32 %v2210, %v2436
        %v2438 = vpop.f32.mrb[0].mxu0
        %v2439 = vadd.f32 %v2212, %v2438
        %2440 = vmatprep.mubr.f32.mxu0 %v402
        %2441 = vmatmul.mubr.f32.gmra.mrb[0].mxu0 %v401
        %v2442 = vpop.f32.mrb[0].mxu0
        %v2443 = vadd.f32 %v2216, %v2442
        %v2444 = vpop.f32.mrb[0].mxu0
        %v2445 = vadd.f32 %v2218, %v2444
        %2446 = vmatprep.mubr.f32.mxu0 %v416
        %2447 = vmatmul.mubr.f32.gmra.mrb[0].mxu0 %v415
        %v2448 = vpop.f32.mrb[0].mxu0
        %v2449 = vadd.f32 %v2222, %v2448
        %v2450 = vpop.f32.mrb[0].mxu0
        %v2451 = vadd.f32 %v2224, %v2450
        %2452 = vmatprep.mubr.f32.mxu0 %v430
        %2453 = vmatmul.mubr.f32.gmra.mrb[0].mxu0 %v429
        %v2454 = vpop.f32.mrb[0].mxu0
        %v2455 = vadd.f32 %v2228, %v2454
        %v2456 = vpop.f32.mrb[0].mxu0
        %v2457 = vadd.f32 %v2230, %v2456
        %2458 = vmatprep.mubr.f32.mxu0 %v444
        %2459 = vmatmul.mubr.f32.gmra.mrb[0].mxu0 %v443
        %v2460 = vpop.f32.mrb[0].mxu0
        %v2461 = vadd.f32 %v2234, %v2460
        %v2462 = vpop.f32.mrb[0].mxu0
        %v2463 = vadd.f32 %v2236, %v2462
        %2464 = vmatprep.mubr.f32.mxu0 %v458
        %2465 = vmatmul.mubr.f32.gmra.mrb[0].mxu0 %v457
        %v2466 = vpop.f32.mrb[0].mxu0
        %v2467 = vadd.f32 %v2240, %v2466
        %v2468 = vpop.f32.mrb[0].mxu0
        %v2469 = vadd.f32 %v2242, %v2468
        %2470 = vmatprep.mubr.f32.mxu0 %v472
        %2471 = vmatmul.mubr.f32.gmra.mrb[0].mxu0 %v471
        %v2472 = vpop.f32.mrb[0].mxu0
        %v2473 = vadd.f32 %v2246, %v2472
        %v2474 = vpop.f32.mrb[0].mxu0
        %v2475 = vadd.f32 %v2248, %v2474
        %2476 = vmatprep.mubr.f32.mxu0 %v486
        %2477 = vmatmul.mubr.f32.gmra.mrb[0].mxu0 %v485
        %v2478 = vpop.f32.mrb[0].mxu0
        %v2479 = vadd.f32 %v2252, %v2478
        %v2480 = vpop.f32.mrb[0].mxu0
        %v2481 = vadd.f32 %v2254, %v2480
        %2482 = vmatprep.mubr.f32.mxu0 %v500
        %2483 = vmatmul.mubr.f32.gmra.mrb[0].mxu0 %v499
        %v2484 = vpop.f32.mrb[0].mxu0
        %v2485 = vadd.f32 %v2258, %v2484
        %v2486 = vpop.f32.mrb[0].mxu0
        %v2487 = vadd.f32 %v2260, %v2486
        %2488 = vmatprep.mubr.f32.mxu0 %v514
        %2489 = vmatmul.mubr.f32.gmra.mrb[0].mxu0 %v513
        %v2490 = vpop.f32.mrb[0].mxu0
        %v2491 = vadd.f32 %v2264, %v2490
        %v2492 = vpop.f32.mrb[0].mxu0
        %v2493 = vadd.f32 %v2266, %v2492
        %2494 = vmatprep.mubr.f32.mxu0 %v528
        %2495 = vmatmul.mubr.f32.gmra.mrb[0].mxu0 %v527
        %v2496 = vpop.f32.mrb[0].mxu0
        %v2497 = vadd.f32 %v2270, %v2496
        %v2498 = vpop.f32.mrb[0].mxu0
        %v2499 = vadd.f32 %v2272, %v2498
        %2500 = vmatprep.mubr.f32.mxu0 %v542
        %2501 = vmatmul.mubr.f32.gmra.mrb[0].mxu0 %v541
        %v2502 = vpop.f32.mrb[0].mxu0
        %v2503 = vadd.f32 %v2276, %v2502
        %v2504 = vpop.f32.mrb[0].mxu0
        %v2505 = vadd.f32 %v2278, %v2504
        %2506 = vmatprep.mubr.f32.mxu0 %v556
        %2507 = vmatmul.mubr.f32.gmra.mrb[0].mxu0 %v555
        %v2508 = vpop.f32.mrb[0].mxu0
        %v2509 = vadd.f32 %v2282, %v2508
        %v2510 = vpop.f32.mrb[0].mxu0
        %v2511 = vadd.f32 %v2284, %v2510
        %2512 = vmatprep.mubr.f32.mxu0 %v570
        %2513 = vmatmul.mubr.f32.gmra.mrb[0].mxu0 %v569
        %v2514 = vpop.f32.mrb[0].mxu0
        %v2515 = vadd.f32 %v2288, %v2514
        %v2516 = vpop.f32.mrb[0].mxu0
        %v2517 = vadd.f32 %v2290, %v2516
        %2518 = vmatprep.mubr.f32.mxu0 %v584
        %2519 = vmatmul.mubr.f32.gmra.mrb[0].mxu0 %v583
        %v2520 = vpop.f32.mrb[0].mxu0
        %v2521 = vadd.f32 %v2294, %v2520
        %v2522 = vpop.f32.mrb[0].mxu0
        %v2523 = vadd.f32 %v2296, %v2522
        %2524 = vmatprep.mubr.f32.mxu0 %v598
        %2525 = vmatmul.mubr.f32.gmra.mrb[0].mxu0 %v597
        %v2526 = vpop.f32.mrb[0].mxu0
        %v2527 = vadd.f32 %v2300, %v2526
        %v2528 = vpop.f32.mrb[0].mxu0
        %v2529 = vadd.f32 %v2302, %v2528
        %2530 = vmatprep.mubr.f32.mxu0 %v612
        %2531 = vmatmul.mubr.f32.gmra.mrb[0].mxu0 %v611
        %v2532 = vpop.f32.mrb[0].mxu0
        %v2533 = vadd.f32 %v2306, %v2532
        %v2534 = vpop.f32.mrb[0].mxu0
        %v2535 = vadd.f32 %v2308, %v2534
        %2536 = vmatprep.mubr.f32.mxu0 %v626
        %2537 = vmatmul.mubr.f32.gmra.mrb[0].mxu0 %v625
        %v2538 = vpop.f32.mrb[0].mxu0
        %v2539 = vadd.f32 %v2312, %v2538
        %v2540 = vpop.f32.mrb[0].mxu0
        %v2541 = vadd.f32 %v2314, %v2540
        %2542 = vmatprep.mubr.f32.mxu0 %v640
        %2543 = vmatmul.mubr.f32.gmra.mrb[0].mxu0 %v639
        %v2544 = vpop.f32.mrb[0].mxu0
        %v2545 = vadd.f32 %v2318, %v2544
        %v2546 = vpop.f32.mrb[0].mxu0
        %v2547 = vadd.f32 %v2320, %v2546
        %2548 = vmatprep.mubr.f32.mxu0 %v654
        %2549 = vmatmul.mubr.f32.gmra.mrb[0].mxu0 %v653
        %v2550 = vpop.f32.mrb[0].mxu0
        %v2551 = vadd.f32 %v2324, %v2550
        %v2552 = vpop.f32.mrb[0].mxu0
        %v2553 = vadd.f32 %v2326, %v2552
        %2554 = vmatprep.mubr.f32.mxu0 %v668
        %2555 = vmatmul.mubr.f32.gmra.mrb[0].mxu0 %v667
        %v2556 = vpop.f32.mrb[0].mxu0
        %v2557 = vadd.f32 %v2330, %v2556
        %v2558 = vpop.f32.mrb[0].mxu0
        %v2559 = vadd.f32 %v2332, %v2558
        %2560 = vmatprep.mubr.f32.mxu0 %v682
        %2561 = vmatmul.mubr.f32.gmra.mrb[0].mxu0 %v681
        %v2562 = vpop.f32.mrb[0].mxu0
        %v2563 = vadd.f32 %v2336, %v2562
        %v2564 = vpop.f32.mrb[0].mxu0
        %v2565 = vadd.f32 %v2338, %v2564
        %2566 = vmatprep.mubr.f32.mxu0 %v696
        %2567 = vmatmul.mubr.f32.gmra.mrb[0].mxu0 %v695
        %v2568 = vpop.f32.mrb[0].mxu0
        %v2569 = vadd.f32 %v2342, %v2568
        %v2570 = vpop.f32.mrb[0].mxu0
        %v2571 = vadd.f32 %v2344, %v2570
        %2572 = vmatprep.mubr.f32.mxu0 %v710
        %2573 = vmatmul.mubr.f32.gmra.mrb[0].mxu0 %v709
        %v2574 = vpop.f32.mrb[0].mxu0
        %v2575 = vadd.f32 %v2348, %v2574
        %v2576 = vpop.f32.mrb[0].mxu0
        %v2577 = vadd.f32 %v2350, %v2576
        %2578 = vmatprep.mubr.f32.mxu0 %v724
        %2579 = vmatmul.mubr.f32.gmra.mrb[0].mxu0 %v723
        %v2580 = vpop.f32.mrb[0].mxu0
        %v2581 = vadd.f32 %v2354, %v2580
        %v2582 = vpop.f32.mrb[0].mxu0
        %v2583 = vadd.f32 %v2356, %v2582
        %2584 = vdwg.mxu0
        %2585 = vmatprep.subr.mxu0 %v1244
        %2586 = vmatpush1.msra.mxu0 %v1243
        %2587 = vmatprep.subr.mxu0 %v1248
        %2588 = vmatpush1.msra.mxu0 %v1247
        %2589 = vmatprep.subr.mxu0 %v1252
        %2590 = vmatpush1.msra.mxu0 %v1251
        %2591 = vmatprep.subr.mxu0 %v1256
        %2592 = vmatpush1.msra.mxu0 %v1255
        %2593 = vmatprep.subr.mxu0 %v1260
        %2594 = vmatpush1.msra.mxu0 %v1259
        %2595 = vmatprep.subr.mxu0 %v1264
        %2596 = vmatpush1.msra.mxu0 %v1263
        %2597 = vmatprep.subr.mxu0 %v1268
        %2598 = vmatpush1.msra.mxu0 %v1267
        %2599 = vmatprep.subr.mxu0 %v1272
        %2600 = vmatpush1.msra.mxu0 %v1271
        %2601 = vmatprep.subr.mxu0 %v1276
        %2602 = vmatpush1.msra.mxu0 %v1275
        %2603 = vmatprep.subr.mxu0 %v1280
        %2604 = vmatpush1.msra.mxu0 %v1279
        %2605 = vmatprep.subr.mxu0 %v1284
        %2606 = vmatpush1.msra.mxu0 %v1283
        %2607 = vmatprep.subr.mxu0 %v1288
        %2608 = vmatpush1.msra.mxu0 %v1287
        %2609 = vmatprep.subr.mxu0 %v1292
        %2610 = vmatpush1.msra.mxu0 %v1291
        %2611 = vmatprep.subr.mxu0 %v1296
        %2612 = vmatpush1.msra.mxu0 %v1295
        %2613 = vmatprep.subr.mxu0 %v1300
        %2614 = vmatpush1.msra.mxu0 %v1299
        %2615 = vmatprep.subr.mxu0 %v1304
        %2616 = vmatpush1.msra.mxu0 %v1303
        %2617 = vmatprep.subr.mxu0 %v1308
        %2618 = vmatpush1.msra.mxu0 %v1307
        %2619 = vmatprep.subr.mxu0 %v1312
        %2620 = vmatpush1.msra.mxu0 %v1311
        %2621 = vmatprep.subr.mxu0 %v1316
        %2622 = vmatpush1.msra.mxu0 %v1315
        %2623 = vmatprep.subr.mxu0 %v1320
        %2624 = vmatpush1.msra.mxu0 %v1319
        %2625 = vmatprep.subr.mxu0 %v1324
        %2626 = vmatpush1.msra.mxu0 %v1323
        %2627 = vmatprep.subr.mxu0 %v1328
        %2628 = vmatpush1.msra.mxu0 %v1327
        %2629 = vmatprep.subr.mxu0 %v1332
        %2630 = vmatpush1.msra.mxu0 %v1331
        %2631 = vmatprep.subr.mxu0 %v1336
        %2632 = vmatpush1.msra.mxu0 %v1335
        %2633 = vmatprep.subr.mxu0 %v1340
        %2634 = vmatpush1.msra.mxu0 %v1339
        %2635 = vmatprep.subr.mxu0 %v1344
        %2636 = vmatpush1.msra.mxu0 %v1343
        %2637 = vmatprep.subr.mxu0 %v1348
        %2638 = vmatpush1.msra.mxu0 %v1347
        %2639 = vmatprep.subr.mxu0 %v1352
        %2640 = vmatpush1.msra.mxu0 %v1351
        %2641 = vmatprep.subr.mxu0 %v1356
        %2642 = vmatpush1.msra.mxu0 %v1355
        %2643 = vmatprep.subr.mxu0 %v1360
        %2644 = vmatpush1.msra.mxu0 %v1359
        %2645 = vmatprep.subr.mxu0 %v1364
        %2646 = vmatpush1.msra.mxu0 %v1363
        %2647 = vmatprep.subr.mxu0 %v1368
        %2648 = vmatpush1.msra.mxu0 %v1367
        %2649 = vmatprep.mubr.f32.mxu0 %v362
        %2650 = vmatmul.mubr.f32.gmra.mrb[0].mxu0 %v361
        %v2651 = vpop.f32.mrb[0].mxu0
        %v2652 = vadd.f32 %v2425, %v2651
        %v2653 = vpop.f32.mrb[0].mxu0
        %v2654 = vadd.f32 %v2427, %v2653
        %2655 = vmatprep.mubr.f32.mxu0 %v376
        %2656 = vmatmul.mubr.f32.gmra.mrb[0].mxu0 %v375
        %v2657 = vpop.f32.mrb[0].mxu0
        %v2658 = vadd.f32 %v2431, %v2657
        %v2659 = vpop.f32.mrb[0].mxu0
        %v2660 = vadd.f32 %v2433, %v2659
        %2661 = vmatprep.mubr.f32.mxu0 %v390
        %2662 = vmatmul.mubr.f32.gmra.mrb[0].mxu0 %v389
        %v2663 = vpop.f32.mrb[0].mxu0
        %v2664 = vadd.f32 %v2437, %v2663
        %v2665 = vpop.f32.mrb[0].mxu0
        %v2666 = vadd.f32 %v2439, %v2665
        %2667 = vmatprep.mubr.f32.mxu0 %v404
        %2668 = vmatmul.mubr.f32.gmra.mrb[0].mxu0 %v403
        %v2669 = vpop.f32.mrb[0].mxu0
        %v2670 = vadd.f32 %v2443, %v2669
        %v2671 = vpop.f32.mrb[0].mxu0
        %v2672 = vadd.f32 %v2445, %v2671
        %2673 = vmatprep.mubr.f32.mxu0 %v418
        %2674 = vmatmul.mubr.f32.gmra.mrb[0].mxu0 %v417
        %v2675 = vpop.f32.mrb[0].mxu0
        %v2676 = vadd.f32 %v2449, %v2675
        %v2677 = vpop.f32.mrb[0].mxu0
        %v2678 = vadd.f32 %v2451, %v2677
        %2679 = vmatprep.mubr.f32.mxu0 %v432
        %2680 = vmatmul.mubr.f32.gmra.mrb[0].mxu0 %v431
        %v2681 = vpop.f32.mrb[0].mxu0
        %v2682 = vadd.f32 %v2455, %v2681
        %v2683 = vpop.f32.mrb[0].mxu0
        %v2684 = vadd.f32 %v2457, %v2683
        %2685 = vmatprep.mubr.f32.mxu0 %v446
        %2686 = vmatmul.mubr.f32.gmra.mrb[0].mxu0 %v445
        %v2687 = vpop.f32.mrb[0].mxu0
        %v2688 = vadd.f32 %v2461, %v2687
        %v2689 = vpop.f32.mrb[0].mxu0
        %v2690 = vadd.f32 %v2463, %v2689
        %2691 = vmatprep.mubr.f32.mxu0 %v460
        %2692 = vmatmul.mubr.f32.gmra.mrb[0].mxu0 %v459
        %v2693 = vpop.f32.mrb[0].mxu0
        %v2694 = vadd.f32 %v2467, %v2693
        %v2695 = vpop.f32.mrb[0].mxu0
        %v2696 = vadd.f32 %v2469, %v2695
        %2697 = vmatprep.mubr.f32.mxu0 %v474
        %2698 = vmatmul.mubr.f32.gmra.mrb[0].mxu0 %v473
        %v2699 = vpop.f32.mrb[0].mxu0
        %v2700 = vadd.f32 %v2473, %v2699
        %v2701 = vpop.f32.mrb[0].mxu0
        %v2702 = vadd.f32 %v2475, %v2701
        %2703 = vmatprep.mubr.f32.mxu0 %v488
        %2704 = vmatmul.mubr.f32.gmra.mrb[0].mxu0 %v487
        %v2705 = vpop.f32.mrb[0].mxu0
        %v2706 = vadd.f32 %v2479, %v2705
        %v2707 = vpop.f32.mrb[0].mxu0
        %v2708 = vadd.f32 %v2481, %v2707
        %2709 = vmatprep.mubr.f32.mxu0 %v502
        %2710 = vmatmul.mubr.f32.gmra.mrb[0].mxu0 %v501
        %v2711 = vpop.f32.mrb[0].mxu0
        %v2712 = vadd.f32 %v2485, %v2711
        %v2713 = vpop.f32.mrb[0].mxu0
        %v2714 = vadd.f32 %v2487, %v2713
        %2715 = vmatprep.mubr.f32.mxu0 %v516
        %2716 = vmatmul.mubr.f32.gmra.mrb[0].mxu0 %v515
        %v2717 = vpop.f32.mrb[0].mxu0
        %v2718 = vadd.f32 %v2491, %v2717
        %v2719 = vpop.f32.mrb[0].mxu0
        %v2720 = vadd.f32 %v2493, %v2719
        %2721 = vmatprep.mubr.f32.mxu0 %v530
        %2722 = vmatmul.mubr.f32.gmra.mrb[0].mxu0 %v529
        %v2723 = vpop.f32.mrb[0].mxu0
        %v2724 = vadd.f32 %v2497, %v2723
        %v2725 = vpop.f32.mrb[0].mxu0
        %v2726 = vadd.f32 %v2499, %v2725
        %2727 = vmatprep.mubr.f32.mxu0 %v544
        %2728 = vmatmul.mubr.f32.gmra.mrb[0].mxu0 %v543
        %v2729 = vpop.f32.mrb[0].mxu0
        %v2730 = vadd.f32 %v2503, %v2729
        %v2731 = vpop.f32.mrb[0].mxu0
        %v2732 = vadd.f32 %v2505, %v2731
        %2733 = vmatprep.mubr.f32.mxu0 %v558
        %2734 = vmatmul.mubr.f32.gmra.mrb[0].mxu0 %v557
        %v2735 = vpop.f32.mrb[0].mxu0
        %v2736 = vadd.f32 %v2509, %v2735
        %v2737 = vpop.f32.mrb[0].mxu0
        %v2738 = vadd.f32 %v2511, %v2737
        %2739 = vmatprep.mubr.f32.mxu0 %v572
        %2740 = vmatmul.mubr.f32.gmra.mrb[0].mxu0 %v571
        %v2741 = vpop.f32.mrb[0].mxu0
        %v2742 = vadd.f32 %v2515, %v2741
        %v2743 = vpop.f32.mrb[0].mxu0
        %v2744 = vadd.f32 %v2517, %v2743
        %2745 = vmatprep.mubr.f32.mxu0 %v586
        %2746 = vmatmul.mubr.f32.gmra.mrb[0].mxu0 %v585
        %v2747 = vpop.f32.mrb[0].mxu0
        %v2748 = vadd.f32 %v2521, %v2747
        %v2749 = vpop.f32.mrb[0].mxu0
        %v2750 = vadd.f32 %v2523, %v2749
        %2751 = vmatprep.mubr.f32.mxu0 %v600
        %2752 = vmatmul.mubr.f32.gmra.mrb[0].mxu0 %v599
        %v2753 = vpop.f32.mrb[0].mxu0
        %v2754 = vadd.f32 %v2527, %v2753
        %v2755 = vpop.f32.mrb[0].mxu0
        %v2756 = vadd.f32 %v2529, %v2755
        %2757 = vmatprep.mubr.f32.mxu0 %v614
        %2758 = vmatmul.mubr.f32.gmra.mrb[0].mxu0 %v613
        %v2759 = vpop.f32.mrb[0].mxu0
        %v2760 = vadd.f32 %v2533, %v2759
        %v2761 = vpop.f32.mrb[0].mxu0
        %v2762 = vadd.f32 %v2535, %v2761
        %2763 = vmatprep.mubr.f32.mxu0 %v628
        %2764 = vmatmul.mubr.f32.gmra.mrb[0].mxu0 %v627
        %v2765 = vpop.f32.mrb[0].mxu0
        %v2766 = vadd.f32 %v2539, %v2765
        %v2767 = vpop.f32.mrb[0].mxu0
        %v2768 = vadd.f32 %v2541, %v2767
        %2769 = vmatprep.mubr.f32.mxu0 %v642
        %2770 = vmatmul.mubr.f32.gmra.mrb[0].mxu0 %v641
        %v2771 = vpop.f32.mrb[0].mxu0
        %v2772 = vadd.f32 %v2545, %v2771
        %v2773 = vpop.f32.mrb[0].mxu0
        %v2774 = vadd.f32 %v2547, %v2773
        %2775 = vmatprep.mubr.f32.mxu0 %v656
        %2776 = vmatmul.mubr.f32.gmra.mrb[0].mxu0 %v655
        %v2777 = vpop.f32.mrb[0].mxu0
        %v2778 = vadd.f32 %v2551, %v2777
        %v2779 = vpop.f32.mrb[0].mxu0
        %v2780 = vadd.f32 %v2553, %v2779
        %2781 = vmatprep.mubr.f32.mxu0 %v670
        %2782 = vmatmul.mubr.f32.gmra.mrb[0].mxu0 %v669
        %v2783 = vpop.f32.mrb[0].mxu0
        %v2784 = vadd.f32 %v2557, %v2783
        %v2785 = vpop.f32.mrb[0].mxu0
        %v2786 = vadd.f32 %v2559, %v2785
        %2787 = vmatprep.mubr.f32.mxu0 %v684
        %2788 = vmatmul.mubr.f32.gmra.mrb[0].mxu0 %v683
        %v2789 = vpop.f32.mrb[0].mxu0
        %v2790 = vadd.f32 %v2563, %v2789
        %v2791 = vpop.f32.mrb[0].mxu0
        %v2792 = vadd.f32 %v2565, %v2791
        %2793 = vmatprep.mubr.f32.mxu0 %v698
        %2794 = vmatmul.mubr.f32.gmra.mrb[0].mxu0 %v697
        %v2795 = vpop.f32.mrb[0].mxu0
        %v2796 = vadd.f32 %v2569, %v2795
        %v2797 = vpop.f32.mrb[0].mxu0
        %v2798 = vadd.f32 %v2571, %v2797
        %2799 = vmatprep.mubr.f32.mxu0 %v712
        %2800 = vmatmul.mubr.f32.gmra.mrb[0].mxu0 %v711
        %v2801 = vpop.f32.mrb[0].mxu0
        %v2802 = vadd.f32 %v2575, %v2801
        %v2803 = vpop.f32.mrb[0].mxu0
        %v2804 = vadd.f32 %v2577, %v2803
        %2805 = vmatprep.mubr.f32.mxu0 %v726
        %2806 = vmatmul.mubr.f32.gmra.mrb[0].mxu0 %v725
        %v2807 = vpop.f32.mrb[0].mxu0
        %v2808 = vadd.f32 %v2581, %v2807
        %v2809 = vpop.f32.mrb[0].mxu0
        %v2810 = vadd.f32 %v2583, %v2809
        %2811 = vdwg.mxu0
        %2812 = vmatprep.subr.mxu0 %v1372
        %2813 = vmatpush1.msra.mxu0 %v1371
        %2814 = vmatprep.subr.mxu0 %v1376
        %2815 = vmatpush1.msra.mxu0 %v1375
        %2816 = vmatprep.subr.mxu0 %v1380
        %2817 = vmatpush1.msra.mxu0 %v1379
        %2818 = vmatprep.subr.mxu0 %v1384
        %2819 = vmatpush1.msra.mxu0 %v1383
        %2820 = vmatprep.subr.mxu0 %v1388
        %2821 = vmatpush1.msra.mxu0 %v1387
        %2822 = vmatprep.subr.mxu0 %v1392
        %2823 = vmatpush1.msra.mxu0 %v1391
        %2824 = vmatprep.subr.mxu0 %v1396
        %2825 = vmatpush1.msra.mxu0 %v1395
        %2826 = vmatprep.subr.mxu0 %v1400
        %2827 = vmatpush1.msra.mxu0 %v1399
        %2828 = vmatprep.subr.mxu0 %v1404
        %2829 = vmatpush1.msra.mxu0 %v1403
        %2830 = vmatprep.subr.mxu0 %v1408
        %2831 = vmatpush1.msra.mxu0 %v1407
        %2832 = vmatprep.subr.mxu0 %v1412
        %2833 = vmatpush1.msra.mxu0 %v1411
        %2834 = vmatprep.subr.mxu0 %v1416
        %2835 = vmatpush1.msra.mxu0 %v1415
        %2836 = vmatprep.subr.mxu0 %v1420
        %2837 = vmatpush1.msra.mxu0 %v1419
        %2838 = vmatprep.subr.mxu0 %v1424
        %2839 = vmatpush1.msra.mxu0 %v1423
        %2840 = vmatprep.subr.mxu0 %v1428
        %2841 = vmatpush1.msra.mxu0 %v1427
        %2842 = vmatprep.subr.mxu0 %v1432
        %2843 = vmatpush1.msra.mxu0 %v1431
        %2844 = vmatprep.subr.mxu0 %v1436
        %2845 = vmatpush1.msra.mxu0 %v1435
        %2846 = vmatprep.subr.mxu0 %v1440
        %2847 = vmatpush1.msra.mxu0 %v1439
        %2848 = vmatprep.subr.mxu0 %v1444
        %2849 = vmatpush1.msra.mxu0 %v1443
        %2850 = vmatprep.subr.mxu0 %v1448
        %2851 = vmatpush1.msra.mxu0 %v1447
        %2852 = vmatprep.subr.mxu0 %v1452
        %2853 = vmatpush1.msra.mxu0 %v1451
        %2854 = vmatprep.subr.mxu0 %v1456
        %2855 = vmatpush1.msra.mxu0 %v1455
        %2856 = vmatprep.subr.mxu0 %v1460
        %2857 = vmatpush1.msra.mxu0 %v1459
        %2858 = vmatprep.subr.mxu0 %v1464
        %2859 = vmatpush1.msra.mxu0 %v1463
        %2860 = vmatprep.subr.mxu0 %v1468
        %2861 = vmatpush1.msra.mxu0 %v1467
        %2862 = vmatprep.subr.mxu0 %v1472
        %2863 = vmatpush1.msra.mxu0 %v1471
        %2864 = vmatprep.subr.mxu0 %v1476
        %2865 = vmatpush1.msra.mxu0 %v1475
        %2866 = vmatprep.subr.mxu0 %v1480
        %2867 = vmatpush1.msra.mxu0 %v1479
        %2868 = vmatprep.subr.mxu0 %v1484
        %2869 = vmatpush1.msra.mxu0 %v1483
        %2870 = vmatprep.subr.mxu0 %v1488
        %2871 = vmatpush1.msra.mxu0 %v1487
        %2872 = vmatprep.subr.mxu0 %v1492
        %2873 = vmatpush1.msra.mxu0 %v1491
        %2874 = vmatprep.subr.mxu0 %v1496
        %2875 = vmatpush1.msra.mxu0 %v1495
        %2876 = vmatprep.mubr.f32.mxu0 %v364
        %2877 = vmatmul.mubr.f32.gmra.mrb[0].mxu0 %v363
        %v2878 = vpop.f32.mrb[0].mxu0
        %v2879 = vadd.f32 %v2652, %v2878
        %v2880 = vpop.f32.mrb[0].mxu0
        %v2881 = vadd.f32 %v2654, %v2880
        %2882 = vmatprep.mubr.f32.mxu0 %v378
        %2883 = vmatmul.mubr.f32.gmra.mrb[0].mxu0 %v377
        %v2884 = vpop.f32.mrb[0].mxu0
        %v2885 = vadd.f32 %v2658, %v2884
        %v2886 = vpop.f32.mrb[0].mxu0
        %v2887 = vadd.f32 %v2660, %v2886
        %2888 = vmatprep.mubr.f32.mxu0 %v392
        %2889 = vmatmul.mubr.f32.gmra.mrb[0].mxu0 %v391
        %v2890 = vpop.f32.mrb[0].mxu0
        %v2891 = vadd.f32 %v2664, %v2890
        %v2892 = vpop.f32.mrb[0].mxu0
        %v2893 = vadd.f32 %v2666, %v2892
        %2894 = vmatprep.mubr.f32.mxu0 %v406
        %2895 = vmatmul.mubr.f32.gmra.mrb[0].mxu0 %v405
        %v2896 = vpop.f32.mrb[0].mxu0
        %v2897 = vadd.f32 %v2670, %v2896
        %v2898 = vpop.f32.mrb[0].mxu0
        %v2899 = vadd.f32 %v2672, %v2898
        %2900 = vmatprep.mubr.f32.mxu0 %v420
        %2901 = vmatmul.mubr.f32.gmra.mrb[0].mxu0 %v419
        %v2902 = vpop.f32.mrb[0].mxu0
        %v2903 = vadd.f32 %v2676, %v2902
        %v2904 = vpop.f32.mrb[0].mxu0
        %v2905 = vadd.f32 %v2678, %v2904
        %2906 = vmatprep.mubr.f32.mxu0 %v434
        %2907 = vmatmul.mubr.f32.gmra.mrb[0].mxu0 %v433
        %v2908 = vpop.f32.mrb[0].mxu0
        %v2909 = vadd.f32 %v2682, %v2908
        %v2910 = vpop.f32.mrb[0].mxu0
        %v2911 = vadd.f32 %v2684, %v2910
        %2912 = vmatprep.mubr.f32.mxu0 %v448
        %2913 = vmatmul.mubr.f32.gmra.mrb[0].mxu0 %v447
        %v2914 = vpop.f32.mrb[0].mxu0
        %v2915 = vadd.f32 %v2688, %v2914
        %v2916 = vpop.f32.mrb[0].mxu0
        %v2917 = vadd.f32 %v2690, %v2916
        %2918 = vmatprep.mubr.f32.mxu0 %v462
        %2919 = vmatmul.mubr.f32.gmra.mrb[0].mxu0 %v461
        %v2920 = vpop.f32.mrb[0].mxu0
        %v2921 = vadd.f32 %v2694, %v2920
        %v2922 = vpop.f32.mrb[0].mxu0
        %v2923 = vadd.f32 %v2696, %v2922
        %2924 = vmatprep.mubr.f32.mxu0 %v476
        %2925 = vmatmul.mubr.f32.gmra.mrb[0].mxu0 %v475
        %v2926 = vpop.f32.mrb[0].mxu0
        %v2927 = vadd.f32 %v2700, %v2926
        %v2928 = vpop.f32.mrb[0].mxu0
        %v2929 = vadd.f32 %v2702, %v2928
        %2930 = vmatprep.mubr.f32.mxu0 %v490
        %2931 = vmatmul.mubr.f32.gmra.mrb[0].mxu0 %v489
        %v2932 = vpop.f32.mrb[0].mxu0
        %v2933 = vadd.f32 %v2706, %v2932
        %v2934 = vpop.f32.mrb[0].mxu0
        %v2935 = vadd.f32 %v2708, %v2934
        %2936 = vmatprep.mubr.f32.mxu0 %v504
        %2937 = vmatmul.mubr.f32.gmra.mrb[0].mxu0 %v503
        %v2938 = vpop.f32.mrb[0].mxu0
        %v2939 = vadd.f32 %v2712, %v2938
        %v2940 = vpop.f32.mrb[0].mxu0
        %v2941 = vadd.f32 %v2714, %v2940
        %2942 = vmatprep.mubr.f32.mxu0 %v518
        %2943 = vmatmul.mubr.f32.gmra.mrb[0].mxu0 %v517
        %v2944 = vpop.f32.mrb[0].mxu0
        %v2945 = vadd.f32 %v2718, %v2944
        %v2946 = vpop.f32.mrb[0].mxu0
        %v2947 = vadd.f32 %v2720, %v2946
        %2948 = vmatprep.mubr.f32.mxu0 %v532
        %2949 = vmatmul.mubr.f32.gmra.mrb[0].mxu0 %v531
        %v2950 = vpop.f32.mrb[0].mxu0
        %v2951 = vadd.f32 %v2724, %v2950
        %v2952 = vpop.f32.mrb[0].mxu0
        %v2953 = vadd.f32 %v2726, %v2952
        %2954 = vmatprep.mubr.f32.mxu0 %v546
        %2955 = vmatmul.mubr.f32.gmra.mrb[0].mxu0 %v545
        %v2956 = vpop.f32.mrb[0].mxu0
        %v2957 = vadd.f32 %v2730, %v2956
        %v2958 = vpop.f32.mrb[0].mxu0
        %v2959 = vadd.f32 %v2732, %v2958
        %2960 = vmatprep.mubr.f32.mxu0 %v560
        %2961 = vmatmul.mubr.f32.gmra.mrb[0].mxu0 %v559
        %v2962 = vpop.f32.mrb[0].mxu0
        %v2963 = vadd.f32 %v2736, %v2962
        %v2964 = vpop.f32.mrb[0].mxu0
        %v2965 = vadd.f32 %v2738, %v2964
        %2966 = vmatprep.mubr.f32.mxu0 %v574
        %2967 = vmatmul.mubr.f32.gmra.mrb[0].mxu0 %v573
        %v2968 = vpop.f32.mrb[0].mxu0
        %v2969 = vadd.f32 %v2742, %v2968
        %v2970 = vpop.f32.mrb[0].mxu0
        %v2971 = vadd.f32 %v2744, %v2970
        %2972 = vmatprep.mubr.f32.mxu0 %v588
        %2973 = vmatmul.mubr.f32.gmra.mrb[0].mxu0 %v587
        %v2974 = vpop.f32.mrb[0].mxu0
        %v2975 = vadd.f32 %v2748, %v2974
        %v2976 = vpop.f32.mrb[0].mxu0
        %v2977 = vadd.f32 %v2750, %v2976
        %2978 = vmatprep.mubr.f32.mxu0 %v602
        %2979 = vmatmul.mubr.f32.gmra.mrb[0].mxu0 %v601
        %v2980 = vpop.f32.mrb[0].mxu0
        %v2981 = vadd.f32 %v2754, %v2980
        %v2982 = vpop.f32.mrb[0].mxu0
        %v2983 = vadd.f32 %v2756, %v2982
        %2984 = vmatprep.mubr.f32.mxu0 %v616
        %2985 = vmatmul.mubr.f32.gmra.mrb[0].mxu0 %v615
        %v2986 = vpop.f32.mrb[0].mxu0
        %v2987 = vadd.f32 %v2760, %v2986
        %v2988 = vpop.f32.mrb[0].mxu0
        %v2989 = vadd.f32 %v2762, %v2988
        %2990 = vmatprep.mubr.f32.mxu0 %v630
        %2991 = vmatmul.mubr.f32.gmra.mrb[0].mxu0 %v629
        %v2992 = vpop.f32.mrb[0].mxu0
        %v2993 = vadd.f32 %v2766, %v2992
        %v2994 = vpop.f32.mrb[0].mxu0
        %v2995 = vadd.f32 %v2768, %v2994
        %2996 = vmatprep.mubr.f32.mxu0 %v644
        %2997 = vmatmul.mubr.f32.gmra.mrb[0].mxu0 %v643
        %v2998 = vpop.f32.mrb[0].mxu0
        %v2999 = vadd.f32 %v2772, %v2998
        %v3000 = vpop.f32.mrb[0].mxu0
        %v3001 = vadd.f32 %v2774, %v3000
        %3002 = vmatprep.mubr.f32.mxu0 %v658
        %3003 = vmatmul.mubr.f32.gmra.mrb[0].mxu0 %v657
        %v3004 = vpop.f32.mrb[0].mxu0
        %v3005 = vadd.f32 %v2778, %v3004
        %v3006 = vpop.f32.mrb[0].mxu0
        %v3007 = vadd.f32 %v2780, %v3006
        %3008 = vmatprep.mubr.f32.mxu0 %v672
        %3009 = vmatmul.mubr.f32.gmra.mrb[0].mxu0 %v671
        %v3010 = vpop.f32.mrb[0].mxu0
        %v3011 = vadd.f32 %v2784, %v3010
        %v3012 = vpop.f32.mrb[0].mxu0
        %v3013 = vadd.f32 %v2786, %v3012
        %3014 = vmatprep.mubr.f32.mxu0 %v686
        %3015 = vmatmul.mubr.f32.gmra.mrb[0].mxu0 %v685
        %v3016 = vpop.f32.mrb[0].mxu0
        %v3017 = vadd.f32 %v2790, %v3016
        %v3018 = vpop.f32.mrb[0].mxu0
        %v3019 = vadd.f32 %v2792, %v3018
        %3020 = vmatprep.mubr.f32.mxu0 %v700
        %3021 = vmatmul.mubr.f32.gmra.mrb[0].mxu0 %v699
        %v3022 = vpop.f32.mrb[0].mxu0
        %v3023 = vadd.f32 %v2796, %v3022
        %v3024 = vpop.f32.mrb[0].mxu0
        %v3025 = vadd.f32 %v2798, %v3024
        %3026 = vmatprep.mubr.f32.mxu0 %v714
        %3027 = vmatmul.mubr.f32.gmra.mrb[0].mxu0 %v713
        %v3028 = vpop.f32.mrb[0].mxu0
        %v3029 = vadd.f32 %v2802, %v3028
        %v3030 = vpop.f32.mrb[0].mxu0
        %v3031 = vadd.f32 %v2804, %v3030
        %3032 = vmatprep.mubr.f32.mxu0 %v728
        %3033 = vmatmul.mubr.f32.gmra.mrb[0].mxu0 %v727
        %v3034 = vpop.f32.mrb[0].mxu0
        %v3035 = vadd.f32 %v2808, %v3034
        %v3036 = vpop.f32.mrb[0].mxu0
        %v3037 = vadd.f32 %v2810, %v3036
        %3038 = vdwg.mxu0
        %3039 = vmatprep.subr.mxu0 %v1500
        %3040 = vmatpush1.msra.mxu0 %v1499
        %3041 = vmatprep.subr.mxu0 %v1504
        %3042 = vmatpush1.msra.mxu0 %v1503
        %3043 = vmatprep.subr.mxu0 %v1508
        %3044 = vmatpush1.msra.mxu0 %v1507
        %3045 = vmatprep.subr.mxu0 %v1512
        %3046 = vmatpush1.msra.mxu0 %v1511
        %3047 = vmatprep.subr.mxu0 %v1516
        %3048 = vmatpush1.msra.mxu0 %v1515
        %3049 = vmatprep.subr.mxu0 %v1520
        %3050 = vmatpush1.msra.mxu0 %v1519
        %3051 = vmatprep.subr.mxu0 %v1524
        %3052 = vmatpush1.msra.mxu0 %v1523
        %3053 = vmatprep.subr.mxu0 %v1528
        %3054 = vmatpush1.msra.mxu0 %v1527
        %3055 = vmatprep.subr.mxu0 %v1532
        %3056 = vmatpush1.msra.mxu0 %v1531
        %3057 = vmatprep.subr.mxu0 %v1536
        %3058 = vmatpush1.msra.mxu0 %v1535
        %3059 = vmatprep.subr.mxu0 %v1540
        %3060 = vmatpush1.msra.mxu0 %v1539
        %3061 = vmatprep.subr.mxu0 %v1544
        %3062 = vmatpush1.msra.mxu0 %v1543
        %3063 = vmatprep.subr.mxu0 %v1548
        %3064 = vmatpush1.msra.mxu0 %v1547
        %3065 = vmatprep.subr.mxu0 %v1552
        %3066 = vmatpush1.msra.mxu0 %v1551
        %3067 = vmatprep.subr.mxu0 %v1556
        %3068 = vmatpush1.msra.mxu0 %v1555
        %3069 = vmatprep.subr.mxu0 %v1560
        %3070 = vmatpush1.msra.mxu0 %v1559
        %3071 = vmatprep.subr.mxu0 %v1564
        %3072 = vmatpush1.msra.mxu0 %v1563
        %3073 = vmatprep.subr.mxu0 %v1568
        %3074 = vmatpush1.msra.mxu0 %v1567
        %3075 = vmatprep.subr.mxu0 %v1572
        %3076 = vmatpush1.msra.mxu0 %v1571
        %3077 = vmatprep.subr.mxu0 %v1576
        %3078 = vmatpush1.msra.mxu0 %v1575
        %3079 = vmatprep.subr.mxu0 %v1580
        %3080 = vmatpush1.msra.mxu0 %v1579
        %3081 = vmatprep.subr.mxu0 %v1584
        %3082 = vmatpush1.msra.mxu0 %v1583
        %3083 = vmatprep.subr.mxu0 %v1588
        %3084 = vmatpush1.msra.mxu0 %v1587
        %3085 = vmatprep.subr.mxu0 %v1592
        %3086 = vmatpush1.msra.mxu0 %v1591
        %3087 = vmatprep.subr.mxu0 0.0
        %3088 = vmatpush1.msra.mxu0 0.0
        %3089 = vmatprep.subr.mxu0 0.0
        %3090 = vmatpush1.msra.mxu0 0.0
        %3091 = vmatprep.subr.mxu0 0.0
        %3092 = vmatpush1.msra.mxu0 0.0
        %3093 = vmatprep.subr.mxu0 0.0
        %3094 = vmatpush1.msra.mxu0 0.0
        %3095 = vmatprep.subr.mxu0 0.0
        %3096 = vmatpush1.msra.mxu0 0.0
        %3097 = vmatprep.subr.mxu0 0.0
        %3098 = vmatpush1.msra.mxu0 0.0
        %3099 = vmatprep.subr.mxu0 0.0
        %3100 = vmatpush1.msra.mxu0 0.0
        %3101 = vmatprep.subr.mxu0 0.0
        %3102 = vmatpush1.msra.mxu0 0.0
        %3103 = vmatprep.mubr.f32.mxu0 %v1597
        %3104 = vmatmul.mubr.f32.gmra.mrb[0].mxu0 %v365
        %v3105 = vpop.f32.mrb[0].mxu0
        %v3106 = vadd.f32 %v2879, %v3105
        %v3107 = vpop.f32.mrb[0].mxu0
        %v3108 = vadd.f32 %v2881, %v3107
        %3109 = vmatprep.mubr.f32.mxu0 %v1600
        %3110 = vmatmul.mubr.f32.gmra.mrb[0].mxu0 %v379
        %v3111 = vpop.f32.mrb[0].mxu0
        %v3112 = vadd.f32 %v2885, %v3111
        %v3113 = vpop.f32.mrb[0].mxu0
        %v3114 = vadd.f32 %v2887, %v3113
        %3115 = vmatprep.mubr.f32.mxu0 %v1603
        %3116 = vmatmul.mubr.f32.gmra.mrb[0].mxu0 %v393
        %v3117 = vpop.f32.mrb[0].mxu0
        %v3118 = vadd.f32 %v2891, %v3117
        %v3119 = vpop.f32.mrb[0].mxu0
        %v3120 = vadd.f32 %v2893, %v3119
        %3121 = vmatprep.mubr.f32.mxu0 %v1606
        %3122 = vmatmul.mubr.f32.gmra.mrb[0].mxu0 %v407
        %v3123 = vpop.f32.mrb[0].mxu0
        %v3124 = vadd.f32 %v2897, %v3123
        %v3125 = vpop.f32.mrb[0].mxu0
        %v3126 = vadd.f32 %v2899, %v3125
        %3127 = vmatprep.mubr.f32.mxu0 %v1609
        %3128 = vmatmul.mubr.f32.gmra.mrb[0].mxu0 %v421
        %v3129 = vpop.f32.mrb[0].mxu0
        %v3130 = vadd.f32 %v2903, %v3129
        %v3131 = vpop.f32.mrb[0].mxu0
        %v3132 = vadd.f32 %v2905, %v3131
        %3133 = vmatprep.mubr.f32.mxu0 %v1612
        %3134 = vmatmul.mubr.f32.gmra.mrb[0].mxu0 %v435
        %v3135 = vpop.f32.mrb[0].mxu0
        %v3136 = vadd.f32 %v2909, %v3135
        %v3137 = vpop.f32.mrb[0].mxu0
        %v3138 = vadd.f32 %v2911, %v3137
        %3139 = vmatprep.mubr.f32.mxu0 %v1615
        %3140 = vmatmul.mubr.f32.gmra.mrb[0].mxu0 %v449
        %v3141 = vpop.f32.mrb[0].mxu0
        %v3142 = vadd.f32 %v2915, %v3141
        %v3143 = vpop.f32.mrb[0].mxu0
        %v3144 = vadd.f32 %v2917, %v3143
        %3145 = vmatprep.mubr.f32.mxu0 %v1618
        %3146 = vmatmul.mubr.f32.gmra.mrb[0].mxu0 %v463
        %v3147 = vpop.f32.mrb[0].mxu0
        %v3148 = vadd.f32 %v2921, %v3147
        %v3149 = vpop.f32.mrb[0].mxu0
        %v3150 = vadd.f32 %v2923, %v3149
        %3151 = vmatprep.mubr.f32.mxu0 %v1621
        %3152 = vmatmul.mubr.f32.gmra.mrb[0].mxu0 %v477
        %v3153 = vpop.f32.mrb[0].mxu0
        %v3154 = vadd.f32 %v2927, %v3153
        %v3155 = vpop.f32.mrb[0].mxu0
        %v3156 = vadd.f32 %v2929, %v3155
        %3157 = vmatprep.mubr.f32.mxu0 %v1624
        %3158 = vmatmul.mubr.f32.gmra.mrb[0].mxu0 %v491
        %v3159 = vpop.f32.mrb[0].mxu0
        %v3160 = vadd.f32 %v2933, %v3159
        %v3161 = vpop.f32.mrb[0].mxu0
        %v3162 = vadd.f32 %v2935, %v3161
        %3163 = vmatprep.mubr.f32.mxu0 %v1627
        %3164 = vmatmul.mubr.f32.gmra.mrb[0].mxu0 %v505
        %v3165 = vpop.f32.mrb[0].mxu0
        %v3166 = vadd.f32 %v2939, %v3165
        %v3167 = vpop.f32.mrb[0].mxu0
        %v3168 = vadd.f32 %v2941, %v3167
        %3169 = vmatprep.mubr.f32.mxu0 %v1630
        %3170 = vmatmul.mubr.f32.gmra.mrb[0].mxu0 %v519
        %v3171 = vpop.f32.mrb[0].mxu0
        %v3172 = vadd.f32 %v2945, %v3171
        %v3173 = vpop.f32.mrb[0].mxu0
        %v3174 = vadd.f32 %v2947, %v3173
        %3175 = vmatprep.mubr.f32.mxu0 %v1633
        %3176 = vmatmul.mubr.f32.gmra.mrb[0].mxu0 %v533
        %v3177 = vpop.f32.mrb[0].mxu0
        %v3178 = vadd.f32 %v2951, %v3177
        %v3179 = vpop.f32.mrb[0].mxu0
        %v3180 = vadd.f32 %v2953, %v3179
        %3181 = vmatprep.mubr.f32.mxu0 %v1636
        %3182 = vmatmul.mubr.f32.gmra.mrb[0].mxu0 %v547
        %v3183 = vpop.f32.mrb[0].mxu0
        %v3184 = vadd.f32 %v2957, %v3183
        %v3185 = vpop.f32.mrb[0].mxu0
        %v3186 = vadd.f32 %v2959, %v3185
        %3187 = vmatprep.mubr.f32.mxu0 %v1639
        %3188 = vmatmul.mubr.f32.gmra.mrb[0].mxu0 %v561
        %v3189 = vpop.f32.mrb[0].mxu0
        %v3190 = vadd.f32 %v2963, %v3189
        %v3191 = vpop.f32.mrb[0].mxu0
        %v3192 = vadd.f32 %v2965, %v3191
        %3193 = vmatprep.mubr.f32.mxu0 %v1642
        %3194 = vmatmul.mubr.f32.gmra.mrb[0].mxu0 %v575
        %v3195 = vpop.f32.mrb[0].mxu0
        %v3196 = vadd.f32 %v2969, %v3195
        %v3197 = vpop.f32.mrb[0].mxu0
        %v3198 = vadd.f32 %v2971, %v3197
        %3199 = vmatprep.mubr.f32.mxu0 %v1645
        %3200 = vmatmul.mubr.f32.gmra.mrb[0].mxu0 %v589
        %v3201 = vpop.f32.mrb[0].mxu0
        %v3202 = vadd.f32 %v2975, %v3201
        %v3203 = vpop.f32.mrb[0].mxu0
        %v3204 = vadd.f32 %v2977, %v3203
        %3205 = vmatprep.mubr.f32.mxu0 %v1648
        %3206 = vmatmul.mubr.f32.gmra.mrb[0].mxu0 %v603
        %v3207 = vpop.f32.mrb[0].mxu0
        %v3208 = vadd.f32 %v2981, %v3207
        %v3209 = vpop.f32.mrb[0].mxu0
        %v3210 = vadd.f32 %v2983, %v3209
        %3211 = vmatprep.mubr.f32.mxu0 %v1651
        %3212 = vmatmul.mubr.f32.gmra.mrb[0].mxu0 %v617
        %v3213 = vpop.f32.mrb[0].mxu0
        %v3214 = vadd.f32 %v2987, %v3213
        %v3215 = vpop.f32.mrb[0].mxu0
        %v3216 = vadd.f32 %v2989, %v3215
        %3217 = vmatprep.mubr.f32.mxu0 %v1654
        %3218 = vmatmul.mubr.f32.gmra.mrb[0].mxu0 %v631
        %v3219 = vpop.f32.mrb[0].mxu0
        %v3220 = vadd.f32 %v2993, %v3219
        %v3221 = vpop.f32.mrb[0].mxu0
        %v3222 = vadd.f32 %v2995, %v3221
        %3223 = vmatprep.mubr.f32.mxu0 %v1657
        %3224 = vmatmul.mubr.f32.gmra.mrb[0].mxu0 %v645
        %v3225 = vpop.f32.mrb[0].mxu0
        %v3226 = vadd.f32 %v2999, %v3225
        %v3227 = vpop.f32.mrb[0].mxu0
        %v3228 = vadd.f32 %v3001, %v3227
        %3229 = vmatprep.mubr.f32.mxu0 %v1660
        %3230 = vmatmul.mubr.f32.gmra.mrb[0].mxu0 %v659
        %v3231 = vpop.f32.mrb[0].mxu0
        %v3232 = vadd.f32 %v3005, %v3231
        %v3233 = vpop.f32.mrb[0].mxu0
        %v3234 = vadd.f32 %v3007, %v3233
        %3235 = vmatprep.mubr.f32.mxu0 %v1663
        %3236 = vmatmul.mubr.f32.gmra.mrb[0].mxu0 %v673
        %v3237 = vpop.f32.mrb[0].mxu0
        %v3238 = vadd.f32 %v3011, %v3237
        %v3239 = vpop.f32.mrb[0].mxu0
        %v3240 = vadd.f32 %v3013, %v3239
        %3241 = vmatprep.mubr.f32.mxu0 %v1666
        %3242 = vmatmul.mubr.f32.gmra.mrb[0].mxu0 %v687
        %v3243 = vpop.f32.mrb[0].mxu0
        %v3244 = vadd.f32 %v3017, %v3243
        %v3245 = vpop.f32.mrb[0].mxu0
        %v3246 = vadd.f32 %v3019, %v3245
        %3247 = vmatprep.mubr.f32.mxu0 %v1669
        %3248 = vmatmul.mubr.f32.gmra.mrb[0].mxu0 %v701
        %v3249 = vpop.f32.mrb[0].mxu0
        %v3250 = vadd.f32 %v3023, %v3249
        %v3251 = vpop.f32.mrb[0].mxu0
        %v3252 = vadd.f32 %v3025, %v3251
        %3253 = vmatprep.mubr.f32.mxu0 %v1672
        %3254 = vmatmul.mubr.f32.gmra.mrb[0].mxu0 %v715
        %v3255 = vpop.f32.mrb[0].mxu0
        %v3256 = vadd.f32 %v3029, %v3255
        %v3257 = vpop.f32.mrb[0].mxu0
        %v3258 = vadd.f32 %v3031, %v3257
        %3259 = vmatprep.mubr.f32.mxu0 %v1675
        %3260 = vmatmul.mubr.f32.gmra.mrb[0].mxu0 %v729
        %v3261 = vpop.f32.mrb[0].mxu0
        %v3262 = vadd.f32 %v3035, %v3261
        %v3263 = vpop.f32.mrb[0].mxu0
        %v3264 = vadd.f32 %v3037, %v3263
        %3265 = vdwg.mxu0
        %3266 = vmatprep.subr.mxu0 %v734
        %3267 = vmatpush1.msra.mxu0 %v733
        %3268 = vmatprep.subr.mxu0 %v738
        %3269 = vmatpush1.msra.mxu0 %v737
        %3270 = vmatprep.subr.mxu0 %v742
        %3271 = vmatpush1.msra.mxu0 %v741
        %3272 = vmatprep.subr.mxu0 %v746
        %3273 = vmatpush1.msra.mxu0 %v745
        %3274 = vmatprep.subr.mxu0 %v750
        %3275 = vmatpush1.msra.mxu0 %v749
        %3276 = vmatprep.subr.mxu0 %v754
        %3277 = vmatpush1.msra.mxu0 %v753
        %3278 = vmatprep.subr.mxu0 %v758
        %3279 = vmatpush1.msra.mxu0 %v757
        %3280 = vmatprep.subr.mxu0 %v762
        %3281 = vmatpush1.msra.mxu0 %v761
        %3282 = vmatprep.subr.mxu0 %v766
        %3283 = vmatpush1.msra.mxu0 %v765
        %3284 = vmatprep.subr.mxu0 %v770
        %3285 = vmatpush1.msra.mxu0 %v769
        %3286 = vmatprep.subr.mxu0 %v774
        %3287 = vmatpush1.msra.mxu0 %v773
        %3288 = vmatprep.subr.mxu0 %v778
        %3289 = vmatpush1.msra.mxu0 %v777
        %3290 = vmatprep.subr.mxu0 %v782
        %3291 = vmatpush1.msra.mxu0 %v781
        %3292 = vmatprep.subr.mxu0 %v786
        %3293 = vmatpush1.msra.mxu0 %v785
        %3294 = vmatprep.subr.mxu0 %v790
        %3295 = vmatpush1.msra.mxu0 %v789
        %3296 = vmatprep.subr.mxu0 %v794
        %3297 = vmatpush1.msra.mxu0 %v793
        %3298 = vmatprep.subr.mxu0 %v798
        %3299 = vmatpush1.msra.mxu0 %v797
        %3300 = vmatprep.subr.mxu0 %v802
        %3301 = vmatpush1.msra.mxu0 %v801
        %3302 = vmatprep.subr.mxu0 %v806
        %3303 = vmatpush1.msra.mxu0 %v805
        %3304 = vmatprep.subr.mxu0 %v810
        %3305 = vmatpush1.msra.mxu0 %v809
        %3306 = vmatprep.subr.mxu0 %v814
        %3307 = vmatpush1.msra.mxu0 %v813
        %3308 = vmatprep.subr.mxu0 %v818
        %3309 = vmatpush1.msra.mxu0 %v817
        %3310 = vmatprep.subr.mxu0 %v822
        %3311 = vmatpush1.msra.mxu0 %v821
        %3312 = vmatprep.subr.mxu0 %v826
        %3313 = vmatpush1.msra.mxu0 %v825
        %3314 = vmatprep.subr.mxu0 %v830
        %3315 = vmatpush1.msra.mxu0 %v829
        %3316 = vmatprep.subr.mxu0 %v834
        %3317 = vmatpush1.msra.mxu0 %v833
        %3318 = vmatprep.subr.mxu0 %v838
        %3319 = vmatpush1.msra.mxu0 %v837
        %3320 = vmatprep.subr.mxu0 %v842
        %3321 = vmatpush1.msra.mxu0 %v841
        %3322 = vmatprep.subr.mxu0 %v846
        %3323 = vmatpush1.msra.mxu0 %v845
        %3324 = vmatprep.subr.mxu0 %v850
        %3325 = vmatpush1.msra.mxu0 %v849
        %3326 = vmatprep.subr.mxu0 %v854
        %3327 = vmatpush1.msra.mxu0 %v853
        %3328 = vmatprep.subr.mxu0 %v858
        %3329 = vmatpush1.msra.mxu0 %v857
        %3330 = vmatprep.mubr.f32.mxu0 %v354
        %3331 = vmatmul.mubr.f32.gmra.mrb[0].mxu0 %v353
        %v3332 = vpop.f32.mrb[0].mxu0
        %v3333 = vadd.f32 0.0, %v3332
        %v3334 = vpop.f32.mrb[0].mxu0
        %v3335 = vadd.f32 0.0, %v3334
        %3336 = vmatprep.mubr.f32.mxu0 %v368
        %3337 = vmatmul.mubr.f32.gmra.mrb[0].mxu0 %v367
        %v3338 = vpop.f32.mrb[0].mxu0
        %v3339 = vadd.f32 0.0, %v3338
        %v3340 = vpop.f32.mrb[0].mxu0
        %v3341 = vadd.f32 0.0, %v3340
        %3342 = vmatprep.mubr.f32.mxu0 %v382
        %3343 = vmatmul.mubr.f32.gmra.mrb[0].mxu0 %v381
        %v3344 = vpop.f32.mrb[0].mxu0
        %v3345 = vadd.f32 0.0, %v3344
        %v3346 = vpop.f32.mrb[0].mxu0
        %v3347 = vadd.f32 0.0, %v3346
        %3348 = vmatprep.mubr.f32.mxu0 %v396
        %3349 = vmatmul.mubr.f32.gmra.mrb[0].mxu0 %v395
        %v3350 = vpop.f32.mrb[0].mxu0
        %v3351 = vadd.f32 0.0, %v3350
        %v3352 = vpop.f32.mrb[0].mxu0
        %v3353 = vadd.f32 0.0, %v3352
        %3354 = vmatprep.mubr.f32.mxu0 %v410
        %3355 = vmatmul.mubr.f32.gmra.mrb[0].mxu0 %v409
        %v3356 = vpop.f32.mrb[0].mxu0
        %v3357 = vadd.f32 0.0, %v3356
        %v3358 = vpop.f32.mrb[0].mxu0
        %v3359 = vadd.f32 0.0, %v3358
        %3360 = vmatprep.mubr.f32.mxu0 %v424
        %3361 = vmatmul.mubr.f32.gmra.mrb[0].mxu0 %v423
        %v3362 = vpop.f32.mrb[0].mxu0
        %v3363 = vadd.f32 0.0, %v3362
        %v3364 = vpop.f32.mrb[0].mxu0
        %v3365 = vadd.f32 0.0, %v3364
        %3366 = vmatprep.mubr.f32.mxu0 %v438
        %3367 = vmatmul.mubr.f32.gmra.mrb[0].mxu0 %v437
        %v3368 = vpop.f32.mrb[0].mxu0
        %v3369 = vadd.f32 0.0, %v3368
        %v3370 = vpop.f32.mrb[0].mxu0
        %v3371 = vadd.f32 0.0, %v3370
        %3372 = vmatprep.mubr.f32.mxu0 %v452
        %3373 = vmatmul.mubr.f32.gmra.mrb[0].mxu0 %v451
        %v3374 = vpop.f32.mrb[0].mxu0
        %v3375 = vadd.f32 0.0, %v3374
        %v3376 = vpop.f32.mrb[0].mxu0
        %v3377 = vadd.f32 0.0, %v3376
        %3378 = vmatprep.mubr.f32.mxu0 %v466
        %3379 = vmatmul.mubr.f32.gmra.mrb[0].mxu0 %v465
        %v3380 = vpop.f32.mrb[0].mxu0
        %v3381 = vadd.f32 0.0, %v3380
        %v3382 = vpop.f32.mrb[0].mxu0
        %v3383 = vadd.f32 0.0, %v3382
        %3384 = vmatprep.mubr.f32.mxu0 %v480
        %3385 = vmatmul.mubr.f32.gmra.mrb[0].mxu0 %v479
        %v3386 = vpop.f32.mrb[0].mxu0
        %v3387 = vadd.f32 0.0, %v3386
        %v3388 = vpop.f32.mrb[0].mxu0
        %v3389 = vadd.f32 0.0, %v3388
        %3390 = vmatprep.mubr.f32.mxu0 %v494
        %3391 = vmatmul.mubr.f32.gmra.mrb[0].mxu0 %v493
        %v3392 = vpop.f32.mrb[0].mxu0
        %v3393 = vadd.f32 0.0, %v3392
        %v3394 = vpop.f32.mrb[0].mxu0
        %v3395 = vadd.f32 0.0, %v3394
        %3396 = vmatprep.mubr.f32.mxu0 %v508
        %3397 = vmatmul.mubr.f32.gmra.mrb[0].mxu0 %v507
        %v3398 = vpop.f32.mrb[0].mxu0
        %v3399 = vadd.f32 0.0, %v3398
        %v3400 = vpop.f32.mrb[0].mxu0
        %v3401 = vadd.f32 0.0, %v3400
        %3402 = vmatprep.mubr.f32.mxu0 %v522
        %3403 = vmatmul.mubr.f32.gmra.mrb[0].mxu0 %v521
        %v3404 = vpop.f32.mrb[0].mxu0
        %v3405 = vadd.f32 0.0, %v3404
        %v3406 = vpop.f32.mrb[0].mxu0
        %v3407 = vadd.f32 0.0, %v3406
        %3408 = vmatprep.mubr.f32.mxu0 %v536
        %3409 = vmatmul.mubr.f32.gmra.mrb[0].mxu0 %v535
        %v3410 = vpop.f32.mrb[0].mxu0
        %v3411 = vadd.f32 0.0, %v3410
        %v3412 = vpop.f32.mrb[0].mxu0
        %v3413 = vadd.f32 0.0, %v3412
        %3414 = vmatprep.mubr.f32.mxu0 %v550
        %3415 = vmatmul.mubr.f32.gmra.mrb[0].mxu0 %v549
        %v3416 = vpop.f32.mrb[0].mxu0
        %v3417 = vadd.f32 0.0, %v3416
        %v3418 = vpop.f32.mrb[0].mxu0
        %v3419 = vadd.f32 0.0, %v3418
        %3420 = vmatprep.mubr.f32.mxu0 %v564
        %3421 = vmatmul.mubr.f32.gmra.mrb[0].mxu0 %v563
        %v3422 = vpop.f32.mrb[0].mxu0
        %v3423 = vadd.f32 0.0, %v3422
        %v3424 = vpop.f32.mrb[0].mxu0
        %v3425 = vadd.f32 0.0, %v3424
        %3426 = vmatprep.mubr.f32.mxu0 %v578
        %3427 = vmatmul.mubr.f32.gmra.mrb[0].mxu0 %v577
        %v3428 = vpop.f32.mrb[0].mxu0
        %v3429 = vadd.f32 0.0, %v3428
        %v3430 = vpop.f32.mrb[0].mxu0
        %v3431 = vadd.f32 0.0, %v3430
        %3432 = vmatprep.mubr.f32.mxu0 %v592
        %3433 = vmatmul.mubr.f32.gmra.mrb[0].mxu0 %v591
        %v3434 = vpop.f32.mrb[0].mxu0
        %v3435 = vadd.f32 0.0, %v3434
        %v3436 = vpop.f32.mrb[0].mxu0
        %v3437 = vadd.f32 0.0, %v3436
        %3438 = vmatprep.mubr.f32.mxu0 %v606
        %3439 = vmatmul.mubr.f32.gmra.mrb[0].mxu0 %v605
        %v3440 = vpop.f32.mrb[0].mxu0
        %v3441 = vadd.f32 0.0, %v3440
        %v3442 = vpop.f32.mrb[0].mxu0
        %v3443 = vadd.f32 0.0, %v3442
        %3444 = vmatprep.mubr.f32.mxu0 %v620
        %3445 = vmatmul.mubr.f32.gmra.mrb[0].mxu0 %v619
        %v3446 = vpop.f32.mrb[0].mxu0
        %v3447 = vadd.f32 0.0, %v3446
        %v3448 = vpop.f32.mrb[0].mxu0
        %v3449 = vadd.f32 0.0, %v3448
        %3450 = vmatprep.mubr.f32.mxu0 %v634
        %3451 = vmatmul.mubr.f32.gmra.mrb[0].mxu0 %v633
        %v3452 = vpop.f32.mrb[0].mxu0
        %v3453 = vadd.f32 0.0, %v3452
        %v3454 = vpop.f32.mrb[0].mxu0
        %v3455 = vadd.f32 0.0, %v3454
        %3456 = vmatprep.mubr.f32.mxu0 %v648
        %3457 = vmatmul.mubr.f32.gmra.mrb[0].mxu0 %v647
        %v3458 = vpop.f32.mrb[0].mxu0
        %v3459 = vadd.f32 0.0, %v3458
        %v3460 = vpop.f32.mrb[0].mxu0
        %v3461 = vadd.f32 0.0, %v3460
        %3462 = vmatprep.mubr.f32.mxu0 %v662
        %3463 = vmatmul.mubr.f32.gmra.mrb[0].mxu0 %v661
        %v3464 = vpop.f32.mrb[0].mxu0
        %v3465 = vadd.f32 0.0, %v3464
        %v3466 = vpop.f32.mrb[0].mxu0
        %v3467 = vadd.f32 0.0, %v3466
        %3468 = vmatprep.mubr.f32.mxu0 %v676
        %3469 = vmatmul.mubr.f32.gmra.mrb[0].mxu0 %v675
        %v3470 = vpop.f32.mrb[0].mxu0
        %v3471 = vadd.f32 0.0, %v3470
        %v3472 = vpop.f32.mrb[0].mxu0
        %v3473 = vadd.f32 0.0, %v3472
        %3474 = vmatprep.mubr.f32.mxu0 %v690
        %3475 = vmatmul.mubr.f32.gmra.mrb[0].mxu0 %v689
        %v3476 = vpop.f32.mrb[0].mxu0
        %v3477 = vadd.f32 0.0, %v3476
        %v3478 = vpop.f32.mrb[0].mxu0
        %v3479 = vadd.f32 0.0, %v3478
        %3480 = vmatprep.mubr.f32.mxu0 %v704
        %3481 = vmatmul.mubr.f32.gmra.mrb[0].mxu0 %v703
        %v3482 = vpop.f32.mrb[0].mxu0
        %v3483 = vadd.f32 0.0, %v3482
        %v3484 = vpop.f32.mrb[0].mxu0
        %v3485 = vadd.f32 0.0, %v3484
        %3486 = vmatprep.mubr.f32.mxu0 %v718
        %3487 = vmatmul.mubr.f32.gmra.mrb[0].mxu0 %v717
        %v3488 = vpop.f32.mrb[0].mxu0
        %v3489 = vadd.f32 0.0, %v3488
        %v3490 = vpop.f32.mrb[0].mxu0
        %v3491 = vadd.f32 0.0, %v3490
        %3492 = vdwg.mxu0
        %3493 = vmatprep.subr.mxu0 %v862
        %3494 = vmatpush1.msra.mxu0 %v861
        %3495 = vmatprep.subr.mxu0 %v866
        %3496 = vmatpush1.msra.mxu0 %v865
        %3497 = vmatprep.subr.mxu0 %v870
        %3498 = vmatpush1.msra.mxu0 %v869
        %3499 = vmatprep.subr.mxu0 %v874
        %3500 = vmatpush1.msra.mxu0 %v873
        %3501 = vmatprep.subr.mxu0 %v878
        %3502 = vmatpush1.msra.mxu0 %v877
        %3503 = vmatprep.subr.mxu0 %v882
        %3504 = vmatpush1.msra.mxu0 %v881
        %3505 = vmatprep.subr.mxu0 %v886
        %3506 = vmatpush1.msra.mxu0 %v885
        %3507 = vmatprep.subr.mxu0 %v890
        %3508 = vmatpush1.msra.mxu0 %v889
        %3509 = vmatprep.subr.mxu0 %v894
        %3510 = vmatpush1.msra.mxu0 %v893
        %3511 = vmatprep.subr.mxu0 %v898
        %3512 = vmatpush1.msra.mxu0 %v897
        %3513 = vmatprep.subr.mxu0 %v902
        %3514 = vmatpush1.msra.mxu0 %v901
        %3515 = vmatprep.subr.mxu0 %v906
        %3516 = vmatpush1.msra.mxu0 %v905
        %3517 = vmatprep.subr.mxu0 %v910
        %3518 = vmatpush1.msra.mxu0 %v909
        %3519 = vmatprep.subr.mxu0 %v914
        %3520 = vmatpush1.msra.mxu0 %v913
        %3521 = vmatprep.subr.mxu0 %v918
        %3522 = vmatpush1.msra.mxu0 %v917
        %3523 = vmatprep.subr.mxu0 %v922
        %3524 = vmatpush1.msra.mxu0 %v921
        %3525 = vmatprep.subr.mxu0 %v926
        %3526 = vmatpush1.msra.mxu0 %v925
        %3527 = vmatprep.subr.mxu0 %v930
        %3528 = vmatpush1.msra.mxu0 %v929
        %3529 = vmatprep.subr.mxu0 %v934
        %3530 = vmatpush1.msra.mxu0 %v933
        %3531 = vmatprep.subr.mxu0 %v938
        %3532 = vmatpush1.msra.mxu0 %v937
        %3533 = vmatprep.subr.mxu0 %v942
        %3534 = vmatpush1.msra.mxu0 %v941
        %3535 = vmatprep.subr.mxu0 %v946
        %3536 = vmatpush1.msra.mxu0 %v945
        %3537 = vmatprep.subr.mxu0 %v950
        %3538 = vmatpush1.msra.mxu0 %v949
        %3539 = vmatprep.subr.mxu0 %v954
        %3540 = vmatpush1.msra.mxu0 %v953
        %3541 = vmatprep.subr.mxu0 %v958
        %3542 = vmatpush1.msra.mxu0 %v957
        %3543 = vmatprep.subr.mxu0 %v962
        %3544 = vmatpush1.msra.mxu0 %v961
        %3545 = vmatprep.subr.mxu0 %v966
        %3546 = vmatpush1.msra.mxu0 %v965
        %3547 = vmatprep.subr.mxu0 %v970
        %3548 = vmatpush1.msra.mxu0 %v969
        %3549 = vmatprep.subr.mxu0 %v974
        %3550 = vmatpush1.msra.mxu0 %v973
        %3551 = vmatprep.subr.mxu0 %v978
        %3552 = vmatpush1.msra.mxu0 %v977
        %3553 = vmatprep.subr.mxu0 %v982
        %3554 = vmatpush1.msra.mxu0 %v981
        %3555 = vmatprep.subr.mxu0 %v986
        %3556 = vmatpush1.msra.mxu0 %v985
        %3557 = vmatprep.mubr.f32.mxu0 %v356
        %3558 = vmatmul.mubr.f32.gmra.mrb[0].mxu0 %v355
        %v3559 = vpop.f32.mrb[0].mxu0
        %v3560 = vadd.f32 %v3333, %v3559
        %v3561 = vpop.f32.mrb[0].mxu0
        %v3562 = vadd.f32 %v3335, %v3561
        %3563 = vmatprep.mubr.f32.mxu0 %v370
        %3564 = vmatmul.mubr.f32.gmra.mrb[0].mxu0 %v369
        %v3565 = vpop.f32.mrb[0].mxu0
        %v3566 = vadd.f32 %v3339, %v3565
        %v3567 = vpop.f32.mrb[0].mxu0
        %v3568 = vadd.f32 %v3341, %v3567
        %3569 = vmatprep.mubr.f32.mxu0 %v384
        %3570 = vmatmul.mubr.f32.gmra.mrb[0].mxu0 %v383
        %v3571 = vpop.f32.mrb[0].mxu0
        %v3572 = vadd.f32 %v3345, %v3571
        %v3573 = vpop.f32.mrb[0].mxu0
        %v3574 = vadd.f32 %v3347, %v3573
        %3575 = vmatprep.mubr.f32.mxu0 %v398
        %3576 = vmatmul.mubr.f32.gmra.mrb[0].mxu0 %v397
        %v3577 = vpop.f32.mrb[0].mxu0
        %v3578 = vadd.f32 %v3351, %v3577
        %v3579 = vpop.f32.mrb[0].mxu0
        %v3580 = vadd.f32 %v3353, %v3579
        %3581 = vmatprep.mubr.f32.mxu0 %v412
        %3582 = vmatmul.mubr.f32.gmra.mrb[0].mxu0 %v411
        %v3583 = vpop.f32.mrb[0].mxu0
        %v3584 = vadd.f32 %v3357, %v3583
        %v3585 = vpop.f32.mrb[0].mxu0
        %v3586 = vadd.f32 %v3359, %v3585
        %3587 = vmatprep.mubr.f32.mxu0 %v426
        %3588 = vmatmul.mubr.f32.gmra.mrb[0].mxu0 %v425
        %v3589 = vpop.f32.mrb[0].mxu0
        %v3590 = vadd.f32 %v3363, %v3589
        %v3591 = vpop.f32.mrb[0].mxu0
        %v3592 = vadd.f32 %v3365, %v3591
        %3593 = vmatprep.mubr.f32.mxu0 %v440
        %3594 = vmatmul.mubr.f32.gmra.mrb[0].mxu0 %v439
        %v3595 = vpop.f32.mrb[0].mxu0
        %v3596 = vadd.f32 %v3369, %v3595
        %v3597 = vpop.f32.mrb[0].mxu0
        %v3598 = vadd.f32 %v3371, %v3597
        %3599 = vmatprep.mubr.f32.mxu0 %v454
        %3600 = vmatmul.mubr.f32.gmra.mrb[0].mxu0 %v453
        %v3601 = vpop.f32.mrb[0].mxu0
        %v3602 = vadd.f32 %v3375, %v3601
        %v3603 = vpop.f32.mrb[0].mxu0
        %v3604 = vadd.f32 %v3377, %v3603
        %3605 = vmatprep.mubr.f32.mxu0 %v468
        %3606 = vmatmul.mubr.f32.gmra.mrb[0].mxu0 %v467
        %v3607 = vpop.f32.mrb[0].mxu0
        %v3608 = vadd.f32 %v3381, %v3607
        %v3609 = vpop.f32.mrb[0].mxu0
        %v3610 = vadd.f32 %v3383, %v3609
        %3611 = vmatprep.mubr.f32.mxu0 %v482
        %3612 = vmatmul.mubr.f32.gmra.mrb[0].mxu0 %v481
        %v3613 = vpop.f32.mrb[0].mxu0
        %v3614 = vadd.f32 %v3387, %v3613
        %v3615 = vpop.f32.mrb[0].mxu0
        %v3616 = vadd.f32 %v3389, %v3615
        %3617 = vmatprep.mubr.f32.mxu0 %v496
        %3618 = vmatmul.mubr.f32.gmra.mrb[0].mxu0 %v495
        %v3619 = vpop.f32.mrb[0].mxu0
        %v3620 = vadd.f32 %v3393, %v3619
        %v3621 = vpop.f32.mrb[0].mxu0
        %v3622 = vadd.f32 %v3395, %v3621
        %3623 = vmatprep.mubr.f32.mxu0 %v510
        %3624 = vmatmul.mubr.f32.gmra.mrb[0].mxu0 %v509
        %v3625 = vpop.f32.mrb[0].mxu0
        %v3626 = vadd.f32 %v3399, %v3625
        %v3627 = vpop.f32.mrb[0].mxu0
        %v3628 = vadd.f32 %v3401, %v3627
        %3629 = vmatprep.mubr.f32.mxu0 %v524
        %3630 = vmatmul.mubr.f32.gmra.mrb[0].mxu0 %v523
        %v3631 = vpop.f32.mrb[0].mxu0
        %v3632 = vadd.f32 %v3405, %v3631
        %v3633 = vpop.f32.mrb[0].mxu0
        %v3634 = vadd.f32 %v3407, %v3633
        %3635 = vmatprep.mubr.f32.mxu0 %v538
        %3636 = vmatmul.mubr.f32.gmra.mrb[0].mxu0 %v537
        %v3637 = vpop.f32.mrb[0].mxu0
        %v3638 = vadd.f32 %v3411, %v3637
        %v3639 = vpop.f32.mrb[0].mxu0
        %v3640 = vadd.f32 %v3413, %v3639
        %3641 = vmatprep.mubr.f32.mxu0 %v552
        %3642 = vmatmul.mubr.f32.gmra.mrb[0].mxu0 %v551
        %v3643 = vpop.f32.mrb[0].mxu0
        %v3644 = vadd.f32 %v3417, %v3643
        %v3645 = vpop.f32.mrb[0].mxu0
        %v3646 = vadd.f32 %v3419, %v3645
        %3647 = vmatprep.mubr.f32.mxu0 %v566
        %3648 = vmatmul.mubr.f32.gmra.mrb[0].mxu0 %v565
        %v3649 = vpop.f32.mrb[0].mxu0
        %v3650 = vadd.f32 %v3423, %v3649
        %v3651 = vpop.f32.mrb[0].mxu0
        %v3652 = vadd.f32 %v3425, %v3651
        %3653 = vmatprep.mubr.f32.mxu0 %v580
        %3654 = vmatmul.mubr.f32.gmra.mrb[0].mxu0 %v579
        %v3655 = vpop.f32.mrb[0].mxu0
        %v3656 = vadd.f32 %v3429, %v3655
        %v3657 = vpop.f32.mrb[0].mxu0
        %v3658 = vadd.f32 %v3431, %v3657
        %3659 = vmatprep.mubr.f32.mxu0 %v594
        %3660 = vmatmul.mubr.f32.gmra.mrb[0].mxu0 %v593
        %v3661 = vpop.f32.mrb[0].mxu0
        %v3662 = vadd.f32 %v3435, %v3661
        %v3663 = vpop.f32.mrb[0].mxu0
        %v3664 = vadd.f32 %v3437, %v3663
        %3665 = vmatprep.mubr.f32.mxu0 %v608
        %3666 = vmatmul.mubr.f32.gmra.mrb[0].mxu0 %v607
        %v3667 = vpop.f32.mrb[0].mxu0
        %v3668 = vadd.f32 %v3441, %v3667
        %v3669 = vpop.f32.mrb[0].mxu0
        %v3670 = vadd.f32 %v3443, %v3669
        %3671 = vmatprep.mubr.f32.mxu0 %v622
        %3672 = vmatmul.mubr.f32.gmra.mrb[0].mxu0 %v621
        %v3673 = vpop.f32.mrb[0].mxu0
        %v3674 = vadd.f32 %v3447, %v3673
        %v3675 = vpop.f32.mrb[0].mxu0
        %v3676 = vadd.f32 %v3449, %v3675
        %3677 = vmatprep.mubr.f32.mxu0 %v636
        %3678 = vmatmul.mubr.f32.gmra.mrb[0].mxu0 %v635
        %v3679 = vpop.f32.mrb[0].mxu0
        %v3680 = vadd.f32 %v3453, %v3679
        %v3681 = vpop.f32.mrb[0].mxu0
        %v3682 = vadd.f32 %v3455, %v3681
        %3683 = vmatprep.mubr.f32.mxu0 %v650
        %3684 = vmatmul.mubr.f32.gmra.mrb[0].mxu0 %v649
        %v3685 = vpop.f32.mrb[0].mxu0
        %v3686 = vadd.f32 %v3459, %v3685
        %v3687 = vpop.f32.mrb[0].mxu0
        %v3688 = vadd.f32 %v3461, %v3687
        %3689 = vmatprep.mubr.f32.mxu0 %v664
        %3690 = vmatmul.mubr.f32.gmra.mrb[0].mxu0 %v663
        %v3691 = vpop.f32.mrb[0].mxu0
        %v3692 = vadd.f32 %v3465, %v3691
        %v3693 = vpop.f32.mrb[0].mxu0
        %v3694 = vadd.f32 %v3467, %v3693
        %3695 = vmatprep.mubr.f32.mxu0 %v678
        %3696 = vmatmul.mubr.f32.gmra.mrb[0].mxu0 %v677
        %v3697 = vpop.f32.mrb[0].mxu0
        %v3698 = vadd.f32 %v3471, %v3697
        %v3699 = vpop.f32.mrb[0].mxu0
        %v3700 = vadd.f32 %v3473, %v3699
        %3701 = vmatprep.mubr.f32.mxu0 %v692
        %3702 = vmatmul.mubr.f32.gmra.mrb[0].mxu0 %v691
        %v3703 = vpop.f32.mrb[0].mxu0
        %v3704 = vadd.f32 %v3477, %v3703
        %v3705 = vpop.f32.mrb[0].mxu0
        %v3706 = vadd.f32 %v3479, %v3705
        %3707 = vmatprep.mubr.f32.mxu0 %v706
        %3708 = vmatmul.mubr.f32.gmra.mrb[0].mxu0 %v705
        %v3709 = vpop.f32.mrb[0].mxu0
        %v3710 = vadd.f32 %v3483, %v3709
        %v3711 = vpop.f32.mrb[0].mxu0
        %v3712 = vadd.f32 %v3485, %v3711
        %3713 = vmatprep.mubr.f32.mxu0 %v720
        %3714 = vmatmul.mubr.f32.gmra.mrb[0].mxu0 %v719
        %v3715 = vpop.f32.mrb[0].mxu0
        %v3716 = vadd.f32 %v3489, %v3715
        %v3717 = vpop.f32.mrb[0].mxu0
        %v3718 = vadd.f32 %v3491, %v3717
        %3719 = vdwg.mxu0
        %3720 = vmatprep.subr.mxu0 %v990
        %3721 = vmatpush1.msra.mxu0 %v989
        %3722 = vmatprep.subr.mxu0 %v994
        %3723 = vmatpush1.msra.mxu0 %v993
        %3724 = vmatprep.subr.mxu0 %v998
        %3725 = vmatpush1.msra.mxu0 %v997
        %3726 = vmatprep.subr.mxu0 %v1002
        %3727 = vmatpush1.msra.mxu0 %v1001
        %3728 = vmatprep.subr.mxu0 %v1006
        %3729 = vmatpush1.msra.mxu0 %v1005
        %3730 = vmatprep.subr.mxu0 %v1010
        %3731 = vmatpush1.msra.mxu0 %v1009
        %3732 = vmatprep.subr.mxu0 %v1014
        %3733 = vmatpush1.msra.mxu0 %v1013
        %3734 = vmatprep.subr.mxu0 %v1018
        %3735 = vmatpush1.msra.mxu0 %v1017
        %3736 = vmatprep.subr.mxu0 %v1022
        %3737 = vmatpush1.msra.mxu0 %v1021
        %3738 = vmatprep.subr.mxu0 %v1026
        %3739 = vmatpush1.msra.mxu0 %v1025
        %3740 = vmatprep.subr.mxu0 %v1030
        %3741 = vmatpush1.msra.mxu0 %v1029
        %3742 = vmatprep.subr.mxu0 %v1034
        %3743 = vmatpush1.msra.mxu0 %v1033
        %3744 = vmatprep.subr.mxu0 %v1038
        %3745 = vmatpush1.msra.mxu0 %v1037
        %3746 = vmatprep.subr.mxu0 %v1042
        %3747 = vmatpush1.msra.mxu0 %v1041
        %3748 = vmatprep.subr.mxu0 %v1046
        %3749 = vmatpush1.msra.mxu0 %v1045
        %3750 = vmatprep.subr.mxu0 %v1050
        %3751 = vmatpush1.msra.mxu0 %v1049
        %3752 = vmatprep.subr.mxu0 %v1054
        %3753 = vmatpush1.msra.mxu0 %v1053
        %3754 = vmatprep.subr.mxu0 %v1058
        %3755 = vmatpush1.msra.mxu0 %v1057
        %3756 = vmatprep.subr.mxu0 %v1062
        %3757 = vmatpush1.msra.mxu0 %v1061
        %3758 = vmatprep.subr.mxu0 %v1066
        %3759 = vmatpush1.msra.mxu0 %v1065
        %3760 = vmatprep.subr.mxu0 %v1070
        %3761 = vmatpush1.msra.mxu0 %v1069
        %3762 = vmatprep.subr.mxu0 %v1074
        %3763 = vmatpush1.msra.mxu0 %v1073
        %3764 = vmatprep.subr.mxu0 %v1078
        %3765 = vmatpush1.msra.mxu0 %v1077
        %3766 = vmatprep.subr.mxu0 %v1082
        %3767 = vmatpush1.msra.mxu0 %v1081
        %3768 = vmatprep.subr.mxu0 %v1086
        %3769 = vmatpush1.msra.mxu0 %v1085
        %3770 = vmatprep.subr.mxu0 %v1090
        %3771 = vmatpush1.msra.mxu0 %v1089
        %3772 = vmatprep.subr.mxu0 %v1094
        %3773 = vmatpush1.msra.mxu0 %v1093
        %3774 = vmatprep.subr.mxu0 %v1098
        %3775 = vmatpush1.msra.mxu0 %v1097
        %3776 = vmatprep.subr.mxu0 %v1102
        %3777 = vmatpush1.msra.mxu0 %v1101
        %3778 = vmatprep.subr.mxu0 %v1106
        %3779 = vmatpush1.msra.mxu0 %v1105
        %3780 = vmatprep.subr.mxu0 %v1110
        %3781 = vmatpush1.msra.mxu0 %v1109
        %3782 = vmatprep.subr.mxu0 %v1114
        %3783 = vmatpush1.msra.mxu0 %v1113
        %3784 = vmatprep.mubr.f32.mxu0 %v358
        %3785 = vmatmul.mubr.f32.gmra.mrb[0].mxu0 %v357
        %v3786 = vpop.f32.mrb[0].mxu0
        %v3787 = vadd.f32 %v3560, %v3786
        %v3788 = vpop.f32.mrb[0].mxu0
        %v3789 = vadd.f32 %v3562, %v3788
        %3790 = vmatprep.mubr.f32.mxu0 %v372
        %3791 = vmatmul.mubr.f32.gmra.mrb[0].mxu0 %v371
        %v3792 = vpop.f32.mrb[0].mxu0
        %v3793 = vadd.f32 %v3566, %v3792
        %v3794 = vpop.f32.mrb[0].mxu0
        %v3795 = vadd.f32 %v3568, %v3794
        %3796 = vmatprep.mubr.f32.mxu0 %v386
        %3797 = vmatmul.mubr.f32.gmra.mrb[0].mxu0 %v385
        %v3798 = vpop.f32.mrb[0].mxu0
        %v3799 = vadd.f32 %v3572, %v3798
        %v3800 = vpop.f32.mrb[0].mxu0
        %v3801 = vadd.f32 %v3574, %v3800
        %3802 = vmatprep.mubr.f32.mxu0 %v400
        %3803 = vmatmul.mubr.f32.gmra.mrb[0].mxu0 %v399
        %v3804 = vpop.f32.mrb[0].mxu0
        %v3805 = vadd.f32 %v3578, %v3804
        %v3806 = vpop.f32.mrb[0].mxu0
        %v3807 = vadd.f32 %v3580, %v3806
        %3808 = vmatprep.mubr.f32.mxu0 %v414
        %3809 = vmatmul.mubr.f32.gmra.mrb[0].mxu0 %v413
        %v3810 = vpop.f32.mrb[0].mxu0
        %v3811 = vadd.f32 %v3584, %v3810
        %v3812 = vpop.f32.mrb[0].mxu0
        %v3813 = vadd.f32 %v3586, %v3812
        %3814 = vmatprep.mubr.f32.mxu0 %v428
        %3815 = vmatmul.mubr.f32.gmra.mrb[0].mxu0 %v427
        %v3816 = vpop.f32.mrb[0].mxu0
        %v3817 = vadd.f32 %v3590, %v3816
        %v3818 = vpop.f32.mrb[0].mxu0
        %v3819 = vadd.f32 %v3592, %v3818
        %3820 = vmatprep.mubr.f32.mxu0 %v442
        %3821 = vmatmul.mubr.f32.gmra.mrb[0].mxu0 %v441
        %v3822 = vpop.f32.mrb[0].mxu0
        %v3823 = vadd.f32 %v3596, %v3822
        %v3824 = vpop.f32.mrb[0].mxu0
        %v3825 = vadd.f32 %v3598, %v3824
        %3826 = vmatprep.mubr.f32.mxu0 %v456
        %3827 = vmatmul.mubr.f32.gmra.mrb[0].mxu0 %v455
        %v3828 = vpop.f32.mrb[0].mxu0
        %v3829 = vadd.f32 %v3602, %v3828
        %v3830 = vpop.f32.mrb[0].mxu0
        %v3831 = vadd.f32 %v3604, %v3830
        %3832 = vmatprep.mubr.f32.mxu0 %v470
        %3833 = vmatmul.mubr.f32.gmra.mrb[0].mxu0 %v469
        %v3834 = vpop.f32.mrb[0].mxu0
        %v3835 = vadd.f32 %v3608, %v3834
        %v3836 = vpop.f32.mrb[0].mxu0
        %v3837 = vadd.f32 %v3610, %v3836
        %3838 = vmatprep.mubr.f32.mxu0 %v484
        %3839 = vmatmul.mubr.f32.gmra.mrb[0].mxu0 %v483
        %v3840 = vpop.f32.mrb[0].mxu0
        %v3841 = vadd.f32 %v3614, %v3840
        %v3842 = vpop.f32.mrb[0].mxu0
        %v3843 = vadd.f32 %v3616, %v3842
        %3844 = vmatprep.mubr.f32.mxu0 %v498
        %3845 = vmatmul.mubr.f32.gmra.mrb[0].mxu0 %v497
        %v3846 = vpop.f32.mrb[0].mxu0
        %v3847 = vadd.f32 %v3620, %v3846
        %v3848 = vpop.f32.mrb[0].mxu0
        %v3849 = vadd.f32 %v3622, %v3848
        %3850 = vmatprep.mubr.f32.mxu0 %v512
        %3851 = vmatmul.mubr.f32.gmra.mrb[0].mxu0 %v511
        %v3852 = vpop.f32.mrb[0].mxu0
        %v3853 = vadd.f32 %v3626, %v3852
        %v3854 = vpop.f32.mrb[0].mxu0
        %v3855 = vadd.f32 %v3628, %v3854
        %3856 = vmatprep.mubr.f32.mxu0 %v526
        %3857 = vmatmul.mubr.f32.gmra.mrb[0].mxu0 %v525
        %v3858 = vpop.f32.mrb[0].mxu0
        %v3859 = vadd.f32 %v3632, %v3858
        %v3860 = vpop.f32.mrb[0].mxu0
        %v3861 = vadd.f32 %v3634, %v3860
        %3862 = vmatprep.mubr.f32.mxu0 %v540
        %3863 = vmatmul.mubr.f32.gmra.mrb[0].mxu0 %v539
        %v3864 = vpop.f32.mrb[0].mxu0
        %v3865 = vadd.f32 %v3638, %v3864
        %v3866 = vpop.f32.mrb[0].mxu0
        %v3867 = vadd.f32 %v3640, %v3866
        %3868 = vmatprep.mubr.f32.mxu0 %v554
        %3869 = vmatmul.mubr.f32.gmra.mrb[0].mxu0 %v553
        %v3870 = vpop.f32.mrb[0].mxu0
        %v3871 = vadd.f32 %v3644, %v3870
        %v3872 = vpop.f32.mrb[0].mxu0
        %v3873 = vadd.f32 %v3646, %v3872
        %3874 = vmatprep.mubr.f32.mxu0 %v568
        %3875 = vmatmul.mubr.f32.gmra.mrb[0].mxu0 %v567
        %v3876 = vpop.f32.mrb[0].mxu0
        %v3877 = vadd.f32 %v3650, %v3876
        %v3878 = vpop.f32.mrb[0].mxu0
        %v3879 = vadd.f32 %v3652, %v3878
        %3880 = vmatprep.mubr.f32.mxu0 %v582
        %3881 = vmatmul.mubr.f32.gmra.mrb[0].mxu0 %v581
        %v3882 = vpop.f32.mrb[0].mxu0
        %v3883 = vadd.f32 %v3656, %v3882
        %v3884 = vpop.f32.mrb[0].mxu0
        %v3885 = vadd.f32 %v3658, %v3884
        %3886 = vmatprep.mubr.f32.mxu0 %v596
        %3887 = vmatmul.mubr.f32.gmra.mrb[0].mxu0 %v595
        %v3888 = vpop.f32.mrb[0].mxu0
        %v3889 = vadd.f32 %v3662, %v3888
        %v3890 = vpop.f32.mrb[0].mxu0
        %v3891 = vadd.f32 %v3664, %v3890
        %3892 = vmatprep.mubr.f32.mxu0 %v610
        %3893 = vmatmul.mubr.f32.gmra.mrb[0].mxu0 %v609
        %v3894 = vpop.f32.mrb[0].mxu0
        %v3895 = vadd.f32 %v3668, %v3894
        %v3896 = vpop.f32.mrb[0].mxu0
        %v3897 = vadd.f32 %v3670, %v3896
        %3898 = vmatprep.mubr.f32.mxu0 %v624
        %3899 = vmatmul.mubr.f32.gmra.mrb[0].mxu0 %v623
        %v3900 = vpop.f32.mrb[0].mxu0
        %v3901 = vadd.f32 %v3674, %v3900
        %v3902 = vpop.f32.mrb[0].mxu0
        %v3903 = vadd.f32 %v3676, %v3902
        %3904 = vmatprep.mubr.f32.mxu0 %v638
        %3905 = vmatmul.mubr.f32.gmra.mrb[0].mxu0 %v637
        %v3906 = vpop.f32.mrb[0].mxu0
        %v3907 = vadd.f32 %v3680, %v3906
        %v3908 = vpop.f32.mrb[0].mxu0
        %v3909 = vadd.f32 %v3682, %v3908
        %3910 = vmatprep.mubr.f32.mxu0 %v652
        %3911 = vmatmul.mubr.f32.gmra.mrb[0].mxu0 %v651
        %v3912 = vpop.f32.mrb[0].mxu0
        %v3913 = vadd.f32 %v3686, %v3912
        %v3914 = vpop.f32.mrb[0].mxu0
        %v3915 = vadd.f32 %v3688, %v3914
        %3916 = vmatprep.mubr.f32.mxu0 %v666
        %3917 = vmatmul.mubr.f32.gmra.mrb[0].mxu0 %v665
        %v3918 = vpop.f32.mrb[0].mxu0
        %v3919 = vadd.f32 %v3692, %v3918
        %v3920 = vpop.f32.mrb[0].mxu0
        %v3921 = vadd.f32 %v3694, %v3920
        %3922 = vmatprep.mubr.f32.mxu0 %v680
        %3923 = vmatmul.mubr.f32.gmra.mrb[0].mxu0 %v679
        %v3924 = vpop.f32.mrb[0].mxu0
        %v3925 = vadd.f32 %v3698, %v3924
        %v3926 = vpop.f32.mrb[0].mxu0
        %v3927 = vadd.f32 %v3700, %v3926
        %3928 = vmatprep.mubr.f32.mxu0 %v694
        %3929 = vmatmul.mubr.f32.gmra.mrb[0].mxu0 %v693
        %v3930 = vpop.f32.mrb[0].mxu0
        %v3931 = vadd.f32 %v3704, %v3930
        %v3932 = vpop.f32.mrb[0].mxu0
        %v3933 = vadd.f32 %v3706, %v3932
        %3934 = vmatprep.mubr.f32.mxu0 %v708
        %3935 = vmatmul.mubr.f32.gmra.mrb[0].mxu0 %v707
        %v3936 = vpop.f32.mrb[0].mxu0
        %v3937 = vadd.f32 %v3710, %v3936
        %v3938 = vpop.f32.mrb[0].mxu0
        %v3939 = vadd.f32 %v3712, %v3938
        %3940 = vmatprep.mubr.f32.mxu0 %v722
        %3941 = vmatmul.mubr.f32.gmra.mrb[0].mxu0 %v721
        %v3942 = vpop.f32.mrb[0].mxu0
        %v3943 = vadd.f32 %v3716, %v3942
        %v3944 = vpop.f32.mrb[0].mxu0
        %v3945 = vadd.f32 %v3718, %v3944
        %3946 = vdwg.mxu0
        %3947 = vmatprep.subr.mxu0 %v1118
        %3948 = vmatpush1.msra.mxu0 %v1117
        %3949 = vmatprep.subr.mxu0 %v1122
        %3950 = vmatpush1.msra.mxu0 %v1121
        %3951 = vmatprep.subr.mxu0 %v1126
        %3952 = vmatpush1.msra.mxu0 %v1125
        %3953 = vmatprep.subr.mxu0 %v1130
        %3954 = vmatpush1.msra.mxu0 %v1129
        %3955 = vmatprep.subr.mxu0 %v1134
        %3956 = vmatpush1.msra.mxu0 %v1133
        %3957 = vmatprep.subr.mxu0 %v1138
        %3958 = vmatpush1.msra.mxu0 %v1137
        %3959 = vmatprep.subr.mxu0 %v1142
        %3960 = vmatpush1.msra.mxu0 %v1141
        %3961 = vmatprep.subr.mxu0 %v1146
        %3962 = vmatpush1.msra.mxu0 %v1145
        %3963 = vmatprep.subr.mxu0 %v1150
        %3964 = vmatpush1.msra.mxu0 %v1149
        %3965 = vmatprep.subr.mxu0 %v1154
        %3966 = vmatpush1.msra.mxu0 %v1153
        %3967 = vmatprep.subr.mxu0 %v1158
        %3968 = vmatpush1.msra.mxu0 %v1157
        %3969 = vmatprep.subr.mxu0 %v1162
        %3970 = vmatpush1.msra.mxu0 %v1161
        %3971 = vmatprep.subr.mxu0 %v1166
        %3972 = vmatpush1.msra.mxu0 %v1165
        %3973 = vmatprep.subr.mxu0 %v1170
        %3974 = vmatpush1.msra.mxu0 %v1169
        %3975 = vmatprep.subr.mxu0 %v1174
        %3976 = vmatpush1.msra.mxu0 %v1173
        %3977 = vmatprep.subr.mxu0 %v1178
        %3978 = vmatpush1.msra.mxu0 %v1177
        %3979 = vmatprep.subr.mxu0 %v1182
        %3980 = vmatpush1.msra.mxu0 %v1181
        %3981 = vmatprep.subr.mxu0 %v1186
        %3982 = vmatpush1.msra.mxu0 %v1185
        %3983 = vmatprep.subr.mxu0 %v1190
        %3984 = vmatpush1.msra.mxu0 %v1189
        %3985 = vmatprep.subr.mxu0 %v1194
        %3986 = vmatpush1.msra.mxu0 %v1193
        %3987 = vmatprep.subr.mxu0 %v1198
        %3988 = vmatpush1.msra.mxu0 %v1197
        %3989 = vmatprep.subr.mxu0 %v1202
        %3990 = vmatpush1.msra.mxu0 %v1201
        %3991 = vmatprep.subr.mxu0 %v1206
        %3992 = vmatpush1.msra.mxu0 %v1205
        %3993 = vmatprep.subr.mxu0 %v1210
        %3994 = vmatpush1.msra.mxu0 %v1209
        %3995 = vmatprep.subr.mxu0 %v1214
        %3996 = vmatpush1.msra.mxu0 %v1213
        %3997 = vmatprep.subr.mxu0 %v1218
        %3998 = vmatpush1.msra.mxu0 %v1217
        %3999 = vmatprep.subr.mxu0 %v1222
        %4000 = vmatpush1.msra.mxu0 %v1221
        %4001 = vmatprep.subr.mxu0 %v1226
        %4002 = vmatpush1.msra.mxu0 %v1225
        %4003 = vmatprep.subr.mxu0 %v1230
        %4004 = vmatpush1.msra.mxu0 %v1229
        %4005 = vmatprep.subr.mxu0 %v1234
        %4006 = vmatpush1.msra.mxu0 %v1233
        %4007 = vmatprep.subr.mxu0 %v1238
        %4008 = vmatpush1.msra.mxu0 %v1237
        %4009 = vmatprep.subr.mxu0 %v1242
        %4010 = vmatpush1.msra.mxu0 %v1241
        %4011 = vmatprep.mubr.f32.mxu0 %v360
        %4012 = vmatmul.mubr.f32.gmra.mrb[0].mxu0 %v359
        %v4013 = vpop.f32.mrb[0].mxu0
        %v4014 = vadd.f32 %v3787, %v4013
        %v4015 = vpop.f32.mrb[0].mxu0
        %v4016 = vadd.f32 %v3789, %v4015
        %4017 = vmatprep.mubr.f32.mxu0 %v374
        %4018 = vmatmul.mubr.f32.gmra.mrb[0].mxu0 %v373
        %v4019 = vpop.f32.mrb[0].mxu0
        %v4020 = vadd.f32 %v3793, %v4019
        %v4021 = vpop.f32.mrb[0].mxu0
        %v4022 = vadd.f32 %v3795, %v4021
        %4023 = vmatprep.mubr.f32.mxu0 %v388
        %4024 = vmatmul.mubr.f32.gmra.mrb[0].mxu0 %v387
        %v4025 = vpop.f32.mrb[0].mxu0
        %v4026 = vadd.f32 %v3799, %v4025
        %v4027 = vpop.f32.mrb[0].mxu0
        %v4028 = vadd.f32 %v3801, %v4027
        %4029 = vmatprep.mubr.f32.mxu0 %v402
        %4030 = vmatmul.mubr.f32.gmra.mrb[0].mxu0 %v401
        %v4031 = vpop.f32.mrb[0].mxu0
        %v4032 = vadd.f32 %v3805, %v4031
        %v4033 = vpop.f32.mrb[0].mxu0
        %v4034 = vadd.f32 %v3807, %v4033
        %4035 = vmatprep.mubr.f32.mxu0 %v416
        %4036 = vmatmul.mubr.f32.gmra.mrb[0].mxu0 %v415
        %v4037 = vpop.f32.mrb[0].mxu0
        %v4038 = vadd.f32 %v3811, %v4037
        %v4039 = vpop.f32.mrb[0].mxu0
        %v4040 = vadd.f32 %v3813, %v4039
        %4041 = vmatprep.mubr.f32.mxu0 %v430
        %4042 = vmatmul.mubr.f32.gmra.mrb[0].mxu0 %v429
        %v4043 = vpop.f32.mrb[0].mxu0
        %v4044 = vadd.f32 %v3817, %v4043
        %v4045 = vpop.f32.mrb[0].mxu0
        %v4046 = vadd.f32 %v3819, %v4045
        %4047 = vmatprep.mubr.f32.mxu0 %v444
        %4048 = vmatmul.mubr.f32.gmra.mrb[0].mxu0 %v443
        %v4049 = vpop.f32.mrb[0].mxu0
        %v4050 = vadd.f32 %v3823, %v4049
        %v4051 = vpop.f32.mrb[0].mxu0
        %v4052 = vadd.f32 %v3825, %v4051
        %4053 = vmatprep.mubr.f32.mxu0 %v458
        %4054 = vmatmul.mubr.f32.gmra.mrb[0].mxu0 %v457
        %v4055 = vpop.f32.mrb[0].mxu0
        %v4056 = vadd.f32 %v3829, %v4055
        %v4057 = vpop.f32.mrb[0].mxu0
        %v4058 = vadd.f32 %v3831, %v4057
        %4059 = vmatprep.mubr.f32.mxu0 %v472
        %4060 = vmatmul.mubr.f32.gmra.mrb[0].mxu0 %v471
        %v4061 = vpop.f32.mrb[0].mxu0
        %v4062 = vadd.f32 %v3835, %v4061
        %v4063 = vpop.f32.mrb[0].mxu0
        %v4064 = vadd.f32 %v3837, %v4063
        %4065 = vmatprep.mubr.f32.mxu0 %v486
        %4066 = vmatmul.mubr.f32.gmra.mrb[0].mxu0 %v485
        %v4067 = vpop.f32.mrb[0].mxu0
        %v4068 = vadd.f32 %v3841, %v4067
        %v4069 = vpop.f32.mrb[0].mxu0
        %v4070 = vadd.f32 %v3843, %v4069
        %4071 = vmatprep.mubr.f32.mxu0 %v500
        %4072 = vmatmul.mubr.f32.gmra.mrb[0].mxu0 %v499
        %v4073 = vpop.f32.mrb[0].mxu0
        %v4074 = vadd.f32 %v3847, %v4073
        %v4075 = vpop.f32.mrb[0].mxu0
        %v4076 = vadd.f32 %v3849, %v4075
        %4077 = vmatprep.mubr.f32.mxu0 %v514
        %4078 = vmatmul.mubr.f32.gmra.mrb[0].mxu0 %v513
        %v4079 = vpop.f32.mrb[0].mxu0
        %v4080 = vadd.f32 %v3853, %v4079
        %v4081 = vpop.f32.mrb[0].mxu0
        %v4082 = vadd.f32 %v3855, %v4081
        %4083 = vmatprep.mubr.f32.mxu0 %v528
        %4084 = vmatmul.mubr.f32.gmra.mrb[0].mxu0 %v527
        %v4085 = vpop.f32.mrb[0].mxu0
        %v4086 = vadd.f32 %v3859, %v4085
        %v4087 = vpop.f32.mrb[0].mxu0
        %v4088 = vadd.f32 %v3861, %v4087
        %4089 = vmatprep.mubr.f32.mxu0 %v542
        %4090 = vmatmul.mubr.f32.gmra.mrb[0].mxu0 %v541
        %v4091 = vpop.f32.mrb[0].mxu0
        %v4092 = vadd.f32 %v3865, %v4091
        %v4093 = vpop.f32.mrb[0].mxu0
        %v4094 = vadd.f32 %v3867, %v4093
        %4095 = vmatprep.mubr.f32.mxu0 %v556
        %4096 = vmatmul.mubr.f32.gmra.mrb[0].mxu0 %v555
        %v4097 = vpop.f32.mrb[0].mxu0
        %v4098 = vadd.f32 %v3871, %v4097
        %v4099 = vpop.f32.mrb[0].mxu0
        %v4100 = vadd.f32 %v3873, %v4099
        %4101 = vmatprep.mubr.f32.mxu0 %v570
        %4102 = vmatmul.mubr.f32.gmra.mrb[0].mxu0 %v569
        %v4103 = vpop.f32.mrb[0].mxu0
        %v4104 = vadd.f32 %v3877, %v4103
        %v4105 = vpop.f32.mrb[0].mxu0
        %v4106 = vadd.f32 %v3879, %v4105
        %4107 = vmatprep.mubr.f32.mxu0 %v584
        %4108 = vmatmul.mubr.f32.gmra.mrb[0].mxu0 %v583
        %v4109 = vpop.f32.mrb[0].mxu0
        %v4110 = vadd.f32 %v3883, %v4109
        %v4111 = vpop.f32.mrb[0].mxu0
        %v4112 = vadd.f32 %v3885, %v4111
        %4113 = vmatprep.mubr.f32.mxu0 %v598
        %4114 = vmatmul.mubr.f32.gmra.mrb[0].mxu0 %v597
        %v4115 = vpop.f32.mrb[0].mxu0
        %v4116 = vadd.f32 %v3889, %v4115
        %v4117 = vpop.f32.mrb[0].mxu0
        %v4118 = vadd.f32 %v3891, %v4117
        %4119 = vmatprep.mubr.f32.mxu0 %v612
        %4120 = vmatmul.mubr.f32.gmra.mrb[0].mxu0 %v611
        %v4121 = vpop.f32.mrb[0].mxu0
        %v4122 = vadd.f32 %v3895, %v4121
        %v4123 = vpop.f32.mrb[0].mxu0
        %v4124 = vadd.f32 %v3897, %v4123
        %4125 = vmatprep.mubr.f32.mxu0 %v626
        %4126 = vmatmul.mubr.f32.gmra.mrb[0].mxu0 %v625
        %v4127 = vpop.f32.mrb[0].mxu0
        %v4128 = vadd.f32 %v3901, %v4127
        %v4129 = vpop.f32.mrb[0].mxu0
        %v4130 = vadd.f32 %v3903, %v4129
        %4131 = vmatprep.mubr.f32.mxu0 %v640
        %4132 = vmatmul.mubr.f32.gmra.mrb[0].mxu0 %v639
        %v4133 = vpop.f32.mrb[0].mxu0
        %v4134 = vadd.f32 %v3907, %v4133
        %v4135 = vpop.f32.mrb[0].mxu0
        %v4136 = vadd.f32 %v3909, %v4135
        %4137 = vmatprep.mubr.f32.mxu0 %v654
        %4138 = vmatmul.mubr.f32.gmra.mrb[0].mxu0 %v653
        %v4139 = vpop.f32.mrb[0].mxu0
        %v4140 = vadd.f32 %v3913, %v4139
        %v4141 = vpop.f32.mrb[0].mxu0
        %v4142 = vadd.f32 %v3915, %v4141
        %4143 = vmatprep.mubr.f32.mxu0 %v668
        %4144 = vmatmul.mubr.f32.gmra.mrb[0].mxu0 %v667
        %v4145 = vpop.f32.mrb[0].mxu0
        %v4146 = vadd.f32 %v3919, %v4145
        %v4147 = vpop.f32.mrb[0].mxu0
        %v4148 = vadd.f32 %v3921, %v4147
        %4149 = vmatprep.mubr.f32.mxu0 %v682
        %4150 = vmatmul.mubr.f32.gmra.mrb[0].mxu0 %v681
        %v4151 = vpop.f32.mrb[0].mxu0
        %v4152 = vadd.f32 %v3925, %v4151
        %v4153 = vpop.f32.mrb[0].mxu0
        %v4154 = vadd.f32 %v3927, %v4153
        %4155 = vmatprep.mubr.f32.mxu0 %v696
        %4156 = vmatmul.mubr.f32.gmra.mrb[0].mxu0 %v695
        %v4157 = vpop.f32.mrb[0].mxu0
        %v4158 = vadd.f32 %v3931, %v4157
        %v4159 = vpop.f32.mrb[0].mxu0
        %v4160 = vadd.f32 %v3933, %v4159
        %4161 = vmatprep.mubr.f32.mxu0 %v710
        %4162 = vmatmul.mubr.f32.gmra.mrb[0].mxu0 %v709
        %v4163 = vpop.f32.mrb[0].mxu0
        %v4164 = vadd.f32 %v3937, %v4163
        %v4165 = vpop.f32.mrb[0].mxu0
        %v4166 = vadd.f32 %v3939, %v4165
        %4167 = vmatprep.mubr.f32.mxu0 %v724
        %4168 = vmatmul.mubr.f32.gmra.mrb[0].mxu0 %v723
        %v4169 = vpop.f32.mrb[0].mxu0
        %v4170 = vadd.f32 %v3943, %v4169
        %v4171 = vpop.f32.mrb[0].mxu0
        %v4172 = vadd.f32 %v3945, %v4171
        %4173 = vdwg.mxu0
        %4174 = vmatprep.subr.mxu0 %v1246
        %4175 = vmatpush1.msra.mxu0 %v1245
        %4176 = vmatprep.subr.mxu0 %v1250
        %4177 = vmatpush1.msra.mxu0 %v1249
        %4178 = vmatprep.subr.mxu0 %v1254
        %4179 = vmatpush1.msra.mxu0 %v1253
        %4180 = vmatprep.subr.mxu0 %v1258
        %4181 = vmatpush1.msra.mxu0 %v1257
        %4182 = vmatprep.subr.mxu0 %v1262
        %4183 = vmatpush1.msra.mxu0 %v1261
        %4184 = vmatprep.subr.mxu0 %v1266
        %4185 = vmatpush1.msra.mxu0 %v1265
        %4186 = vmatprep.subr.mxu0 %v1270
        %4187 = vmatpush1.msra.mxu0 %v1269
        %4188 = vmatprep.subr.mxu0 %v1274
        %4189 = vmatpush1.msra.mxu0 %v1273
        %4190 = vmatprep.subr.mxu0 %v1278
        %4191 = vmatpush1.msra.mxu0 %v1277
        %4192 = vmatprep.subr.mxu0 %v1282
        %4193 = vmatpush1.msra.mxu0 %v1281
        %4194 = vmatprep.subr.mxu0 %v1286
        %4195 = vmatpush1.msra.mxu0 %v1285
        %4196 = vmatprep.subr.mxu0 %v1290
        %4197 = vmatpush1.msra.mxu0 %v1289
        %4198 = vmatprep.subr.mxu0 %v1294
        %4199 = vmatpush1.msra.mxu0 %v1293
        %4200 = vmatprep.subr.mxu0 %v1298
        %4201 = vmatpush1.msra.mxu0 %v1297
        %4202 = vmatprep.subr.mxu0 %v1302
        %4203 = vmatpush1.msra.mxu0 %v1301
        %4204 = vmatprep.subr.mxu0 %v1306
        %4205 = vmatpush1.msra.mxu0 %v1305
        %4206 = vmatprep.subr.mxu0 %v1310
        %4207 = vmatpush1.msra.mxu0 %v1309
        %4208 = vmatprep.subr.mxu0 %v1314
        %4209 = vmatpush1.msra.mxu0 %v1313
        %4210 = vmatprep.subr.mxu0 %v1318
        %4211 = vmatpush1.msra.mxu0 %v1317
        %4212 = vmatprep.subr.mxu0 %v1322
        %4213 = vmatpush1.msra.mxu0 %v1321
        %4214 = vmatprep.subr.mxu0 %v1326
        %4215 = vmatpush1.msra.mxu0 %v1325
        %4216 = vmatprep.subr.mxu0 %v1330
        %4217 = vmatpush1.msra.mxu0 %v1329
        %4218 = vmatprep.subr.mxu0 %v1334
        %4219 = vmatpush1.msra.mxu0 %v1333
        %4220 = vmatprep.subr.mxu0 %v1338
        %4221 = vmatpush1.msra.mxu0 %v1337
        %4222 = vmatprep.subr.mxu0 %v1342
        %4223 = vmatpush1.msra.mxu0 %v1341
        %4224 = vmatprep.subr.mxu0 %v1346
        %4225 = vmatpush1.msra.mxu0 %v1345
        %4226 = vmatprep.subr.mxu0 %v1350
        %4227 = vmatpush1.msra.mxu0 %v1349
        %4228 = vmatprep.subr.mxu0 %v1354
        %4229 = vmatpush1.msra.mxu0 %v1353
        %4230 = vmatprep.subr.mxu0 %v1358
        %4231 = vmatpush1.msra.mxu0 %v1357
        %4232 = vmatprep.subr.mxu0 %v1362
        %4233 = vmatpush1.msra.mxu0 %v1361
        %4234 = vmatprep.subr.mxu0 %v1366
        %4235 = vmatpush1.msra.mxu0 %v1365
        %4236 = vmatprep.subr.mxu0 %v1370
        %4237 = vmatpush1.msra.mxu0 %v1369
        %4238 = vmatprep.mubr.f32.mxu0 %v362
        %4239 = vmatmul.mubr.f32.gmra.mrb[0].mxu0 %v361
        %v4240 = vpop.f32.mrb[0].mxu0
        %v4241 = vadd.f32 %v4014, %v4240
        %v4242 = vpop.f32.mrb[0].mxu0
        %v4243 = vadd.f32 %v4016, %v4242
        %4244 = vmatprep.mubr.f32.mxu0 %v376
        %4245 = vmatmul.mubr.f32.gmra.mrb[0].mxu0 %v375
        %v4246 = vpop.f32.mrb[0].mxu0
        %v4247 = vadd.f32 %v4020, %v4246
        %v4248 = vpop.f32.mrb[0].mxu0
        %v4249 = vadd.f32 %v4022, %v4248
        %4250 = vmatprep.mubr.f32.mxu0 %v390
        %4251 = vmatmul.mubr.f32.gmra.mrb[0].mxu0 %v389
        %v4252 = vpop.f32.mrb[0].mxu0
        %v4253 = vadd.f32 %v4026, %v4252
        %v4254 = vpop.f32.mrb[0].mxu0
        %v4255 = vadd.f32 %v4028, %v4254
        %4256 = vmatprep.mubr.f32.mxu0 %v404
        %4257 = vmatmul.mubr.f32.gmra.mrb[0].mxu0 %v403
        %v4258 = vpop.f32.mrb[0].mxu0
        %v4259 = vadd.f32 %v4032, %v4258
        %v4260 = vpop.f32.mrb[0].mxu0
        %v4261 = vadd.f32 %v4034, %v4260
        %4262 = vmatprep.mubr.f32.mxu0 %v418
        %4263 = vmatmul.mubr.f32.gmra.mrb[0].mxu0 %v417
        %v4264 = vpop.f32.mrb[0].mxu0
        %v4265 = vadd.f32 %v4038, %v4264
        %v4266 = vpop.f32.mrb[0].mxu0
        %v4267 = vadd.f32 %v4040, %v4266
        %4268 = vmatprep.mubr.f32.mxu0 %v432
        %4269 = vmatmul.mubr.f32.gmra.mrb[0].mxu0 %v431
        %v4270 = vpop.f32.mrb[0].mxu0
        %v4271 = vadd.f32 %v4044, %v4270
        %v4272 = vpop.f32.mrb[0].mxu0
        %v4273 = vadd.f32 %v4046, %v4272
        %4274 = vmatprep.mubr.f32.mxu0 %v446
        %4275 = vmatmul.mubr.f32.gmra.mrb[0].mxu0 %v445
        %v4276 = vpop.f32.mrb[0].mxu0
        %v4277 = vadd.f32 %v4050, %v4276
        %v4278 = vpop.f32.mrb[0].mxu0
        %v4279 = vadd.f32 %v4052, %v4278
        %4280 = vmatprep.mubr.f32.mxu0 %v460
        %4281 = vmatmul.mubr.f32.gmra.mrb[0].mxu0 %v459
        %v4282 = vpop.f32.mrb[0].mxu0
        %v4283 = vadd.f32 %v4056, %v4282
        %v4284 = vpop.f32.mrb[0].mxu0
        %v4285 = vadd.f32 %v4058, %v4284
        %4286 = vmatprep.mubr.f32.mxu0 %v474
        %4287 = vmatmul.mubr.f32.gmra.mrb[0].mxu0 %v473
        %v4288 = vpop.f32.mrb[0].mxu0
        %v4289 = vadd.f32 %v4062, %v4288
        %v4290 = vpop.f32.mrb[0].mxu0
        %v4291 = vadd.f32 %v4064, %v4290
        %4292 = vmatprep.mubr.f32.mxu0 %v488
        %4293 = vmatmul.mubr.f32.gmra.mrb[0].mxu0 %v487
        %v4294 = vpop.f32.mrb[0].mxu0
        %v4295 = vadd.f32 %v4068, %v4294
        %v4296 = vpop.f32.mrb[0].mxu0
        %v4297 = vadd.f32 %v4070, %v4296
        %4298 = vmatprep.mubr.f32.mxu0 %v502
        %4299 = vmatmul.mubr.f32.gmra.mrb[0].mxu0 %v501
        %v4300 = vpop.f32.mrb[0].mxu0
        %v4301 = vadd.f32 %v4074, %v4300
        %v4302 = vpop.f32.mrb[0].mxu0
        %v4303 = vadd.f32 %v4076, %v4302
        %4304 = vmatprep.mubr.f32.mxu0 %v516
        %4305 = vmatmul.mubr.f32.gmra.mrb[0].mxu0 %v515
        %v4306 = vpop.f32.mrb[0].mxu0
        %v4307 = vadd.f32 %v4080, %v4306
        %v4308 = vpop.f32.mrb[0].mxu0
        %v4309 = vadd.f32 %v4082, %v4308
        %4310 = vmatprep.mubr.f32.mxu0 %v530
        %4311 = vmatmul.mubr.f32.gmra.mrb[0].mxu0 %v529
        %v4312 = vpop.f32.mrb[0].mxu0
        %v4313 = vadd.f32 %v4086, %v4312
        %v4314 = vpop.f32.mrb[0].mxu0
        %v4315 = vadd.f32 %v4088, %v4314
        %4316 = vmatprep.mubr.f32.mxu0 %v544
        %4317 = vmatmul.mubr.f32.gmra.mrb[0].mxu0 %v543
        %v4318 = vpop.f32.mrb[0].mxu0
        %v4319 = vadd.f32 %v4092, %v4318
        %v4320 = vpop.f32.mrb[0].mxu0
        %v4321 = vadd.f32 %v4094, %v4320
        %4322 = vmatprep.mubr.f32.mxu0 %v558
        %4323 = vmatmul.mubr.f32.gmra.mrb[0].mxu0 %v557
        %v4324 = vpop.f32.mrb[0].mxu0
        %v4325 = vadd.f32 %v4098, %v4324
        %v4326 = vpop.f32.mrb[0].mxu0
        %v4327 = vadd.f32 %v4100, %v4326
        %4328 = vmatprep.mubr.f32.mxu0 %v572
        %4329 = vmatmul.mubr.f32.gmra.mrb[0].mxu0 %v571
        %v4330 = vpop.f32.mrb[0].mxu0
        %v4331 = vadd.f32 %v4104, %v4330
        %v4332 = vpop.f32.mrb[0].mxu0
        %v4333 = vadd.f32 %v4106, %v4332
        %4334 = vmatprep.mubr.f32.mxu0 %v586
        %4335 = vmatmul.mubr.f32.gmra.mrb[0].mxu0 %v585
        %v4336 = vpop.f32.mrb[0].mxu0
        %v4337 = vadd.f32 %v4110, %v4336
        %v4338 = vpop.f32.mrb[0].mxu0
        %v4339 = vadd.f32 %v4112, %v4338
        %4340 = vmatprep.mubr.f32.mxu0 %v600
        %4341 = vmatmul.mubr.f32.gmra.mrb[0].mxu0 %v599
        %v4342 = vpop.f32.mrb[0].mxu0
        %v4343 = vadd.f32 %v4116, %v4342
        %v4344 = vpop.f32.mrb[0].mxu0
        %v4345 = vadd.f32 %v4118, %v4344
        %4346 = vmatprep.mubr.f32.mxu0 %v614
        %4347 = vmatmul.mubr.f32.gmra.mrb[0].mxu0 %v613
        %v4348 = vpop.f32.mrb[0].mxu0
        %v4349 = vadd.f32 %v4122, %v4348
        %v4350 = vpop.f32.mrb[0].mxu0
        %v4351 = vadd.f32 %v4124, %v4350
        %4352 = vmatprep.mubr.f32.mxu0 %v628
        %4353 = vmatmul.mubr.f32.gmra.mrb[0].mxu0 %v627
        %v4354 = vpop.f32.mrb[0].mxu0
        %v4355 = vadd.f32 %v4128, %v4354
        %v4356 = vpop.f32.mrb[0].mxu0
        %v4357 = vadd.f32 %v4130, %v4356
        %4358 = vmatprep.mubr.f32.mxu0 %v642
        %4359 = vmatmul.mubr.f32.gmra.mrb[0].mxu0 %v641
        %v4360 = vpop.f32.mrb[0].mxu0
        %v4361 = vadd.f32 %v4134, %v4360
        %v4362 = vpop.f32.mrb[0].mxu0
        %v4363 = vadd.f32 %v4136, %v4362
        %4364 = vmatprep.mubr.f32.mxu0 %v656
        %4365 = vmatmul.mubr.f32.gmra.mrb[0].mxu0 %v655
        %v4366 = vpop.f32.mrb[0].mxu0
        %v4367 = vadd.f32 %v4140, %v4366
        %v4368 = vpop.f32.mrb[0].mxu0
        %v4369 = vadd.f32 %v4142, %v4368
        %4370 = vmatprep.mubr.f32.mxu0 %v670
        %4371 = vmatmul.mubr.f32.gmra.mrb[0].mxu0 %v669
        %v4372 = vpop.f32.mrb[0].mxu0
        %v4373 = vadd.f32 %v4146, %v4372
        %v4374 = vpop.f32.mrb[0].mxu0
        %v4375 = vadd.f32 %v4148, %v4374
        %4376 = vmatprep.mubr.f32.mxu0 %v684
        %4377 = vmatmul.mubr.f32.gmra.mrb[0].mxu0 %v683
        %v4378 = vpop.f32.mrb[0].mxu0
        %v4379 = vadd.f32 %v4152, %v4378
        %v4380 = vpop.f32.mrb[0].mxu0
        %v4381 = vadd.f32 %v4154, %v4380
        %4382 = vmatprep.mubr.f32.mxu0 %v698
        %4383 = vmatmul.mubr.f32.gmra.mrb[0].mxu0 %v697
        %v4384 = vpop.f32.mrb[0].mxu0
        %v4385 = vadd.f32 %v4158, %v4384
        %v4386 = vpop.f32.mrb[0].mxu0
        %v4387 = vadd.f32 %v4160, %v4386
        %4388 = vmatprep.mubr.f32.mxu0 %v712
        %4389 = vmatmul.mubr.f32.gmra.mrb[0].mxu0 %v711
        %v4390 = vpop.f32.mrb[0].mxu0
        %v4391 = vadd.f32 %v4164, %v4390
        %v4392 = vpop.f32.mrb[0].mxu0
        %v4393 = vadd.f32 %v4166, %v4392
        %4394 = vmatprep.mubr.f32.mxu0 %v726
        %4395 = vmatmul.mubr.f32.gmra.mrb[0].mxu0 %v725
        %v4396 = vpop.f32.mrb[0].mxu0
        %v4397 = vadd.f32 %v4170, %v4396
        %v4398 = vpop.f32.mrb[0].mxu0
        %v4399 = vadd.f32 %v4172, %v4398
        %4400 = vdwg.mxu0
        %4401 = vmatprep.subr.mxu0 %v1374
        %4402 = vmatpush1.msra.mxu0 %v1373
        %4403 = vmatprep.subr.mxu0 %v1378
        %4404 = vmatpush1.msra.mxu0 %v1377
        %4405 = vmatprep.subr.mxu0 %v1382
        %4406 = vmatpush1.msra.mxu0 %v1381
        %4407 = vmatprep.subr.mxu0 %v1386
        %4408 = vmatpush1.msra.mxu0 %v1385
        %4409 = vmatprep.subr.mxu0 %v1390
        %4410 = vmatpush1.msra.mxu0 %v1389
        %4411 = vmatprep.subr.mxu0 %v1394
        %4412 = vmatpush1.msra.mxu0 %v1393
        %4413 = vmatprep.subr.mxu0 %v1398
        %4414 = vmatpush1.msra.mxu0 %v1397
        %4415 = vmatprep.subr.mxu0 %v1402
        %4416 = vmatpush1.msra.mxu0 %v1401
        %4417 = vmatprep.subr.mxu0 %v1406
        %4418 = vmatpush1.msra.mxu0 %v1405
        %4419 = vmatprep.subr.mxu0 %v1410
        %4420 = vmatpush1.msra.mxu0 %v1409
        %4421 = vmatprep.subr.mxu0 %v1414
        %4422 = vmatpush1.msra.mxu0 %v1413
        %4423 = vmatprep.subr.mxu0 %v1418
        %4424 = vmatpush1.msra.mxu0 %v1417
        %4425 = vmatprep.subr.mxu0 %v1422
        %4426 = vmatpush1.msra.mxu0 %v1421
        %4427 = vmatprep.subr.mxu0 %v1426
        %4428 = vmatpush1.msra.mxu0 %v1425
        %4429 = vmatprep.subr.mxu0 %v1430
        %4430 = vmatpush1.msra.mxu0 %v1429
        %4431 = vmatprep.subr.mxu0 %v1434
        %4432 = vmatpush1.msra.mxu0 %v1433
        %4433 = vmatprep.subr.mxu0 %v1438
        %4434 = vmatpush1.msra.mxu0 %v1437
        %4435 = vmatprep.subr.mxu0 %v1442
        %4436 = vmatpush1.msra.mxu0 %v1441
        %4437 = vmatprep.subr.mxu0 %v1446
        %4438 = vmatpush1.msra.mxu0 %v1445
        %4439 = vmatprep.subr.mxu0 %v1450
        %4440 = vmatpush1.msra.mxu0 %v1449
        %4441 = vmatprep.subr.mxu0 %v1454
        %4442 = vmatpush1.msra.mxu0 %v1453
        %4443 = vmatprep.subr.mxu0 %v1458
        %4444 = vmatpush1.msra.mxu0 %v1457
        %4445 = vmatprep.subr.mxu0 %v1462
        %4446 = vmatpush1.msra.mxu0 %v1461
        %4447 = vmatprep.subr.mxu0 %v1466
        %4448 = vmatpush1.msra.mxu0 %v1465
        %4449 = vmatprep.subr.mxu0 %v1470
        %4450 = vmatpush1.msra.mxu0 %v1469
        %4451 = vmatprep.subr.mxu0 %v1474
        %4452 = vmatpush1.msra.mxu0 %v1473
        %4453 = vmatprep.subr.mxu0 %v1478
        %4454 = vmatpush1.msra.mxu0 %v1477
        %4455 = vmatprep.subr.mxu0 %v1482
        %4456 = vmatpush1.msra.mxu0 %v1481
        %4457 = vmatprep.subr.mxu0 %v1486
        %4458 = vmatpush1.msra.mxu0 %v1485
        %4459 = vmatprep.subr.mxu0 %v1490
        %4460 = vmatpush1.msra.mxu0 %v1489
        %4461 = vmatprep.subr.mxu0 %v1494
        %4462 = vmatpush1.msra.mxu0 %v1493
        %4463 = vmatprep.subr.mxu0 %v1498
        %4464 = vmatpush1.msra.mxu0 %v1497
        %4465 = vmatprep.mubr.f32.mxu0 %v364
        %4466 = vmatmul.mubr.f32.gmra.mrb[0].mxu0 %v363
        %v4467 = vpop.f32.mrb[0].mxu0
        %v4468 = vadd.f32 %v4241, %v4467
        %v4469 = vpop.f32.mrb[0].mxu0
        %v4470 = vadd.f32 %v4243, %v4469
        %4471 = vmatprep.mubr.f32.mxu0 %v378
        %4472 = vmatmul.mubr.f32.gmra.mrb[0].mxu0 %v377
        %v4473 = vpop.f32.mrb[0].mxu0
        %v4474 = vadd.f32 %v4247, %v4473
        %v4475 = vpop.f32.mrb[0].mxu0
        %v4476 = vadd.f32 %v4249, %v4475
        %4477 = vmatprep.mubr.f32.mxu0 %v392
        %4478 = vmatmul.mubr.f32.gmra.mrb[0].mxu0 %v391
        %v4479 = vpop.f32.mrb[0].mxu0
        %v4480 = vadd.f32 %v4253, %v4479
        %v4481 = vpop.f32.mrb[0].mxu0
        %v4482 = vadd.f32 %v4255, %v4481
        %4483 = vmatprep.mubr.f32.mxu0 %v406
        %4484 = vmatmul.mubr.f32.gmra.mrb[0].mxu0 %v405
        %v4485 = vpop.f32.mrb[0].mxu0
        %v4486 = vadd.f32 %v4259, %v4485
        %v4487 = vpop.f32.mrb[0].mxu0
        %v4488 = vadd.f32 %v4261, %v4487
        %4489 = vmatprep.mubr.f32.mxu0 %v420
        %4490 = vmatmul.mubr.f32.gmra.mrb[0].mxu0 %v419
        %v4491 = vpop.f32.mrb[0].mxu0
        %v4492 = vadd.f32 %v4265, %v4491
        %v4493 = vpop.f32.mrb[0].mxu0
        %v4494 = vadd.f32 %v4267, %v4493
        %4495 = vmatprep.mubr.f32.mxu0 %v434
        %4496 = vmatmul.mubr.f32.gmra.mrb[0].mxu0 %v433
        %v4497 = vpop.f32.mrb[0].mxu0
        %v4498 = vadd.f32 %v4271, %v4497
        %v4499 = vpop.f32.mrb[0].mxu0
        %v4500 = vadd.f32 %v4273, %v4499
        %4501 = vmatprep.mubr.f32.mxu0 %v448
        %4502 = vmatmul.mubr.f32.gmra.mrb[0].mxu0 %v447
        %v4503 = vpop.f32.mrb[0].mxu0
        %v4504 = vadd.f32 %v4277, %v4503
        %v4505 = vpop.f32.mrb[0].mxu0
        %v4506 = vadd.f32 %v4279, %v4505
        %4507 = vmatprep.mubr.f32.mxu0 %v462
        %4508 = vmatmul.mubr.f32.gmra.mrb[0].mxu0 %v461
        %v4509 = vpop.f32.mrb[0].mxu0
        %v4510 = vadd.f32 %v4283, %v4509
        %v4511 = vpop.f32.mrb[0].mxu0
        %v4512 = vadd.f32 %v4285, %v4511
        %4513 = vmatprep.mubr.f32.mxu0 %v476
        %4514 = vmatmul.mubr.f32.gmra.mrb[0].mxu0 %v475
        %v4515 = vpop.f32.mrb[0].mxu0
        %v4516 = vadd.f32 %v4289, %v4515
        %v4517 = vpop.f32.mrb[0].mxu0
        %v4518 = vadd.f32 %v4291, %v4517
        %4519 = vmatprep.mubr.f32.mxu0 %v490
        %4520 = vmatmul.mubr.f32.gmra.mrb[0].mxu0 %v489
        %v4521 = vpop.f32.mrb[0].mxu0
        %v4522 = vadd.f32 %v4295, %v4521
        %v4523 = vpop.f32.mrb[0].mxu0
        %v4524 = vadd.f32 %v4297, %v4523
        %4525 = vmatprep.mubr.f32.mxu0 %v504
        %4526 = vmatmul.mubr.f32.gmra.mrb[0].mxu0 %v503
        %v4527 = vpop.f32.mrb[0].mxu0
        %v4528 = vadd.f32 %v4301, %v4527
        %v4529 = vpop.f32.mrb[0].mxu0
        %v4530 = vadd.f32 %v4303, %v4529
        %4531 = vmatprep.mubr.f32.mxu0 %v518
        %4532 = vmatmul.mubr.f32.gmra.mrb[0].mxu0 %v517
        %v4533 = vpop.f32.mrb[0].mxu0
        %v4534 = vadd.f32 %v4307, %v4533
        %v4535 = vpop.f32.mrb[0].mxu0
        %v4536 = vadd.f32 %v4309, %v4535
        %4537 = vmatprep.mubr.f32.mxu0 %v532
        %4538 = vmatmul.mubr.f32.gmra.mrb[0].mxu0 %v531
        %v4539 = vpop.f32.mrb[0].mxu0
        %v4540 = vadd.f32 %v4313, %v4539
        %v4541 = vpop.f32.mrb[0].mxu0
        %v4542 = vadd.f32 %v4315, %v4541
        %4543 = vmatprep.mubr.f32.mxu0 %v546
        %4544 = vmatmul.mubr.f32.gmra.mrb[0].mxu0 %v545
        %v4545 = vpop.f32.mrb[0].mxu0
        %v4546 = vadd.f32 %v4319, %v4545
        %v4547 = vpop.f32.mrb[0].mxu0
        %v4548 = vadd.f32 %v4321, %v4547
        %4549 = vmatprep.mubr.f32.mxu0 %v560
        %4550 = vmatmul.mubr.f32.gmra.mrb[0].mxu0 %v559
        %v4551 = vpop.f32.mrb[0].mxu0
        %v4552 = vadd.f32 %v4325, %v4551
        %v4553 = vpop.f32.mrb[0].mxu0
        %v4554 = vadd.f32 %v4327, %v4553
        %4555 = vmatprep.mubr.f32.mxu0 %v574
        %4556 = vmatmul.mubr.f32.gmra.mrb[0].mxu0 %v573
        %v4557 = vpop.f32.mrb[0].mxu0
        %v4558 = vadd.f32 %v4331, %v4557
        %v4559 = vpop.f32.mrb[0].mxu0
        %v4560 = vadd.f32 %v4333, %v4559
        %4561 = vmatprep.mubr.f32.mxu0 %v588
        %4562 = vmatmul.mubr.f32.gmra.mrb[0].mxu0 %v587
        %v4563 = vpop.f32.mrb[0].mxu0
        %v4564 = vadd.f32 %v4337, %v4563
        %v4565 = vpop.f32.mrb[0].mxu0
        %v4566 = vadd.f32 %v4339, %v4565
        %4567 = vmatprep.mubr.f32.mxu0 %v602
        %4568 = vmatmul.mubr.f32.gmra.mrb[0].mxu0 %v601
        %v4569 = vpop.f32.mrb[0].mxu0
        %v4570 = vadd.f32 %v4343, %v4569
        %v4571 = vpop.f32.mrb[0].mxu0
        %v4572 = vadd.f32 %v4345, %v4571
        %4573 = vmatprep.mubr.f32.mxu0 %v616
        %4574 = vmatmul.mubr.f32.gmra.mrb[0].mxu0 %v615
        %v4575 = vpop.f32.mrb[0].mxu0
        %v4576 = vadd.f32 %v4349, %v4575
        %v4577 = vpop.f32.mrb[0].mxu0
        %v4578 = vadd.f32 %v4351, %v4577
        %4579 = vmatprep.mubr.f32.mxu0 %v630
        %4580 = vmatmul.mubr.f32.gmra.mrb[0].mxu0 %v629
        %v4581 = vpop.f32.mrb[0].mxu0
        %v4582 = vadd.f32 %v4355, %v4581
        %v4583 = vpop.f32.mrb[0].mxu0
        %v4584 = vadd.f32 %v4357, %v4583
        %4585 = vmatprep.mubr.f32.mxu0 %v644
        %4586 = vmatmul.mubr.f32.gmra.mrb[0].mxu0 %v643
        %v4587 = vpop.f32.mrb[0].mxu0
        %v4588 = vadd.f32 %v4361, %v4587
        %v4589 = vpop.f32.mrb[0].mxu0
        %v4590 = vadd.f32 %v4363, %v4589
        %4591 = vmatprep.mubr.f32.mxu0 %v658
        %4592 = vmatmul.mubr.f32.gmra.mrb[0].mxu0 %v657
        %v4593 = vpop.f32.mrb[0].mxu0
        %v4594 = vadd.f32 %v4367, %v4593
        %v4595 = vpop.f32.mrb[0].mxu0
        %v4596 = vadd.f32 %v4369, %v4595
        %4597 = vmatprep.mubr.f32.mxu0 %v672
        %4598 = vmatmul.mubr.f32.gmra.mrb[0].mxu0 %v671
        %v4599 = vpop.f32.mrb[0].mxu0
        %v4600 = vadd.f32 %v4373, %v4599
        %v4601 = vpop.f32.mrb[0].mxu0
        %v4602 = vadd.f32 %v4375, %v4601
        %4603 = vmatprep.mubr.f32.mxu0 %v686
        %4604 = vmatmul.mubr.f32.gmra.mrb[0].mxu0 %v685
        %v4605 = vpop.f32.mrb[0].mxu0
        %v4606 = vadd.f32 %v4379, %v4605
        %v4607 = vpop.f32.mrb[0].mxu0
        %v4608 = vadd.f32 %v4381, %v4607
        %4609 = vmatprep.mubr.f32.mxu0 %v700
        %4610 = vmatmul.mubr.f32.gmra.mrb[0].mxu0 %v699
        %v4611 = vpop.f32.mrb[0].mxu0
        %v4612 = vadd.f32 %v4385, %v4611
        %v4613 = vpop.f32.mrb[0].mxu0
        %v4614 = vadd.f32 %v4387, %v4613
        %4615 = vmatprep.mubr.f32.mxu0 %v714
        %4616 = vmatmul.mubr.f32.gmra.mrb[0].mxu0 %v713
        %v4617 = vpop.f32.mrb[0].mxu0
        %v4618 = vadd.f32 %v4391, %v4617
        %v4619 = vpop.f32.mrb[0].mxu0
        %v4620 = vadd.f32 %v4393, %v4619
        %4621 = vmatprep.mubr.f32.mxu0 %v728
        %4622 = vmatmul.mubr.f32.gmra.mrb[0].mxu0 %v727
        %v4623 = vpop.f32.mrb[0].mxu0
        %v4624 = vadd.f32 %v4397, %v4623
        %v4625 = vpop.f32.mrb[0].mxu0
        %v4626 = vadd.f32 %v4399, %v4625
        %4627 = vdwg.mxu0
        %4628 = vmatprep.subr.mxu0 %v1502
        %4629 = vmatpush1.msra.mxu0 %v1501
        %4630 = vmatprep.subr.mxu0 %v1506
        %4631 = vmatpush1.msra.mxu0 %v1505
        %4632 = vmatprep.subr.mxu0 %v1510
        %4633 = vmatpush1.msra.mxu0 %v1509
        %4634 = vmatprep.subr.mxu0 %v1514
        %4635 = vmatpush1.msra.mxu0 %v1513
        %4636 = vmatprep.subr.mxu0 %v1518
        %4637 = vmatpush1.msra.mxu0 %v1517
        %4638 = vmatprep.subr.mxu0 %v1522
        %4639 = vmatpush1.msra.mxu0 %v1521
        %4640 = vmatprep.subr.mxu0 %v1526
        %4641 = vmatpush1.msra.mxu0 %v1525
        %4642 = vmatprep.subr.mxu0 %v1530
        %4643 = vmatpush1.msra.mxu0 %v1529
        %4644 = vmatprep.subr.mxu0 %v1534
        %4645 = vmatpush1.msra.mxu0 %v1533
        %4646 = vmatprep.subr.mxu0 %v1538
        %4647 = vmatpush1.msra.mxu0 %v1537
        %4648 = vmatprep.subr.mxu0 %v1542
        %4649 = vmatpush1.msra.mxu0 %v1541
        %4650 = vmatprep.subr.mxu0 %v1546
        %4651 = vmatpush1.msra.mxu0 %v1545
        %4652 = vmatprep.subr.mxu0 %v1550
        %4653 = vmatpush1.msra.mxu0 %v1549
        %4654 = vmatprep.subr.mxu0 %v1554
        %4655 = vmatpush1.msra.mxu0 %v1553
        %4656 = vmatprep.subr.mxu0 %v1558
        %4657 = vmatpush1.msra.mxu0 %v1557
        %4658 = vmatprep.subr.mxu0 %v1562
        %4659 = vmatpush1.msra.mxu0 %v1561
        %4660 = vmatprep.subr.mxu0 %v1566
        %4661 = vmatpush1.msra.mxu0 %v1565
        %4662 = vmatprep.subr.mxu0 %v1570
        %4663 = vmatpush1.msra.mxu0 %v1569
        %4664 = vmatprep.subr.mxu0 %v1574
        %4665 = vmatpush1.msra.mxu0 %v1573
        %4666 = vmatprep.subr.mxu0 %v1578
        %4667 = vmatpush1.msra.mxu0 %v1577
        %4668 = vmatprep.subr.mxu0 %v1582
        %4669 = vmatpush1.msra.mxu0 %v1581
        %4670 = vmatprep.subr.mxu0 %v1586
        %4671 = vmatpush1.msra.mxu0 %v1585
        %4672 = vmatprep.subr.mxu0 %v1590
        %4673 = vmatpush1.msra.mxu0 %v1589
        %4674 = vmatprep.subr.mxu0 %v1594
        %4675 = vmatpush1.msra.mxu0 %v1593
        %4676 = vmatprep.subr.mxu0 0.0
        %4677 = vmatpush1.msra.mxu0 0.0
        %4678 = vmatprep.subr.mxu0 0.0
        %4679 = vmatpush1.msra.mxu0 0.0
        %4680 = vmatprep.subr.mxu0 0.0
        %4681 = vmatpush1.msra.mxu0 0.0
        %4682 = vmatprep.subr.mxu0 0.0
        %4683 = vmatpush1.msra.mxu0 0.0
        %4684 = vmatprep.subr.mxu0 0.0
        %4685 = vmatpush1.msra.mxu0 0.0
        %4686 = vmatprep.subr.mxu0 0.0
        %4687 = vmatpush1.msra.mxu0 0.0
        %4688 = vmatprep.subr.mxu0 0.0
        %4689 = vmatpush1.msra.mxu0 0.0
        %4690 = vmatprep.subr.mxu0 0.0
        %4691 = vmatpush1.msra.mxu0 0.0
        %4692 = vmatprep.mubr.f32.mxu0 %v1597
        %4693 = vmatmul.mubr.f32.gmra.mrb[0].mxu0 %v365
        %v4694 = vpop.f32.mrb[0].mxu0
        %v4695 = vadd.f32 %v4468, %v4694
        %v4696 = vpop.f32.mrb[0].mxu0
        %v4697 = vadd.f32 %v4470, %v4696
        %4698 = vmatprep.mubr.f32.mxu0 %v1600
        %4699 = vmatmul.mubr.f32.gmra.mrb[0].mxu0 %v379
        %v4700 = vpop.f32.mrb[0].mxu0
        %v4701 = vadd.f32 %v4474, %v4700
        %v4702 = vpop.f32.mrb[0].mxu0
        %v4703 = vadd.f32 %v4476, %v4702
        %4704 = vmatprep.mubr.f32.mxu0 %v1603
        %4705 = vmatmul.mubr.f32.gmra.mrb[0].mxu0 %v393
        %v4706 = vpop.f32.mrb[0].mxu0
        %v4707 = vadd.f32 %v4480, %v4706
        %v4708 = vpop.f32.mrb[0].mxu0
        %v4709 = vadd.f32 %v4482, %v4708
        %4710 = vmatprep.mubr.f32.mxu0 %v1606
        %4711 = vmatmul.mubr.f32.gmra.mrb[0].mxu0 %v407
        %v4712 = vpop.f32.mrb[0].mxu0
        %v4713 = vadd.f32 %v4486, %v4712
        %v4714 = vpop.f32.mrb[0].mxu0
        %v4715 = vadd.f32 %v4488, %v4714
        %4716 = vmatprep.mubr.f32.mxu0 %v1609
        %4717 = vmatmul.mubr.f32.gmra.mrb[0].mxu0 %v421
        %v4718 = vpop.f32.mrb[0].mxu0
        %v4719 = vadd.f32 %v4492, %v4718
        %v4720 = vpop.f32.mrb[0].mxu0
        %v4721 = vadd.f32 %v4494, %v4720
        %4722 = vmatprep.mubr.f32.mxu0 %v1612
        %4723 = vmatmul.mubr.f32.gmra.mrb[0].mxu0 %v435
        %v4724 = vpop.f32.mrb[0].mxu0
        %v4725 = vadd.f32 %v4498, %v4724
        %v4726 = vpop.f32.mrb[0].mxu0
        %v4727 = vadd.f32 %v4500, %v4726
        %4728 = vmatprep.mubr.f32.mxu0 %v1615
        %4729 = vmatmul.mubr.f32.gmra.mrb[0].mxu0 %v449
        %v4730 = vpop.f32.mrb[0].mxu0
        %v4731 = vadd.f32 %v4504, %v4730
        %v4732 = vpop.f32.mrb[0].mxu0
        %v4733 = vadd.f32 %v4506, %v4732
        %4734 = vmatprep.mubr.f32.mxu0 %v1618
        %4735 = vmatmul.mubr.f32.gmra.mrb[0].mxu0 %v463
        %v4736 = vpop.f32.mrb[0].mxu0
        %v4737 = vadd.f32 %v4510, %v4736
        %v4738 = vpop.f32.mrb[0].mxu0
        %v4739 = vadd.f32 %v4512, %v4738
        %4740 = vmatprep.mubr.f32.mxu0 %v1621
        %4741 = vmatmul.mubr.f32.gmra.mrb[0].mxu0 %v477
        %v4742 = vpop.f32.mrb[0].mxu0
        %v4743 = vadd.f32 %v4516, %v4742
        %v4744 = vpop.f32.mrb[0].mxu0
        %v4745 = vadd.f32 %v4518, %v4744
        %4746 = vmatprep.mubr.f32.mxu0 %v1624
        %4747 = vmatmul.mubr.f32.gmra.mrb[0].mxu0 %v491
        %v4748 = vpop.f32.mrb[0].mxu0
        %v4749 = vadd.f32 %v4522, %v4748
        %v4750 = vpop.f32.mrb[0].mxu0
        %v4751 = vadd.f32 %v4524, %v4750
        %4752 = vmatprep.mubr.f32.mxu0 %v1627
        %4753 = vmatmul.mubr.f32.gmra.mrb[0].mxu0 %v505
        %v4754 = vpop.f32.mrb[0].mxu0
        %v4755 = vadd.f32 %v4528, %v4754
        %v4756 = vpop.f32.mrb[0].mxu0
        %v4757 = vadd.f32 %v4530, %v4756
        %4758 = vmatprep.mubr.f32.mxu0 %v1630
        %4759 = vmatmul.mubr.f32.gmra.mrb[0].mxu0 %v519
        %v4760 = vpop.f32.mrb[0].mxu0
        %v4761 = vadd.f32 %v4534, %v4760
        %v4762 = vpop.f32.mrb[0].mxu0
        %v4763 = vadd.f32 %v4536, %v4762
        %4764 = vmatprep.mubr.f32.mxu0 %v1633
        %4765 = vmatmul.mubr.f32.gmra.mrb[0].mxu0 %v533
        %v4766 = vpop.f32.mrb[0].mxu0
        %v4767 = vadd.f32 %v4540, %v4766
        %v4768 = vpop.f32.mrb[0].mxu0
        %v4769 = vadd.f32 %v4542, %v4768
        %4770 = vmatprep.mubr.f32.mxu0 %v1636
        %4771 = vmatmul.mubr.f32.gmra.mrb[0].mxu0 %v547
        %v4772 = vpop.f32.mrb[0].mxu0
        %v4773 = vadd.f32 %v4546, %v4772
        %v4774 = vpop.f32.mrb[0].mxu0
        %v4775 = vadd.f32 %v4548, %v4774
        %4776 = vmatprep.mubr.f32.mxu0 %v1639
        %4777 = vmatmul.mubr.f32.gmra.mrb[0].mxu0 %v561
        %v4778 = vpop.f32.mrb[0].mxu0
        %v4779 = vadd.f32 %v4552, %v4778
        %v4780 = vpop.f32.mrb[0].mxu0
        %v4781 = vadd.f32 %v4554, %v4780
        %4782 = vmatprep.mubr.f32.mxu0 %v1642
        %4783 = vmatmul.mubr.f32.gmra.mrb[0].mxu0 %v575
        %v4784 = vpop.f32.mrb[0].mxu0
        %v4785 = vadd.f32 %v4558, %v4784
        %v4786 = vpop.f32.mrb[0].mxu0
        %v4787 = vadd.f32 %v4560, %v4786
        %4788 = vmatprep.mubr.f32.mxu0 %v1645
        %4789 = vmatmul.mubr.f32.gmra.mrb[0].mxu0 %v589
        %v4790 = vpop.f32.mrb[0].mxu0
        %v4791 = vadd.f32 %v4564, %v4790
        %v4792 = vpop.f32.mrb[0].mxu0
        %v4793 = vadd.f32 %v4566, %v4792
        %4794 = vmatprep.mubr.f32.mxu0 %v1648
        %4795 = vmatmul.mubr.f32.gmra.mrb[0].mxu0 %v603
        %v4796 = vpop.f32.mrb[0].mxu0
        %v4797 = vadd.f32 %v4570, %v4796
        %v4798 = vpop.f32.mrb[0].mxu0
        %v4799 = vadd.f32 %v4572, %v4798
        %4800 = vmatprep.mubr.f32.mxu0 %v1651
        %4801 = vmatmul.mubr.f32.gmra.mrb[0].mxu0 %v617
        %v4802 = vpop.f32.mrb[0].mxu0
        %v4803 = vadd.f32 %v4576, %v4802
        %v4804 = vpop.f32.mrb[0].mxu0
        %v4805 = vadd.f32 %v4578, %v4804
        %4806 = vmatprep.mubr.f32.mxu0 %v1654
        %4807 = vmatmul.mubr.f32.gmra.mrb[0].mxu0 %v631
        %v4808 = vpop.f32.mrb[0].mxu0
        %v4809 = vadd.f32 %v4582, %v4808
        %v4810 = vpop.f32.mrb[0].mxu0
        %v4811 = vadd.f32 %v4584, %v4810
        %4812 = vmatprep.mubr.f32.mxu0 %v1657
        %4813 = vmatmul.mubr.f32.gmra.mrb[0].mxu0 %v645
        %v4814 = vpop.f32.mrb[0].mxu0
        %v4815 = vadd.f32 %v4588, %v4814
        %v4816 = vpop.f32.mrb[0].mxu0
        %v4817 = vadd.f32 %v4590, %v4816
        %4818 = vmatprep.mubr.f32.mxu0 %v1660
        %4819 = vmatmul.mubr.f32.gmra.mrb[0].mxu0 %v659
        %v4820 = vpop.f32.mrb[0].mxu0
        %v4821 = vadd.f32 %v4594, %v4820
        %v4822 = vpop.f32.mrb[0].mxu0
        %v4823 = vadd.f32 %v4596, %v4822
        %4824 = vmatprep.mubr.f32.mxu0 %v1663
        %4825 = vmatmul.mubr.f32.gmra.mrb[0].mxu0 %v673
        %v4826 = vpop.f32.mrb[0].mxu0
        %v4827 = vadd.f32 %v4600, %v4826
        %v4828 = vpop.f32.mrb[0].mxu0
        %v4829 = vadd.f32 %v4602, %v4828
        %4830 = vmatprep.mubr.f32.mxu0 %v1666
        %4831 = vmatmul.mubr.f32.gmra.mrb[0].mxu0 %v687
        %v4832 = vpop.f32.mrb[0].mxu0
        %v4833 = vadd.f32 %v4606, %v4832
        %v4834 = vpop.f32.mrb[0].mxu0
        %v4835 = vadd.f32 %v4608, %v4834
        %4836 = vmatprep.mubr.f32.mxu0 %v1669
        %4837 = vmatmul.mubr.f32.gmra.mrb[0].mxu0 %v701
        %v4838 = vpop.f32.mrb[0].mxu0
        %v4839 = vadd.f32 %v4612, %v4838
        %v4840 = vpop.f32.mrb[0].mxu0
        %v4841 = vadd.f32 %v4614, %v4840
        %4842 = vmatprep.mubr.f32.mxu0 %v1672
        %4843 = vmatmul.mubr.f32.gmra.mrb[0].mxu0 %v715
        %v4844 = vpop.f32.mrb[0].mxu0
        %v4845 = vadd.f32 %v4618, %v4844
        %v4846 = vpop.f32.mrb[0].mxu0
        %v4847 = vadd.f32 %v4620, %v4846
        %4848 = vmatprep.mubr.f32.mxu0 %v1675
        %4849 = vmatmul.mubr.f32.gmra.mrb[0].mxu0 %v729
        %v4850 = vpop.f32.mrb[0].mxu0
        %v4851 = vadd.f32 %v4624, %v4850
        %v4852 = vpop.f32.mrb[0].mxu0
        %v4853 = vadd.f32 %v4626, %v4852
        %4854 = vdwg.mxu0
        %v4855 = vadd.f32 %v245, %v3106
        %v4856 = vadd.f32 %v246, %v3108
        %v4857 = vadd.f32 %v247, %v4695
        %v4858 = vadd.f32 %v248, %v4697
        %v4859 = vadd.f32 %v249, %v3112
        %v4860 = vadd.f32 %v250, %v3114
        %v4861 = vadd.f32 %v251, %v4701
        %v4862 = vadd.f32 %v252, %v4703
        %v4863 = vadd.f32 %v253, %v3118
        %v4864 = vadd.f32 %v254, %v3120
        %v4865 = vadd.f32 %v255, %v4707
        %v4866 = vadd.f32 %v256, %v4709
        %v4867 = vadd.f32 %v257, %v3124
        %v4868 = vadd.f32 %v258, %v3126
        %v4869 = vadd.f32 %v259, %v4713
        %v4870 = vadd.f32 %v260, %v4715
        %v4871 = vadd.f32 %v261, %v3130
        %v4872 = vadd.f32 %v262, %v3132
        %v4873 = vadd.f32 %v263, %v4719
        %v4874 = vadd.f32 %v264, %v4721
        %v4875 = vadd.f32 %v265, %v3136
        %v4876 = vadd.f32 %v266, %v3138
        %v4877 = vadd.f32 %v267, %v4725
        %v4878 = vadd.f32 %v268, %v4727
        %v4879 = vadd.f32 %v269, %v3142
        %v4880 = vadd.f32 %v270, %v3144
        %v4881 = vadd.f32 %v271, %v4731
        %v4882 = vadd.f32 %v272, %v4733
        %v4883 = vadd.f32 %v273, %v3148
        %v4884 = vadd.f32 %v274, %v3150
        %v4885 = vadd.f32 %v275, %v4737
        %v4886 = vadd.f32 %v276, %v4739
        %v4887 = vadd.f32 %v277, %v3154
        %v4888 = vadd.f32 %v278, %v3156
        %v4889 = vadd.f32 %v279, %v4743
        %v4890 = vadd.f32 %v280, %v4745
        %v4891 = vadd.f32 %v281, %v3160
        %v4892 = vadd.f32 %v282, %v3162
        %v4893 = vadd.f32 %v283, %v4749
        %v4894 = vadd.f32 %v284, %v4751
        %v4895 = vadd.f32 %v285, %v3166
        %v4896 = vadd.f32 %v286, %v3168
        %v4897 = vadd.f32 %v287, %v4755
        %v4898 = vadd.f32 %v288, %v4757
        %v4899 = vadd.f32 %v289, %v3172
        %v4900 = vadd.f32 %v290, %v3174
        %v4901 = vadd.f32 %v291, %v4761
        %v4902 = vadd.f32 %v292, %v4763
        %v4903 = vadd.f32 %v293, %v3178
        %v4904 = vadd.f32 %v294, %v3180
        %v4905 = vadd.f32 %v295, %v4767
        %v4906 = vadd.f32 %v296, %v4769
        %v4907 = vadd.f32 %v297, %v3184
        %v4908 = vadd.f32 %v298, %v3186
        %v4909 = vadd.f32 %v299, %v4773
        %v4910 = vadd.f32 %v300, %v4775
        %v4911 = vadd.f32 %v301, %v3190
        %v4912 = vadd.f32 %v302, %v3192
        %v4913 = vadd.f32 %v303, %v4779
        %v4914 = vadd.f32 %v304, %v4781
        %v4915 = vadd.f32 %v305, %v3196
        %v4916 = vadd.f32 %v306, %v3198
        %v4917 = vadd.f32 %v307, %v4785
        %v4918 = vadd.f32 %v308, %v4787
        %v4919 = vadd.f32 %v309, %v3202
        %v4920 = vadd.f32 %v310, %v3204
        %v4921 = vadd.f32 %v311, %v4791
        %v4922 = vadd.f32 %v312, %v4793
        %v4923 = vadd.f32 %v313, %v3208
        %v4924 = vadd.f32 %v314, %v3210
        %v4925 = vadd.f32 %v315, %v4797
        %v4926 = vadd.f32 %v316, %v4799
        %v4927 = vadd.f32 %v317, %v3214
        %v4928 = vadd.f32 %v318, %v3216
        %v4929 = vadd.f32 %v319, %v4803
        %v4930 = vadd.f32 %v320, %v4805
        %v4931 = vadd.f32 %v321, %v3220
        %v4932 = vadd.f32 %v322, %v3222
        %v4933 = vadd.f32 %v323, %v4809
        %v4934 = vadd.f32 %v324, %v4811
        %v4935 = vadd.f32 %v325, %v3226
        %v4936 = vadd.f32 %v326, %v3228
        %v4937 = vadd.f32 %v327, %v4815
        %v4938 = vadd.f32 %v328, %v4817
        %v4939 = vadd.f32 %v329, %v3232
        %v4940 = vadd.f32 %v330, %v3234
        %v4941 = vadd.f32 %v331, %v4821
        %v4942 = vadd.f32 %v332, %v4823
        %v4943 = vadd.f32 %v333, %v3238
        %v4944 = vadd.f32 %v334, %v3240
        %v4945 = vadd.f32 %v335, %v4827
        %v4946 = vadd.f32 %v336, %v4829
        %v4947 = vadd.f32 %v337, %v3244
        %v4948 = vadd.f32 %v338, %v3246
        %v4949 = vadd.f32 %v339, %v4833
        %v4950 = vadd.f32 %v340, %v4835
        %v4951 = vadd.f32 %v341, %v3250
        %v4952 = vadd.f32 %v342, %v3252
        %v4953 = vadd.f32 %v343, %v4839
        %v4954 = vadd.f32 %v344, %v4841
        %v4955 = vadd.f32 %v345, %v3256
        %v4956 = vadd.f32 %v346, %v3258
        %v4957 = vadd.f32 %v347, %v4845
        %v4958 = vadd.f32 %v348, %v4847
        %v4959 = vadd.f32 %v349, %v3262
        %v4960 = vadd.f32 %v350, %v3264
        %v4961 = vadd.f32 %v351, %v4851
        %v4962 = vadd.f32 %v352, %v4853
        %4963 = vst [vmem:[%s231] sm:$0xff] %v4855
        %4964 = vst [vmem:[%s231 + $0x8] sm:$0xff] %v4856
        %4965 = vst [vmem:[%s231 + $0x10] sm:$0xff] %v4857
        %vm4966 = vcmask 392192
        %4967 = vst.msk [vmem:[%s231 + $0x18] sm:$0xff] %vm4966, %v4858
        %4968 = vst [vmem:[%s231 + $0x20] sm:$0xff] %v4859
        %4969 = vst [vmem:[%s231 + $0x28] sm:$0xff] %v4860
        %4970 = vst [vmem:[%s231 + $0x30] sm:$0xff] %v4861
        %4971 = vst.msk [vmem:[%s231 + $0x38] sm:$0xff] %vm4966, %v4862
        %4972 = vst [vmem:[%s231 + $0x40] sm:$0xff] %v4863
        %4973 = vst [vmem:[%s231 + $0x48] sm:$0xff] %v4864
        %4974 = vst [vmem:[%s231 + $0x50] sm:$0xff] %v4865
        %4975 = vst.msk [vmem:[%s231 + $0x58] sm:$0xff] %vm4966, %v4866
        %4976 = vst [vmem:[%s231 + $0x60] sm:$0xff] %v4867
        %4977 = vst [vmem:[%s231 + $0x68] sm:$0xff] %v4868
        %4978 = vst [vmem:[%s231 + $0x70] sm:$0xff] %v4869
        %4979 = vst.msk [vmem:[%s231 + $0x78] sm:$0xff] %vm4966, %v4870
        %4980 = vst [vmem:[%s231 + $0x80] sm:$0xff] %v4871
        %4981 = vst [vmem:[%s231 + $0x88] sm:$0xff] %v4872
        %4982 = vst [vmem:[%s231 + $0x90] sm:$0xff] %v4873
        %4983 = vst.msk [vmem:[%s231 + $0x98] sm:$0xff] %vm4966, %v4874
        %4984 = vst [vmem:[%s231 + $0xa0] sm:$0xff] %v4875
        %4985 = vst [vmem:[%s231 + $0xa8] sm:$0xff] %v4876
        %4986 = vst [vmem:[%s231 + $0xb0] sm:$0xff] %v4877
        %4987 = vst.msk [vmem:[%s231 + $0xb8] sm:$0xff] %vm4966, %v4878
        %4988 = vst [vmem:[%s231 + $0xc0] sm:$0xff] %v4879
        %4989 = vst [vmem:[%s231 + $0xc8] sm:$0xff] %v4880
        %4990 = vst [vmem:[%s231 + $0xd0] sm:$0xff] %v4881
        %4991 = vst.msk [vmem:[%s231 + $0xd8] sm:$0xff] %vm4966, %v4882
        %4992 = vst [vmem:[%s231 + $0xe0] sm:$0xff] %v4883
        %4993 = vst [vmem:[%s231 + $0xe8] sm:$0xff] %v4884
        %4994 = vst [vmem:[%s231 + $0xf0] sm:$0xff] %v4885
        %4995 = vst.msk [vmem:[%s231 + $0xf8] sm:$0xff] %vm4966, %v4886
        %4996 = vst [vmem:[%s231 + $0x100] sm:$0xff] %v4887
        %4997 = vst [vmem:[%s231 + $0x108] sm:$0xff] %v4888
        %4998 = vst [vmem:[%s231 + $0x110] sm:$0xff] %v4889
        %4999 = vst.msk [vmem:[%s231 + $0x118] sm:$0xff] %vm4966, %v4890
        %5000 = vst [vmem:[%s231 + $0x120] sm:$0xff] %v4891
        %5001 = vst [vmem:[%s231 + $0x128] sm:$0xff] %v4892
        %5002 = vst [vmem:[%s231 + $0x130] sm:$0xff] %v4893
        %5003 = vst.msk [vmem:[%s231 + $0x138] sm:$0xff] %vm4966, %v4894
        %5004 = vst [vmem:[%s231 + $0x140] sm:$0xff] %v4895
        %5005 = vst [vmem:[%s231 + $0x148] sm:$0xff] %v4896
        %5006 = vst [vmem:[%s231 + $0x150] sm:$0xff] %v4897
        %5007 = vst.msk [vmem:[%s231 + $0x158] sm:$0xff] %vm4966, %v4898
        %5008 = vst [vmem:[%s231 + $0x160] sm:$0xff] %v4899
        %5009 = vst [vmem:[%s231 + $0x168] sm:$0xff] %v4900
        %5010 = vst [vmem:[%s231 + $0x170] sm:$0xff] %v4901
        %5011 = vst.msk [vmem:[%s231 + $0x178] sm:$0xff] %vm4966, %v4902
        %5012 = vst [vmem:[%s231 + $0x180] sm:$0xff] %v4903
        %5013 = vst [vmem:[%s231 + $0x188] sm:$0xff] %v4904
        %5014 = vst [vmem:[%s231 + $0x190] sm:$0xff] %v4905
        %5015 = vst.msk [vmem:[%s231 + $0x198] sm:$0xff] %vm4966, %v4906
        %5016 = vst [vmem:[%s231 + $0x1a0] sm:$0xff] %v4907
        %5017 = vst [vmem:[%s231 + $0x1a8] sm:$0xff] %v4908
        %5018 = vst [vmem:[%s231 + $0x1b0] sm:$0xff] %v4909
        %5019 = vst.msk [vmem:[%s231 + $0x1b8] sm:$0xff] %vm4966, %v4910
        %5020 = vst [vmem:[%s231 + $0x1c0] sm:$0xff] %v4911
        %5021 = vst [vmem:[%s231 + $0x1c8] sm:$0xff] %v4912
        %5022 = vst [vmem:[%s231 + $0x1d0] sm:$0xff] %v4913
        %5023 = vst.msk [vmem:[%s231 + $0x1d8] sm:$0xff] %vm4966, %v4914
        %5024 = vst [vmem:[%s231 + $0x1e0] sm:$0xff] %v4915
        %5025 = vst [vmem:[%s231 + $0x1e8] sm:$0xff] %v4916
        %5026 = vst [vmem:[%s231 + $0x1f0] sm:$0xff] %v4917
        %5027 = vst.msk [vmem:[%s231 + $0x1f8] sm:$0xff] %vm4966, %v4918
        %5028 = vst [vmem:[%s231 + $0x200] sm:$0xff] %v4919
        %5029 = vst [vmem:[%s231 + $0x208] sm:$0xff] %v4920
        %5030 = vst [vmem:[%s231 + $0x210] sm:$0xff] %v4921
        %5031 = vst.msk [vmem:[%s231 + $0x218] sm:$0xff] %vm4966, %v4922
        %5032 = vst [vmem:[%s231 + $0x220] sm:$0xff] %v4923
        %5033 = vst [vmem:[%s231 + $0x228] sm:$0xff] %v4924
        %5034 = vst [vmem:[%s231 + $0x230] sm:$0xff] %v4925
        %5035 = vst.msk [vmem:[%s231 + $0x238] sm:$0xff] %vm4966, %v4926
        %5036 = vst [vmem:[%s231 + $0x240] sm:$0xff] %v4927
        %5037 = vst [vmem:[%s231 + $0x248] sm:$0xff] %v4928
        %5038 = vst [vmem:[%s231 + $0x250] sm:$0xff] %v4929
        %5039 = vst.msk [vmem:[%s231 + $0x258] sm:$0xff] %vm4966, %v4930
        %5040 = vst [vmem:[%s231 + $0x260] sm:$0xff] %v4931
        %5041 = vst [vmem:[%s231 + $0x268] sm:$0xff] %v4932
        %5042 = vst [vmem:[%s231 + $0x270] sm:$0xff] %v4933
        %5043 = vst.msk [vmem:[%s231 + $0x278] sm:$0xff] %vm4966, %v4934
        %5044 = vst [vmem:[%s231 + $0x280] sm:$0xff] %v4935
        %5045 = vst [vmem:[%s231 + $0x288] sm:$0xff] %v4936
        %5046 = vst [vmem:[%s231 + $0x290] sm:$0xff] %v4937
        %5047 = vst.msk [vmem:[%s231 + $0x298] sm:$0xff] %vm4966, %v4938
        %5048 = vst [vmem:[%s231 + $0x2a0] sm:$0xff] %v4939
        %5049 = vst [vmem:[%s231 + $0x2a8] sm:$0xff] %v4940
        %5050 = vst [vmem:[%s231 + $0x2b0] sm:$0xff] %v4941
        %5051 = vst.msk [vmem:[%s231 + $0x2b8] sm:$0xff] %vm4966, %v4942
        %5052 = vst [vmem:[%s231 + $0x2c0] sm:$0xff] %v4943
        %5053 = vst [vmem:[%s231 + $0x2c8] sm:$0xff] %v4944
        %5054 = vst [vmem:[%s231 + $0x2d0] sm:$0xff] %v4945
        %5055 = vst.msk [vmem:[%s231 + $0x2d8] sm:$0xff] %vm4966, %v4946
        %5056 = vst [vmem:[%s231 + $0x2e0] sm:$0xff] %v4947
        %5057 = vst [vmem:[%s231 + $0x2e8] sm:$0xff] %v4948
        %5058 = vst [vmem:[%s231 + $0x2f0] sm:$0xff] %v4949
        %5059 = vst.msk [vmem:[%s231 + $0x2f8] sm:$0xff] %vm4966, %v4950
        %5060 = vst [vmem:[%s231 + $0x300] sm:$0xff] %v4951
        %5061 = vst [vmem:[%s231 + $0x308] sm:$0xff] %v4952
        %5062 = vst [vmem:[%s231 + $0x310] sm:$0xff] %v4953
        %5063 = vst.msk [vmem:[%s231 + $0x318] sm:$0xff] %vm4966, %v4954
        %5064 = vst [vmem:[%s231 + $0x320] sm:$0xff] %v4955
        %5065 = vst [vmem:[%s231 + $0x328] sm:$0xff] %v4956
        %5066 = vst [vmem:[%s231 + $0x330] sm:$0xff] %v4957
        %5067 = vst.msk [vmem:[%s231 + $0x338] sm:$0xff] %vm4966, %v4958
        %5068 = vst [vmem:[%s231 + $0x340] sm:$0xff] %v4959
        %5069 = vst [vmem:[%s231 + $0x348] sm:$0xff] %v4960
        %5070 = vst [vmem:[%s231 + $0x350] sm:$0xff] %v4961
        %5071 = vst.msk [vmem:[%s231 + $0x358] sm:$0xff] %vm4966, %v4962
        %s5072 = sand.u32 %s117, 1
        %s5073 = scalar_lea.sflag [#allocation4], %s5072
        %s5074 = sand.u32 %s117, 1
        %s5075 = smul.addr %s5074, 864
        %s5076 = scalar_lea.vmem [#allocation5], %s5075
        // Predicated region
        $region37: #{tpu_custom_call.1} parent=31 // pred_check
          %p5077 = pneg %p127
        $region38: #{tpu_custom_call.1} parent=31 // pred_check_branch
          %5079 = sbr.rel (%p5077) target = $region40
        $region39: #{tpu_custom_call.1} parent=31 // pred_region
          %s5080 = smul.u32 27, %s25
          %s5082 = ssub.s32 13824, 13824
          %5083 = vsyncadd %s5073, %s5082
          %s5084 = smul.addr %s5080, 4
          %s5085 = smul.addr %s24, 216
          %s5086 = sadd.s32 %s5084, %s5085
          %s5087 = smul.addr %s5086, 128
          %s5088 = scalar_lea.hbm %s3, %s5087
          %s5089 = sshll.u32 %s5076, 4
          %s5090 = int_to_ptr.vmem [resolvable:$true] %s5089
          %5095 = dma.vmem_to_hbm [thread:$0]  %s5090, 13824, %s5088, %s5073, 512, 512, 32
        $region40: #{tpu_custom_call.1} parent=31 // pred_fallthru
          _
      $region32: #{tpu_custom_call.1} parent=5 // pred_fallthru
        _
      %p5096 = scmp.le.s32.totalorder 2, %s15
      // Predicated region
      $region41: #{tpu_custom_call.1} parent=5 // pred_check
        %p5097 = pneg %p5096
      $region42: #{tpu_custom_call.1} parent=5 // pred_check_branch
        %5099 = sbr.rel (%p5097) target = $region44
      $region43: #{tpu_custom_call.1} parent=5 // pred_region
        %s5100 = ssub.s32 %s15, 2
        // Predicated region
        $region45: #{tpu_custom_call.1} parent=43 // pred_check
          %p5101 = pneg %p133
        $region46: #{tpu_custom_call.1} parent=43 // pred_check_branch
          %5103 = sbr.rel (%p5101) target = $region48
        $region47: #{tpu_custom_call.1} parent=43 // pred_region
          %s5104 = sand.u32 %s118, 1
          %s5105 = scalar_lea.sflag [#allocation4], %s5104
          %s5106 = sand.u32 %s118, 1
          %s5107 = smul.addr %s5106, 864
          %s5108 = scalar_lea.vmem [#allocation5], %s5107
          %5109 = dma.done %s5105, 13824
        $region48: #{tpu_custom_call.1} parent=43 // pred_fallthru
          _
      $region44: #{tpu_custom_call.1} parent=5 // pred_fallthru
        _
    $region6: #{tpu_custom_call.1} parent=1 // loop_footer
      %s19 = sadd.s32 1, %s15
    $region7: #{tpu_custom_call.1} parent=1 // loop_footer_branch
      %14 = sbr.rel target = $region3
    $region8: #{tpu_custom_call.1} parent=1 // loop_exit
      _
    %5110 = vsyncpa [#allocation3], 1
    %s5111 = scalar_lea.sflag [#allocation3], 1
    %5112 = vsyncpa %s5111, 1
    %5113 = vsyncpa [#allocation4], 1
    %s5114 = scalar_lea.sflag [#allocation4], 1
    %5115 = vsyncpa %s5114, 1

</llo_original>
